<compile_context>
chip_gen: v6e
topology: v6e:2x2x1
jax: 0.10.0
libtpu: 0.0.40
codegen_flags: <defaults>
</compile_context>

<pallas_src>
import math

import jax
import jax.numpy as jnp
from jax.experimental import pallas as pl
from jax.experimental.pallas import tpu as pltpu

VMEM_SPEC = pl.BlockSpec(memory_space=pltpu.MemorySpace.VMEM)
BN_EPS = 1e-5


# ---------------------------------------------------------------------------
# Kernels
# ---------------------------------------------------------------------------
def conv_bn_relu_pool_kernel(taps_ref, w_ref, gamma_ref, beta_ref, out_ref, acc_ref):
    """Fused 3x3 conv (one K=9*Cin matmul per quadrant) + train-mode BN + ReLU
    + (optional) 2x2 max-pool.

    taps_ref  : (Q, Mo, 9*Cin) bf16   Q=4 -> pooled block (quadrants of the 2x2
                                      window), Q=1 -> no pooling (last block).
                Row order within a quadrant is (n, ho, wo).
    w_ref     : (9*Cin, Cout)  bf16   rows ordered (kh, kw, cin)
    gamma_ref : (1, Cout) f32
    beta_ref  : (1, Cout) f32
    out_ref   : (Mo, Cout) f32        pooled (or plain, Q=1) output
    acc_ref   : (Q, Mo, Cout) f32     VMEM scratch holding pre-activations
    """
    Q = taps_ref.shape[0]
    Mo = taps_ref.shape[1]
    Cout = out_ref.shape[-1]

    # Pass 1: one MXU matmul per quadrant, accumulate BN sum / sum-of-squares.
    s = jnp.zeros((1, Cout), jnp.float32)
    ss = jnp.zeros((1, Cout), jnp.float32)
    for q in range(Q):  # static unroll (Q in {1, 4})
        acc = jnp.dot(taps_ref[q], w_ref[...], preferred_element_type=jnp.float32)
        acc_ref[q] = acc
        s = s + jnp.sum(acc, axis=0, keepdims=True)
        ss = ss + jnp.sum(acc * acc, axis=0, keepdims=True)

    # Training-mode BatchNorm statistics over all Q*Mo rows (== N*H*W pixels),
    # biased variance, f32 accumulation.  Conv bias omitted (cancels in BN).
    inv_n = 1.0 / float(Q * Mo)
    mean = s * inv_n
    var = ss * inv_n - mean * mean
    scale = gamma_ref[...] * jax.lax.rsqrt(var + BN_EPS)
    shift = beta_ref[...] - mean * scale

    # Pass 2: fused BN-affine + ReLU + max over the 2x2 window quadrants.
    pooled = jnp.maximum(acc_ref[0] * scale + shift, 0.0)
    for q in range(1, Q):
        pooled = jnp.maximum(pooled, jnp.maximum(acc_ref[q] * scale + shift, 0.0))
    out_ref[...] = pooled


def linear_ce_kernel(x_ref, wt_ref, b_ref, lbl_ref, logits_ref, loss_ref):
    """Classifier head: logits = x @ W^T + b, plus mean cross-entropy loss.

    x_ref      : (N, F)  bf16   NHWC-flattened features (NCHW order folded into wt)
    wt_ref     : (F, classes) bf16
    b_ref      : (1, classes) f32
    lbl_ref    : (N, 1) int32   integer class labels
    logits_ref : (N, classes) f32
    loss_ref   : (1, 1) f32
    """
    logits = jnp.dot(x_ref[...], wt_ref[...],
                     preferred_element_type=jnp.float32) + b_ref[...]
    logits_ref[...] = logits

    n, classes = logits.shape
    m = jnp.max(logits, axis=-1, keepdims=True)
    lse = m + jnp.log(jnp.sum(jnp.exp(logits - m), axis=-1, keepdims=True))

    cls_iota = jax.lax.broadcasted_iota(jnp.int32, (n, classes), 1)
    onehot = (cls_iota == lbl_ref[...]).astype(jnp.float32)   # in-kernel one-hot
    picked = jnp.sum(logits * onehot, axis=-1, keepdims=True)

    loss_ref[...] = jnp.sum(lse - picked, axis=0, keepdims=True) * (1.0 / float(n))


# ---------------------------------------------------------------------------
# Wrappers (plain-JAX layout plumbing: pad, im2col taps, reshapes)
# ---------------------------------------------------------------------------
def conv_block(x_nhwc, w_k, gamma, beta, pool):
    """One Conv3x3+BN+ReLU block, with the following 2x2 MaxPool fused if pool."""
    N, H, W, Cin = x_nhwc.shape
    Cout = w_k.shape[-1]
    xp = jnp.pad(x_nhwc, ((0, 0), (1, 1), (1, 1), (0, 0))).astype(jnp.bfloat16)

    if pool:
        Ho, Wo = H // 2, W // 2
        Mo = N * Ho * Wo
        quads = []
        for dh in range(2):
            for dw in range(2):
                taps = [
                    xp[:, dh + kh: dh + kh + H: 2,
                          dw + kw: dw + kw + W: 2, :].reshape(Mo, Cin)
                    for kh in range(3) for kw in range(3)
                ]
                quads.append(jnp.concatenate(taps, axis=-1))   # (Mo, 9*Cin)
        taps = jnp.stack(quads, axis=0)                        # (4, Mo, 9*Cin)
        out_h, out_w = Ho, Wo
    else:
        Mo = N * H * W
        taps = jnp.concatenate(
            [xp[:, kh:kh + H, kw:kw + W, :].reshape(Mo, Cin)
             for kh in range(3) for kw in range(3)],
            axis=-1,
        )[None]                                                # (1, Mo, 9*Cin)
        out_h, out_w = H, W

    Q = taps.shape[0]
    out = pl.pallas_call(
        conv_bn_relu_pool_kernel,
        out_shape=jax.ShapeDtypeStruct((Mo, Cout), jnp.float32),
        in_specs=[VMEM_SPEC] * 4,
        out_specs=VMEM_SPEC,
        scratch_shapes=[pltpu.VMEM((Q, Mo, Cout), jnp.float32)],
    )(taps, w_k, gamma, beta)
    return out.reshape(N, out_h, out_w, Cout)


def classifier_forward(params, img_nchw, label):
    """Equivalent of Classifier.forward({'img': img, 'label': label}) in train mode."""
    x = jnp.transpose(img_nchw, (0, 2, 3, 1))                  # NCHW -> NHWC

    for i, (w_k, gamma, beta) in enumerate(params["blocks"]):
        x = conv_block(x, w_k, gamma, beta, pool=(i < 3))      # pool after blocks 0..2

    N = x.shape[0]
    # NHWC flatten; the PyTorch NCHW view(N,-1) order is folded into params["wt"].
    feat = x.reshape(N, -1).astype(jnp.bfloat16)

    classes = params["wt"].shape[1]
    lbl = label.reshape(N, 1).astype(jnp.int32)

    logits, loss = pl.pallas_call(
        linear_ce_kernel,
        out_shape=(
            jax.ShapeDtypeStruct((N, classes), jnp.float32),
            jax.ShapeDtypeStruct((1, 1), jnp.float32),
        ),
        in_specs=[VMEM_SPEC] * 4,
        out_specs=(VMEM_SPEC, VMEM_SPEC),
    )(feat, params["wt"], params["b"], lbl)

    return {"label": logits, "loss": loss[0, 0]}


# ---------------------------------------------------------------------------
# Deterministic parameter init (shapes follow the PyTorch module __init__)
# ---------------------------------------------------------------------------
def init_params(key, data_shape, hidden_size, classes_size):
    chans = [data_shape[0]] + list(hidden_size)
    blocks = []
    for i in range(len(hidden_size)):
        key, k1, k2, k3 = jax.random.split(key, 4)
        cin, cout = chans[i], chans[i + 1]
        # PyTorch conv weight layout (Cout, Cin, kh, kw) -> (kh, kw, Cin) x Cout tap layout.
        w = jax.random.normal(k1, (cout, cin, 3, 3), jnp.float32) / math.sqrt(cin * 9)
        w_k = jnp.transpose(w, (2, 3, 1, 0)).reshape(9 * cin, cout).astype(jnp.bfloat16)
        # Conv bias omitted on purpose: it cancels exactly under training-mode BN.
        gamma = 1.0 + 0.1 * jax.random.normal(k2, (1, cout), jnp.float32)
        beta = 0.1 * jax.random.normal(k3, (1, cout), jnp.float32)
        blocks.append((w_k, gamma, beta))

    down = 2 ** (len(hidden_size) - 1)
    hf, wf = data_shape[1] // down, data_shape[2] // down
    cf = hidden_size[-1]
    feat_dim = cf * hf * wf
    key, k1, k2 = jax.random.split(key, 3)
    # Generate in PyTorch (classes, C*H*W) layout, then fold the NCHW->NHWC flatten
    # permutation into the weight so the forward pass needs no activation transpose.
    w_lin = jax.random.normal(k1, (classes_size, feat_dim), jnp.float32) / math.sqrt(feat_dim)
    w_lin_nhwc = jnp.transpose(w_lin.reshape(classes_size, cf, hf, wf),
                               (0, 2, 3, 1)).reshape(classes_size, feat_dim)
    b_lin = 0.01 * jax.random.normal(k2, (1, classes_size), jnp.float32)
    return {"blocks": blocks,
            "wt": w_lin_nhwc.T.astype(jnp.bfloat16),
            "b": b_lin}


# ---------------------------------------------------------------------------
if __name__ == "__main__":
    data_shape = (4, 16, 16)          # (C, H, W)
    hidden_size = [8, 16, 16, 32]
    classes_size = 10
    batch = 2

    key = jax.random.PRNGKey(0)
    k_params, k_img, k_lbl = jax.random.split(key, 3)

    params = init_params(k_params, data_shape, hidden_size, classes_size)
    img = jax.random.normal(k_img, (batch,) + data_shape, jnp.float32)   # NCHW
    label = jax.random.randint(k_lbl, (batch,), 0, classes_size, jnp.int32)

    fwd = jax.jit(classifier_forward)
    out = fwd(params, img, label)
    out = jax.block_until_ready(out)

    assert out["label"].shape == (batch, classes_size)
    assert out["loss"].shape == ()
    assert bool(jnp.isfinite(out["loss"])) and bool(jnp.all(jnp.isfinite(out["label"])))
    print("KERNEL_OK")
</pallas_src>

<mosaic_0001>
module attributes {stable_mosaic.version = 11 : i64} {
  func.func @conv_bn_relu_pool_kernel(%arg0: memref<4x128x36xbf16, #tpu.memory_space<vmem>>, %arg1: memref<36x8xbf16, #tpu.memory_space<vmem>>, %arg2: memref<1x8xf32, #tpu.memory_space<vmem>>, %arg3: memref<1x8xf32, #tpu.memory_space<vmem>>, %arg4: memref<128x8xf32, #tpu.memory_space<vmem>>, %arg5: memref<4x128x8xf32, #tpu.memory_space<vmem>>) attributes {dimension_semantics = [], scalar_prefetch = 0 : i64, scratch_operands = 1 : i64, tpu.core_type = #tpu.core_type<tc>} {
    %cst = arith.constant 0.000000e+00 : f32
    %0 = vector.broadcast %cst : f32 to vector<1x8xf32>
    %cst_0 = arith.constant 0.000000e+00 : f32
    %1 = vector.broadcast %cst_0 : f32 to vector<1x8xf32>
    %c0 = arith.constant 0 : index
    %c0_1 = arith.constant 0 : index
    %c0_2 = arith.constant 0 : index
    %2 = vector.load %arg0[%c0, %c0_1, %c0_2] : memref<4x128x36xbf16, #tpu.memory_space<vmem>>, vector<1x128x36xbf16>
    %3 = vector.shape_cast %2 : vector<1x128x36xbf16> to vector<128x36xbf16>
    %c0_3 = arith.constant 0 : index
    %c0_4 = arith.constant 0 : index
    %4 = vector.load %arg1[%c0_3, %c0_4] : memref<36x8xbf16, #tpu.memory_space<vmem>>, vector<36x8xbf16>
    %cst_5 = arith.constant dense<0.000000e+00> : vector<128x8xf32>
    %5 = tpu.matmul %3, %4, %cst_5 {dimension_numbers = #tpu.dot_dimension_numbers<[1], [0], [0], [1], [0, 0, 1, 1], [], []>} : vector<128x36xbf16>, vector<36x8xbf16>, vector<128x8xf32> -> vector<128x8xf32>
    %c0_6 = arith.constant 0 : index
    %c0_7 = arith.constant 0 : index
    %c0_8 = arith.constant 0 : index
    %6 = vector.load %arg5[%c0_6, %c0_7, %c0_8] : memref<4x128x8xf32, #tpu.memory_space<vmem>>, vector<1x128x8xf32>
    %7 = vector.shape_cast %6 : vector<1x128x8xf32> to vector<128x8xf32>
    %8 = vector.shape_cast %5 : vector<128x8xf32> to vector<1x128x8xf32>
    tpu.vector_store %arg5[%c0_6, %c0_7, %c0_8], %8 {strides = array<i32>} : memref<4x128x8xf32, #tpu.memory_space<vmem>>, vector<1x128x8xf32>,
    %cst_9 = arith.constant dense<0.000000e+00> : vector<8xf32>
    %9 = vector.multi_reduction <add>, %5, %cst_9 [0] : vector<128x8xf32> to vector<8xf32>
    %10 = vector.shape_cast %9 : vector<8xf32> to vector<1x8xf32>
    %11 = arith.addf %0, %10 : vector<1x8xf32>
    %12 = arith.mulf %5, %5 : vector<128x8xf32>
    %cst_10 = arith.constant dense<0.000000e+00> : vector<8xf32>
    %13 = vector.multi_reduction <add>, %12, %cst_10 [0] : vector<128x8xf32> to vector<8xf32>
    %14 = vector.shape_cast %13 : vector<8xf32> to vector<1x8xf32>
    %15 = arith.addf %1, %14 : vector<1x8xf32>
    %c1 = arith.constant 1 : index
    %c0_11 = arith.constant 0 : index
    %c0_12 = arith.constant 0 : index
    %16 = vector.load %arg0[%c1, %c0_11, %c0_12] : memref<4x128x36xbf16, #tpu.memory_space<vmem>>, vector<1x128x36xbf16>
    %17 = vector.shape_cast %16 : vector<1x128x36xbf16> to vector<128x36xbf16>
    %c0_13 = arith.constant 0 : index
    %c0_14 = arith.constant 0 : index
    %18 = vector.load %arg1[%c0_13, %c0_14] : memref<36x8xbf16, #tpu.memory_space<vmem>>, vector<36x8xbf16>
    %cst_15 = arith.constant dense<0.000000e+00> : vector<128x8xf32>
    %19 = tpu.matmul %17, %18, %cst_15 {dimension_numbers = #tpu.dot_dimension_numbers<[1], [0], [0], [1], [0, 0, 1, 1], [], []>} : vector<128x36xbf16>, vector<36x8xbf16>, vector<128x8xf32> -> vector<128x8xf32>
    %c1_16 = arith.constant 1 : index
    %c0_17 = arith.constant 0 : index
    %c0_18 = arith.constant 0 : index
    %20 = vector.load %arg5[%c1_16, %c0_17, %c0_18] : memref<4x128x8xf32, #tpu.memory_space<vmem>>, vector<1x128x8xf32>
    %21 = vector.shape_cast %20 : vector<1x128x8xf32> to vector<128x8xf32>
    %22 = vector.shape_cast %19 : vector<128x8xf32> to vector<1x128x8xf32>
    tpu.vector_store %arg5[%c1_16, %c0_17, %c0_18], %22 {strides = array<i32>} : memref<4x128x8xf32, #tpu.memory_space<vmem>>, vector<1x128x8xf32>,
    %cst_19 = arith.constant dense<0.000000e+00> : vector<8xf32>
    %23 = vector.multi_reduction <add>, %19, %cst_19 [0] : vector<128x8xf32> to vector<8xf32>
    %24 = vector.shape_cast %23 : vector<8xf32> to vector<1x8xf32>
    %25 = arith.addf %11, %24 : vector<1x8xf32>
    %26 = arith.mulf %19, %19 : vector<128x8xf32>
    %cst_20 = arith.constant dense<0.000000e+00> : vector<8xf32>
    %27 = vector.multi_reduction <add>, %26, %cst_20 [0] : vector<128x8xf32> to vector<8xf32>
    %28 = vector.shape_cast %27 : vector<8xf32> to vector<1x8xf32>
    %29 = arith.addf %15, %28 : vector<1x8xf32>
    %c2 = arith.constant 2 : index
    %c0_21 = arith.constant 0 : index
    %c0_22 = arith.constant 0 : index
    %30 = vector.load %arg0[%c2, %c0_21, %c0_22] : memref<4x128x36xbf16, #tpu.memory_space<vmem>>, vector<1x128x36xbf16>
    %31 = vector.shape_cast %30 : vector<1x128x36xbf16> to vector<128x36xbf16>
    %c0_23 = arith.constant 0 : index
    %c0_24 = arith.constant 0 : index
    %32 = vector.load %arg1[%c0_23, %c0_24] : memref<36x8xbf16, #tpu.memory_space<vmem>>, vector<36x8xbf16>
    %cst_25 = arith.constant dense<0.000000e+00> : vector<128x8xf32>
    %33 = tpu.matmul %31, %32, %cst_25 {dimension_numbers = #tpu.dot_dimension_numbers<[1], [0], [0], [1], [0, 0, 1, 1], [], []>} : vector<128x36xbf16>, vector<36x8xbf16>, vector<128x8xf32> -> vector<128x8xf32>
    %c2_26 = arith.constant 2 : index
    %c0_27 = arith.constant 0 : index
    %c0_28 = arith.constant 0 : index
    %34 = vector.load %arg5[%c2_26, %c0_27, %c0_28] : memref<4x128x8xf32, #tpu.memory_space<vmem>>, vector<1x128x8xf32>
    %35 = vector.shape_cast %34 : vector<1x128x8xf32> to vector<128x8xf32>
    %36 = vector.shape_cast %33 : vector<128x8xf32> to vector<1x128x8xf32>
    tpu.vector_store %arg5[%c2_26, %c0_27, %c0_28], %36 {strides = array<i32>} : memref<4x128x8xf32, #tpu.memory_space<vmem>>, vector<1x128x8xf32>,
    %cst_29 = arith.constant dense<0.000000e+00> : vector<8xf32>
    %37 = vector.multi_reduction <add>, %33, %cst_29 [0] : vector<128x8xf32> to vector<8xf32>
    %38 = vector.shape_cast %37 : vector<8xf32> to vector<1x8xf32>
    %39 = arith.addf %25, %38 : vector<1x8xf32>
    %40 = arith.mulf %33, %33 : vector<128x8xf32>
    %cst_30 = arith.constant dense<0.000000e+00> : vector<8xf32>
    %41 = vector.multi_reduction <add>, %40, %cst_30 [0] : vector<128x8xf32> to vector<8xf32>
    %42 = vector.shape_cast %41 : vector<8xf32> to vector<1x8xf32>
    %43 = arith.addf %29, %42 : vector<1x8xf32>
    %c3 = arith.constant 3 : index
    %c0_31 = arith.constant 0 : index
    %c0_32 = arith.constant 0 : index
    %44 = vector.load %arg0[%c3, %c0_31, %c0_32] : memref<4x128x36xbf16, #tpu.memory_space<vmem>>, vector<1x128x36xbf16>
    %45 = vector.shape_cast %44 : vector<1x128x36xbf16> to vector<128x36xbf16>
    %c0_33 = arith.constant 0 : index
    %c0_34 = arith.constant 0 : index
    %46 = vector.load %arg1[%c0_33, %c0_34] : memref<36x8xbf16, #tpu.memory_space<vmem>>, vector<36x8xbf16>
    %cst_35 = arith.constant dense<0.000000e+00> : vector<128x8xf32>
    %47 = tpu.matmul %45, %46, %cst_35 {dimension_numbers = #tpu.dot_dimension_numbers<[1], [0], [0], [1], [0, 0, 1, 1], [], []>} : vector<128x36xbf16>, vector<36x8xbf16>, vector<128x8xf32> -> vector<128x8xf32>
    %c3_36 = arith.constant 3 : index
    %c0_37 = arith.constant 0 : index
    %c0_38 = arith.constant 0 : index
    %48 = vector.load %arg5[%c3_36, %c0_37, %c0_38] : memref<4x128x8xf32, #tpu.memory_space<vmem>>, vector<1x128x8xf32>
    %49 = vector.shape_cast %48 : vector<1x128x8xf32> to vector<128x8xf32>
    %50 = vector.shape_cast %47 : vector<128x8xf32> to vector<1x128x8xf32>
    tpu.vector_store %arg5[%c3_36, %c0_37, %c0_38], %50 {strides = array<i32>} : memref<4x128x8xf32, #tpu.memory_space<vmem>>, vector<1x128x8xf32>,
    %cst_39 = arith.constant dense<0.000000e+00> : vector<8xf32>
    %51 = vector.multi_reduction <add>, %47, %cst_39 [0] : vector<128x8xf32> to vector<8xf32>
    %52 = vector.shape_cast %51 : vector<8xf32> to vector<1x8xf32>
    %53 = arith.addf %39, %52 : vector<1x8xf32>
    %54 = arith.mulf %47, %47 : vector<128x8xf32>
    %cst_40 = arith.constant dense<0.000000e+00> : vector<8xf32>
    %55 = vector.multi_reduction <add>, %54, %cst_40 [0] : vector<128x8xf32> to vector<8xf32>
    %56 = vector.shape_cast %55 : vector<8xf32> to vector<1x8xf32>
    %57 = arith.addf %43, %56 : vector<1x8xf32>
    %cst_41 = arith.constant 0.001953125 : f32
    %58 = vector.broadcast %cst_41 : f32 to vector<1x8xf32>
    %59 = arith.mulf %53, %58 : vector<1x8xf32>
    %cst_42 = arith.constant 0.001953125 : f32
    %60 = vector.broadcast %cst_42 : f32 to vector<1x8xf32>
    %61 = arith.mulf %57, %60 : vector<1x8xf32>
    %62 = arith.mulf %59, %59 : vector<1x8xf32>
    %63 = arith.subf %61, %62 : vector<1x8xf32>
    %c0_43 = arith.constant 0 : index
    %c0_44 = arith.constant 0 : index
    %64 = vector.load %arg2[%c0_43, %c0_44] : memref<1x8xf32, #tpu.memory_space<vmem>>, vector<1x8xf32>
    %cst_45 = arith.constant 9.99999974E-6 : f32
    %65 = vector.broadcast %cst_45 : f32 to vector<1x8xf32>
    %66 = arith.addf %63, %65 : vector<1x8xf32>
    %67 = math.rsqrt %66 : vector<1x8xf32>
    %68 = arith.mulf %64, %67 : vector<1x8xf32>
    %c0_46 = arith.constant 0 : index
    %c0_47 = arith.constant 0 : index
    %69 = vector.load %arg3[%c0_46, %c0_47] : memref<1x8xf32, #tpu.memory_space<vmem>>, vector<1x8xf32>
    %70 = arith.mulf %59, %68 : vector<1x8xf32>
    %71 = arith.subf %69, %70 : vector<1x8xf32>
    %c0_48 = arith.constant 0 : index
    %c0_49 = arith.constant 0 : index
    %c0_50 = arith.constant 0 : index
    %72 = vector.load %arg5[%c0_48, %c0_49, %c0_50] : memref<4x128x8xf32, #tpu.memory_space<vmem>>, vector<1x128x8xf32>
    %73 = vector.shape_cast %72 : vector<1x128x8xf32> to vector<128x8xf32>
    %74 = vector.broadcast %68 : vector<1x8xf32> to vector<128x8xf32>
    %75 = arith.mulf %73, %74 : vector<128x8xf32>
    %76 = vector.broadcast %71 : vector<1x8xf32> to vector<128x8xf32>
    %77 = arith.addf %75, %76 : vector<128x8xf32>
    %cst_51 = arith.constant 0.000000e+00 : f32
    %78 = vector.broadcast %cst_51 : f32 to vector<128x8xf32>
    %79 = arith.maximumf %77, %78 : vector<128x8xf32>
    %c1_52 = arith.constant 1 : index
    %c0_53 = arith.constant 0 : index
    %c0_54 = arith.constant 0 : index
    %80 = vector.load %arg5[%c1_52, %c0_53, %c0_54] : memref<4x128x8xf32, #tpu.memory_space<vmem>>, vector<1x128x8xf32>
    %81 = vector.shape_cast %80 : vector<1x128x8xf32> to vector<128x8xf32>
    %82 = vector.broadcast %68 : vector<1x8xf32> to vector<128x8xf32>
    %83 = arith.mulf %81, %82 : vector<128x8xf32>
    %84 = vector.broadcast %71 : vector<1x8xf32> to vector<128x8xf32>
    %85 = arith.addf %83, %84 : vector<128x8xf32>
    %cst_55 = arith.constant 0.000000e+00 : f32
    %86 = vector.broadcast %cst_55 : f32 to vector<128x8xf32>
    %87 = arith.maximumf %85, %86 : vector<128x8xf32>
    %88 = arith.maximumf %79, %87 : vector<128x8xf32>
    %c2_56 = arith.constant 2 : index
    %c0_57 = arith.constant 0 : index
    %c0_58 = arith.constant 0 : index
    %89 = vector.load %arg5[%c2_56, %c0_57, %c0_58] : memref<4x128x8xf32, #tpu.memory_space<vmem>>, vector<1x128x8xf32>
    %90 = vector.shape_cast %89 : vector<1x128x8xf32> to vector<128x8xf32>
    %91 = vector.broadcast %68 : vector<1x8xf32> to vector<128x8xf32>
    %92 = arith.mulf %90, %91 : vector<128x8xf32>
    %93 = vector.broadcast %71 : vector<1x8xf32> to vector<128x8xf32>
    %94 = arith.addf %92, %93 : vector<128x8xf32>
    %cst_59 = arith.constant 0.000000e+00 : f32
    %95 = vector.broadcast %cst_59 : f32 to vector<128x8xf32>
    %96 = arith.maximumf %94, %95 : vector<128x8xf32>
    %97 = arith.maximumf %88, %96 : vector<128x8xf32>
    %c3_60 = arith.constant 3 : index
    %c0_61 = arith.constant 0 : index
    %c0_62 = arith.constant 0 : index
    %98 = vector.load %arg5[%c3_60, %c0_61, %c0_62] : memref<4x128x8xf32, #tpu.memory_space<vmem>>, vector<1x128x8xf32>
    %99 = vector.shape_cast %98 : vector<1x128x8xf32> to vector<128x8xf32>
    %100 = vector.broadcast %68 : vector<1x8xf32> to vector<128x8xf32>
    %101 = arith.mulf %99, %100 : vector<128x8xf32>
    %102 = vector.broadcast %71 : vector<1x8xf32> to vector<128x8xf32>
    %103 = arith.addf %101, %102 : vector<128x8xf32>
    %cst_63 = arith.constant 0.000000e+00 : f32
    %104 = vector.broadcast %cst_63 : f32 to vector<128x8xf32>
    %105 = arith.maximumf %103, %104 : vector<128x8xf32>
    %106 = arith.maximumf %97, %105 : vector<128x8xf32>
    %c0_64 = arith.constant 0 : index
    %c0_65 = arith.constant 0 : index
    %107 = vector.load %arg4[%c0_64, %c0_65] : memref<128x8xf32, #tpu.memory_space<vmem>>, vector<128x8xf32>
    tpu.vector_store %arg4[%c0_64, %c0_65], %106 {strides = array<i32>} : memref<128x8xf32, #tpu.memory_space<vmem>>, vector<128x8xf32>,
    return
  }
}

module attributes {stable_mosaic.version = 11 : i64} {
  func.func @conv_bn_relu_pool_kernel(%arg0: memref<4x32x72xbf16, #tpu.memory_space<vmem>>, %arg1: memref<72x16xbf16, #tpu.memory_space<vmem>>, %arg2: memref<1x16xf32, #tpu.memory_space<vmem>>, %arg3: memref<1x16xf32, #tpu.memory_space<vmem>>, %arg4: memref<32x16xf32, #tpu.memory_space<vmem>>, %arg5: memref<4x32x16xf32, #tpu.memory_space<vmem>>) attributes {dimension_semantics = [], scalar_prefetch = 0 : i64, scratch_operands = 1 : i64, tpu.core_type = #tpu.core_type<tc>} {
    %cst = arith.constant 0.000000e+00 : f32
    %0 = vector.broadcast %cst : f32 to vector<1x16xf32>
    %cst_0 = arith.constant 0.000000e+00 : f32
    %1 = vector.broadcast %cst_0 : f32 to vector<1x16xf32>
    %c0 = arith.constant 0 : index
    %c0_1 = arith.constant 0 : index
    %c0_2 = arith.constant 0 : index
    %2 = vector.load %arg0[%c0, %c0_1, %c0_2] : memref<4x32x72xbf16, #tpu.memory_space<vmem>>, vector<1x32x72xbf16>
    %3 = vector.shape_cast %2 : vector<1x32x72xbf16> to vector<32x72xbf16>
    %c0_3 = arith.constant 0 : index
    %c0_4 = arith.constant 0 : index
    %4 = vector.load %arg1[%c0_3, %c0_4] : memref<72x16xbf16, #tpu.memory_space<vmem>>, vector<72x16xbf16>
    %cst_5 = arith.constant dense<0.000000e+00> : vector<32x16xf32>
    %5 = tpu.matmul %3, %4, %cst_5 {dimension_numbers = #tpu.dot_dimension_numbers<[1], [0], [0], [1], [0, 0, 1, 1], [], []>} : vector<32x72xbf16>, vector<72x16xbf16>, vector<32x16xf32> -> vector<32x16xf32>
    %c0_6 = arith.constant 0 : index
    %c0_7 = arith.constant 0 : index
    %c0_8 = arith.constant 0 : index
    %6 = vector.load %arg5[%c0_6, %c0_7, %c0_8] : memref<4x32x16xf32, #tpu.memory_space<vmem>>, vector<1x32x16xf32>
    %7 = vector.shape_cast %6 : vector<1x32x16xf32> to vector<32x16xf32>
    %8 = vector.shape_cast %5 : vector<32x16xf32> to vector<1x32x16xf32>
    tpu.vector_store %arg5[%c0_6, %c0_7, %c0_8], %8 {strides = array<i32>} : memref<4x32x16xf32, #tpu.memory_space<vmem>>, vector<1x32x16xf32>,
    %cst_9 = arith.constant dense<0.000000e+00> : vector<16xf32>
    %9 = vector.multi_reduction <add>, %5, %cst_9 [0] : vector<32x16xf32> to vector<16xf32>
    %10 = vector.shape_cast %9 : vector<16xf32> to vector<1x16xf32>
    %11 = arith.addf %0, %10 : vector<1x16xf32>
    %12 = arith.mulf %5, %5 : vector<32x16xf32>
    %cst_10 = arith.constant dense<0.000000e+00> : vector<16xf32>
    %13 = vector.multi_reduction <add>, %12, %cst_10 [0] : vector<32x16xf32> to vector<16xf32>
    %14 = vector.shape_cast %13 : vector<16xf32> to vector<1x16xf32>
    %15 = arith.addf %1, %14 : vector<1x16xf32>
    %c1 = arith.constant 1 : index
    %c0_11 = arith.constant 0 : index
    %c0_12 = arith.constant 0 : index
    %16 = vector.load %arg0[%c1, %c0_11, %c0_12] : memref<4x32x72xbf16, #tpu.memory_space<vmem>>, vector<1x32x72xbf16>
    %17 = vector.shape_cast %16 : vector<1x32x72xbf16> to vector<32x72xbf16>
    %c0_13 = arith.constant 0 : index
    %c0_14 = arith.constant 0 : index
    %18 = vector.load %arg1[%c0_13, %c0_14] : memref<72x16xbf16, #tpu.memory_space<vmem>>, vector<72x16xbf16>
    %cst_15 = arith.constant dense<0.000000e+00> : vector<32x16xf32>
    %19 = tpu.matmul %17, %18, %cst_15 {dimension_numbers = #tpu.dot_dimension_numbers<[1], [0], [0], [1], [0, 0, 1, 1], [], []>} : vector<32x72xbf16>, vector<72x16xbf16>, vector<32x16xf32> -> vector<32x16xf32>
    %c1_16 = arith.constant 1 : index
    %c0_17 = arith.constant 0 : index
    %c0_18 = arith.constant 0 : index
    %20 = vector.load %arg5[%c1_16, %c0_17, %c0_18] : memref<4x32x16xf32, #tpu.memory_space<vmem>>, vector<1x32x16xf32>
    %21 = vector.shape_cast %20 : vector<1x32x16xf32> to vector<32x16xf32>
    %22 = vector.shape_cast %19 : vector<32x16xf32> to vector<1x32x16xf32>
    tpu.vector_store %arg5[%c1_16, %c0_17, %c0_18], %22 {strides = array<i32>} : memref<4x32x16xf32, #tpu.memory_space<vmem>>, vector<1x32x16xf32>,
    %cst_19 = arith.constant dense<0.000000e+00> : vector<16xf32>
    %23 = vector.multi_reduction <add>, %19, %cst_19 [0] : vector<32x16xf32> to vector<16xf32>
    %24 = vector.shape_cast %23 : vector<16xf32> to vector<1x16xf32>
    %25 = arith.addf %11, %24 : vector<1x16xf32>
    %26 = arith.mulf %19, %19 : vector<32x16xf32>
    %cst_20 = arith.constant dense<0.000000e+00> : vector<16xf32>
    %27 = vector.multi_reduction <add>, %26, %cst_20 [0] : vector<32x16xf32> to vector<16xf32>
    %28 = vector.shape_cast %27 : vector<16xf32> to vector<1x16xf32>
    %29 = arith.addf %15, %28 : vector<1x16xf32>
    %c2 = arith.constant 2 : index
    %c0_21 = arith.constant 0 : index
    %c0_22 = arith.constant 0 : index
    %30 = vector.load %arg0[%c2, %c0_21, %c0_22] : memref<4x32x72xbf16, #tpu.memory_space<vmem>>, vector<1x32x72xbf16>
    %31 = vector.shape_cast %30 : vector<1x32x72xbf16> to vector<32x72xbf16>
    %c0_23 = arith.constant 0 : index
    %c0_24 = arith.constant 0 : index
    %32 = vector.load %arg1[%c0_23, %c0_24] : memref<72x16xbf16, #tpu.memory_space<vmem>>, vector<72x16xbf16>
    %cst_25 = arith.constant dense<0.000000e+00> : vector<32x16xf32>
    %33 = tpu.matmul %31, %32, %cst_25 {dimension_numbers = #tpu.dot_dimension_numbers<[1], [0], [0], [1], [0, 0, 1, 1], [], []>} : vector<32x72xbf16>, vector<72x16xbf16>, vector<32x16xf32> -> vector<32x16xf32>
    %c2_26 = arith.constant 2 : index
    %c0_27 = arith.constant 0 : index
    %c0_28 = arith.constant 0 : index
    %34 = vector.load %arg5[%c2_26, %c0_27, %c0_28] : memref<4x32x16xf32, #tpu.memory_space<vmem>>, vector<1x32x16xf32>
    %35 = vector.shape_cast %34 : vector<1x32x16xf32> to vector<32x16xf32>
    %36 = vector.shape_cast %33 : vector<32x16xf32> to vector<1x32x16xf32>
    tpu.vector_store %arg5[%c2_26, %c0_27, %c0_28], %36 {strides = array<i32>} : memref<4x32x16xf32, #tpu.memory_space<vmem>>, vector<1x32x16xf32>,
    %cst_29 = arith.constant dense<0.000000e+00> : vector<16xf32>
    %37 = vector.multi_reduction <add>, %33, %cst_29 [0] : vector<32x16xf32> to vector<16xf32>
    %38 = vector.shape_cast %37 : vector<16xf32> to vector<1x16xf32>
    %39 = arith.addf %25, %38 : vector<1x16xf32>
    %40 = arith.mulf %33, %33 : vector<32x16xf32>
    %cst_30 = arith.constant dense<0.000000e+00> : vector<16xf32>
    %41 = vector.multi_reduction <add>, %40, %cst_30 [0] : vector<32x16xf32> to vector<16xf32>
    %42 = vector.shape_cast %41 : vector<16xf32> to vector<1x16xf32>
    %43 = arith.addf %29, %42 : vector<1x16xf32>
    %c3 = arith.constant 3 : index
    %c0_31 = arith.constant 0 : index
    %c0_32 = arith.constant 0 : index
    %44 = vector.load %arg0[%c3, %c0_31, %c0_32] : memref<4x32x72xbf16, #tpu.memory_space<vmem>>, vector<1x32x72xbf16>
    %45 = vector.shape_cast %44 : vector<1x32x72xbf16> to vector<32x72xbf16>
    %c0_33 = arith.constant 0 : index
    %c0_34 = arith.constant 0 : index
    %46 = vector.load %arg1[%c0_33, %c0_34] : memref<72x16xbf16, #tpu.memory_space<vmem>>, vector<72x16xbf16>
    %cst_35 = arith.constant dense<0.000000e+00> : vector<32x16xf32>
    %47 = tpu.matmul %45, %46, %cst_35 {dimension_numbers = #tpu.dot_dimension_numbers<[1], [0], [0], [1], [0, 0, 1, 1], [], []>} : vector<32x72xbf16>, vector<72x16xbf16>, vector<32x16xf32> -> vector<32x16xf32>
    %c3_36 = arith.constant 3 : index
    %c0_37 = arith.constant 0 : index
    %c0_38 = arith.constant 0 : index
    %48 = vector.load %arg5[%c3_36, %c0_37, %c0_38] : memref<4x32x16xf32, #tpu.memory_space<vmem>>, vector<1x32x16xf32>
    %49 = vector.shape_cast %48 : vector<1x32x16xf32> to vector<32x16xf32>
    %50 = vector.shape_cast %47 : vector<32x16xf32> to vector<1x32x16xf32>
    tpu.vector_store %arg5[%c3_36, %c0_37, %c0_38], %50 {strides = array<i32>} : memref<4x32x16xf32, #tpu.memory_space<vmem>>, vector<1x32x16xf32>,
    %cst_39 = arith.constant dense<0.000000e+00> : vector<16xf32>
    %51 = vector.multi_reduction <add>, %47, %cst_39 [0] : vector<32x16xf32> to vector<16xf32>
    %52 = vector.shape_cast %51 : vector<16xf32> to vector<1x16xf32>
    %53 = arith.addf %39, %52 : vector<1x16xf32>
    %54 = arith.mulf %47, %47 : vector<32x16xf32>
    %cst_40 = arith.constant dense<0.000000e+00> : vector<16xf32>
    %55 = vector.multi_reduction <add>, %54, %cst_40 [0] : vector<32x16xf32> to vector<16xf32>
    %56 = vector.shape_cast %55 : vector<16xf32> to vector<1x16xf32>
    %57 = arith.addf %43, %56 : vector<1x16xf32>
    %cst_41 = arith.constant 7.812500e-03 : f32
    %58 = vector.broadcast %cst_41 : f32 to vector<1x16xf32>
    %59 = arith.mulf %53, %58 : vector<1x16xf32>
    %cst_42 = arith.constant 7.812500e-03 : f32
    %60 = vector.broadcast %cst_42 : f32 to vector<1x16xf32>
    %61 = arith.mulf %57, %60 : vector<1x16xf32>
    %62 = arith.mulf %59, %59 : vector<1x16xf32>
    %63 = arith.subf %61, %62 : vector<1x16xf32>
    %c0_43 = arith.constant 0 : index
    %c0_44 = arith.constant 0 : index
    %64 = vector.load %arg2[%c0_43, %c0_44] : memref<1x16xf32, #tpu.memory_space<vmem>>, vector<1x16xf32>
    %cst_45 = arith.constant 9.99999974E-6 : f32
    %65 = vector.broadcast %cst_45 : f32 to vector<1x16xf32>
    %66 = arith.addf %63, %65 : vector<1x16xf32>
    %67 = math.rsqrt %66 : vector<1x16xf32>
    %68 = arith.mulf %64, %67 : vector<1x16xf32>
    %c0_46 = arith.constant 0 : index
    %c0_47 = arith.constant 0 : index
    %69 = vector.load %arg3[%c0_46, %c0_47] : memref<1x16xf32, #tpu.memory_space<vmem>>, vector<1x16xf32>
    %70 = arith.mulf %59, %68 : vector<1x16xf32>
    %71 = arith.subf %69, %70 : vector<1x16xf32>
    %c0_48 = arith.constant 0 : index
    %c0_49 = arith.constant 0 : index
    %c0_50 = arith.constant 0 : index
    %72 = vector.load %arg5[%c0_48, %c0_49, %c0_50] : memref<4x32x16xf32, #tpu.memory_space<vmem>>, vector<1x32x16xf32>
    %73 = vector.shape_cast %72 : vector<1x32x16xf32> to vector<32x16xf32>
    %74 = vector.broadcast %68 : vector<1x16xf32> to vector<32x16xf32>
    %75 = arith.mulf %73, %74 : vector<32x16xf32>
    %76 = vector.broadcast %71 : vector<1x16xf32> to vector<32x16xf32>
    %77 = arith.addf %75, %76 : vector<32x16xf32>
    %cst_51 = arith.constant 0.000000e+00 : f32
    %78 = vector.broadcast %cst_51 : f32 to vector<32x16xf32>
    %79 = arith.maximumf %77, %78 : vector<32x16xf32>
    %c1_52 = arith.constant 1 : index
    %c0_53 = arith.constant 0 : index
    %c0_54 = arith.constant 0 : index
    %80 = vector.load %arg5[%c1_52, %c0_53, %c0_54] : memref<4x32x16xf32, #tpu.memory_space<vmem>>, vector<1x32x16xf32>
    %81 = vector.shape_cast %80 : vector<1x32x16xf32> to vector<32x16xf32>
    %82 = vector.broadcast %68 : vector<1x16xf32> to vector<32x16xf32>
    %83 = arith.mulf %81, %82 : vector<32x16xf32>
    %84 = vector.broadcast %71 : vector<1x16xf32> to vector<32x16xf32>
    %85 = arith.addf %83, %84 : vector<32x16xf32>
    %cst_55 = arith.constant 0.000000e+00 : f32
    %86 = vector.broadcast %cst_55 : f32 to vector<32x16xf32>
    %87 = arith.maximumf %85, %86 : vector<32x16xf32>
    %88 = arith.maximumf %79, %87 : vector<32x16xf32>
    %c2_56 = arith.constant 2 : index
    %c0_57 = arith.constant 0 : index
    %c0_58 = arith.constant 0 : index
    %89 = vector.load %arg5[%c2_56, %c0_57, %c0_58] : memref<4x32x16xf32, #tpu.memory_space<vmem>>, vector<1x32x16xf32>
    %90 = vector.shape_cast %89 : vector<1x32x16xf32> to vector<32x16xf32>
    %91 = vector.broadcast %68 : vector<1x16xf32> to vector<32x16xf32>
    %92 = arith.mulf %90, %91 : vector<32x16xf32>
    %93 = vector.broadcast %71 : vector<1x16xf32> to vector<32x16xf32>
    %94 = arith.addf %92, %93 : vector<32x16xf32>
    %cst_59 = arith.constant 0.000000e+00 : f32
    %95 = vector.broadcast %cst_59 : f32 to vector<32x16xf32>
    %96 = arith.maximumf %94, %95 : vector<32x16xf32>
    %97 = arith.maximumf %88, %96 : vector<32x16xf32>
    %c3_60 = arith.constant 3 : index
    %c0_61 = arith.constant 0 : index
    %c0_62 = arith.constant 0 : index
    %98 = vector.load %arg5[%c3_60, %c0_61, %c0_62] : memref<4x32x16xf32, #tpu.memory_space<vmem>>, vector<1x32x16xf32>
    %99 = vector.shape_cast %98 : vector<1x32x16xf32> to vector<32x16xf32>
    %100 = vector.broadcast %68 : vector<1x16xf32> to vector<32x16xf32>
    %101 = arith.mulf %99, %100 : vector<32x16xf32>
    %102 = vector.broadcast %71 : vector<1x16xf32> to vector<32x16xf32>
    %103 = arith.addf %101, %102 : vector<32x16xf32>
    %cst_63 = arith.constant 0.000000e+00 : f32
    %104 = vector.broadcast %cst_63 : f32 to vector<32x16xf32>
    %105 = arith.maximumf %103, %104 : vector<32x16xf32>
    %106 = arith.maximumf %97, %105 : vector<32x16xf32>
    %c0_64 = arith.constant 0 : index
    %c0_65 = arith.constant 0 : index
    %107 = vector.load %arg4[%c0_64, %c0_65] : memref<32x16xf32, #tpu.memory_space<vmem>>, vector<32x16xf32>
    tpu.vector_store %arg4[%c0_64, %c0_65], %106 {strides = array<i32>} : memref<32x16xf32, #tpu.memory_space<vmem>>, vector<32x16xf32>,
    return
  }
}

module attributes {stable_mosaic.version = 11 : i64} {
  func.func @conv_bn_relu_pool_kernel(%arg0: memref<4x8x144xbf16, #tpu.memory_space<vmem>>, %arg1: memref<144x16xbf16, #tpu.memory_space<vmem>>, %arg2: memref<1x16xf32, #tpu.memory_space<vmem>>, %arg3: memref<1x16xf32, #tpu.memory_space<vmem>>, %arg4: memref<8x16xf32, #tpu.memory_space<vmem>>, %arg5: memref<4x8x16xf32, #tpu.memory_space<vmem>>) attributes {dimension_semantics = [], scalar_prefetch = 0 : i64, scratch_operands = 1 : i64, tpu.core_type = #tpu.core_type<tc>} {
    %cst = arith.constant 0.000000e+00 : f32
    %0 = vector.broadcast %cst : f32 to vector<1x16xf32>
    %cst_0 = arith.constant 0.000000e+00 : f32
    %1 = vector.broadcast %cst_0 : f32 to vector<1x16xf32>
    %c0 = arith.constant 0 : index
    %c0_1 = arith.constant 0 : index
    %c0_2 = arith.constant 0 : index
    %2 = vector.load %arg0[%c0, %c0_1, %c0_2] : memref<4x8x144xbf16, #tpu.memory_space<vmem>>, vector<1x8x144xbf16>
    %3 = vector.shape_cast %2 : vector<1x8x144xbf16> to vector<8x144xbf16>
    %c0_3 = arith.constant 0 : index
    %c0_4 = arith.constant 0 : index
    %4 = vector.load %arg1[%c0_3, %c0_4] : memref<144x16xbf16, #tpu.memory_space<vmem>>, vector<144x16xbf16>
    %cst_5 = arith.constant dense<0.000000e+00> : vector<8x16xf32>
    %5 = tpu.matmul %3, %4, %cst_5 {dimension_numbers = #tpu.dot_dimension_numbers<[1], [0], [0], [1], [0, 0, 1, 1], [], []>} : vector<8x144xbf16>, vector<144x16xbf16>, vector<8x16xf32> -> vector<8x16xf32>
    %c0_6 = arith.constant 0 : index
    %c0_7 = arith.constant 0 : index
    %c0_8 = arith.constant 0 : index
    %6 = vector.load %arg5[%c0_6, %c0_7, %c0_8] : memref<4x8x16xf32, #tpu.memory_space<vmem>>, vector<1x8x16xf32>
    %7 = vector.shape_cast %6 : vector<1x8x16xf32> to vector<8x16xf32>
    %8 = vector.shape_cast %5 : vector<8x16xf32> to vector<1x8x16xf32>
    tpu.vector_store %arg5[%c0_6, %c0_7, %c0_8], %8 {strides = array<i32>} : memref<4x8x16xf32, #tpu.memory_space<vmem>>, vector<1x8x16xf32>,
    %cst_9 = arith.constant dense<0.000000e+00> : vector<16xf32>
    %9 = vector.multi_reduction <add>, %5, %cst_9 [0] : vector<8x16xf32> to vector<16xf32>
    %10 = vector.shape_cast %9 : vector<16xf32> to vector<1x16xf32>
    %11 = arith.addf %0, %10 : vector<1x16xf32>
    %12 = arith.mulf %5, %5 : vector<8x16xf32>
    %cst_10 = arith.constant dense<0.000000e+00> : vector<16xf32>
    %13 = vector.multi_reduction <add>, %12, %cst_10 [0] : vector<8x16xf32> to vector<16xf32>
    %14 = vector.shape_cast %13 : vector<16xf32> to vector<1x16xf32>
    %15 = arith.addf %1, %14 : vector<1x16xf32>
    %c1 = arith.constant 1 : index
    %c0_11 = arith.constant 0 : index
    %c0_12 = arith.constant 0 : index
    %16 = vector.load %arg0[%c1, %c0_11, %c0_12] : memref<4x8x144xbf16, #tpu.memory_space<vmem>>, vector<1x8x144xbf16>
    %17 = vector.shape_cast %16 : vector<1x8x144xbf16> to vector<8x144xbf16>
    %c0_13 = arith.constant 0 : index
    %c0_14 = arith.constant 0 : index
    %18 = vector.load %arg1[%c0_13, %c0_14] : memref<144x16xbf16, #tpu.memory_space<vmem>>, vector<144x16xbf16>
    %cst_15 = arith.constant dense<0.000000e+00> : vector<8x16xf32>
    %19 = tpu.matmul %17, %18, %cst_15 {dimension_numbers = #tpu.dot_dimension_numbers<[1], [0], [0], [1], [0, 0, 1, 1], [], []>} : vector<8x144xbf16>, vector<144x16xbf16>, vector<8x16xf32> -> vector<8x16xf32>
    %c1_16 = arith.constant 1 : index
    %c0_17 = arith.constant 0 : index
    %c0_18 = arith.constant 0 : index
    %20 = vector.load %arg5[%c1_16, %c0_17, %c0_18] : memref<4x8x16xf32, #tpu.memory_space<vmem>>, vector<1x8x16xf32>
    %21 = vector.shape_cast %20 : vector<1x8x16xf32> to vector<8x16xf32>
    %22 = vector.shape_cast %19 : vector<8x16xf32> to vector<1x8x16xf32>
    tpu.vector_store %arg5[%c1_16, %c0_17, %c0_18], %22 {strides = array<i32>} : memref<4x8x16xf32, #tpu.memory_space<vmem>>, vector<1x8x16xf32>,
    %cst_19 = arith.constant dense<0.000000e+00> : vector<16xf32>
    %23 = vector.multi_reduction <add>, %19, %cst_19 [0] : vector<8x16xf32> to vector<16xf32>
    %24 = vector.shape_cast %23 : vector<16xf32> to vector<1x16xf32>
    %25 = arith.addf %11, %24 : vector<1x16xf32>
    %26 = arith.mulf %19, %19 : vector<8x16xf32>
    %cst_20 = arith.constant dense<0.000000e+00> : vector<16xf32>
    %27 = vector.multi_reduction <add>, %26, %cst_20 [0] : vector<8x16xf32> to vector<16xf32>
    %28 = vector.shape_cast %27 : vector<16xf32> to vector<1x16xf32>
    %29 = arith.addf %15, %28 : vector<1x16xf32>
    %c2 = arith.constant 2 : index
    %c0_21 = arith.constant 0 : index
    %c0_22 = arith.constant 0 : index
    %30 = vector.load %arg0[%c2, %c0_21, %c0_22] : memref<4x8x144xbf16, #tpu.memory_space<vmem>>, vector<1x8x144xbf16>
    %31 = vector.shape_cast %30 : vector<1x8x144xbf16> to vector<8x144xbf16>
    %c0_23 = arith.constant 0 : index
    %c0_24 = arith.constant 0 : index
    %32 = vector.load %arg1[%c0_23, %c0_24] : memref<144x16xbf16, #tpu.memory_space<vmem>>, vector<144x16xbf16>
    %cst_25 = arith.constant dense<0.000000e+00> : vector<8x16xf32>
    %33 = tpu.matmul %31, %32, %cst_25 {dimension_numbers = #tpu.dot_dimension_numbers<[1], [0], [0], [1], [0, 0, 1, 1], [], []>} : vector<8x144xbf16>, vector<144x16xbf16>, vector<8x16xf32> -> vector<8x16xf32>
    %c2_26 = arith.constant 2 : index
    %c0_27 = arith.constant 0 : index
    %c0_28 = arith.constant 0 : index
    %34 = vector.load %arg5[%c2_26, %c0_27, %c0_28] : memref<4x8x16xf32, #tpu.memory_space<vmem>>, vector<1x8x16xf32>
    %35 = vector.shape_cast %34 : vector<1x8x16xf32> to vector<8x16xf32>
    %36 = vector.shape_cast %33 : vector<8x16xf32> to vector<1x8x16xf32>
    tpu.vector_store %arg5[%c2_26, %c0_27, %c0_28], %36 {strides = array<i32>} : memref<4x8x16xf32, #tpu.memory_space<vmem>>, vector<1x8x16xf32>,
    %cst_29 = arith.constant dense<0.000000e+00> : vector<16xf32>
    %37 = vector.multi_reduction <add>, %33, %cst_29 [0] : vector<8x16xf32> to vector<16xf32>
    %38 = vector.shape_cast %37 : vector<16xf32> to vector<1x16xf32>
    %39 = arith.addf %25, %38 : vector<1x16xf32>
    %40 = arith.mulf %33, %33 : vector<8x16xf32>
    %cst_30 = arith.constant dense<0.000000e+00> : vector<16xf32>
    %41 = vector.multi_reduction <add>, %40, %cst_30 [0] : vector<8x16xf32> to vector<16xf32>
    %42 = vector.shape_cast %41 : vector<16xf32> to vector<1x16xf32>
    %43 = arith.addf %29, %42 : vector<1x16xf32>
    %c3 = arith.constant 3 : index
    %c0_31 = arith.constant 0 : index
    %c0_32 = arith.constant 0 : index
    %44 = vector.load %arg0[%c3, %c0_31, %c0_32] : memref<4x8x144xbf16, #tpu.memory_space<vmem>>, vector<1x8x144xbf16>
    %45 = vector.shape_cast %44 : vector<1x8x144xbf16> to vector<8x144xbf16>
    %c0_33 = arith.constant 0 : index
    %c0_34 = arith.constant 0 : index
    %46 = vector.load %arg1[%c0_33, %c0_34] : memref<144x16xbf16, #tpu.memory_space<vmem>>, vector<144x16xbf16>
    %cst_35 = arith.constant dense<0.000000e+00> : vector<8x16xf32>
    %47 = tpu.matmul %45, %46, %cst_35 {dimension_numbers = #tpu.dot_dimension_numbers<[1], [0], [0], [1], [0, 0, 1, 1], [], []>} : vector<8x144xbf16>, vector<144x16xbf16>, vector<8x16xf32> -> vector<8x16xf32>
    %c3_36 = arith.constant 3 : index
    %c0_37 = arith.constant 0 : index
    %c0_38 = arith.constant 0 : index
    %48 = vector.load %arg5[%c3_36, %c0_37, %c0_38] : memref<4x8x16xf32, #tpu.memory_space<vmem>>, vector<1x8x16xf32>
    %49 = vector.shape_cast %48 : vector<1x8x16xf32> to vector<8x16xf32>
    %50 = vector.shape_cast %47 : vector<8x16xf32> to vector<1x8x16xf32>
    tpu.vector_store %arg5[%c3_36, %c0_37, %c0_38], %50 {strides = array<i32>} : memref<4x8x16xf32, #tpu.memory_space<vmem>>, vector<1x8x16xf32>,
    %cst_39 = arith.constant dense<0.000000e+00> : vector<16xf32>
    %51 = vector.multi_reduction <add>, %47, %cst_39 [0] : vector<8x16xf32> to vector<16xf32>
    %52 = vector.shape_cast %51 : vector<16xf32> to vector<1x16xf32>
    %53 = arith.addf %39, %52 : vector<1x16xf32>
    %54 = arith.mulf %47, %47 : vector<8x16xf32>
    %cst_40 = arith.constant dense<0.000000e+00> : vector<16xf32>
    %55 = vector.multi_reduction <add>, %54, %cst_40 [0] : vector<8x16xf32> to vector<16xf32>
    %56 = vector.shape_cast %55 : vector<16xf32> to vector<1x16xf32>
    %57 = arith.addf %43, %56 : vector<1x16xf32>
    %cst_41 = arith.constant 3.125000e-02 : f32
    %58 = vector.broadcast %cst_41 : f32 to vector<1x16xf32>
    %59 = arith.mulf %53, %58 : vector<1x16xf32>
    %cst_42 = arith.constant 3.125000e-02 : f32
    %60 = vector.broadcast %cst_42 : f32 to vector<1x16xf32>
    %61 = arith.mulf %57, %60 : vector<1x16xf32>
    %62 = arith.mulf %59, %59 : vector<1x16xf32>
    %63 = arith.subf %61, %62 : vector<1x16xf32>
    %c0_43 = arith.constant 0 : index
    %c0_44 = arith.constant 0 : index
    %64 = vector.load %arg2[%c0_43, %c0_44] : memref<1x16xf32, #tpu.memory_space<vmem>>, vector<1x16xf32>
    %cst_45 = arith.constant 9.99999974E-6 : f32
    %65 = vector.broadcast %cst_45 : f32 to vector<1x16xf32>
    %66 = arith.addf %63, %65 : vector<1x16xf32>
    %67 = math.rsqrt %66 : vector<1x16xf32>
    %68 = arith.mulf %64, %67 : vector<1x16xf32>
    %c0_46 = arith.constant 0 : index
    %c0_47 = arith.constant 0 : index
    %69 = vector.load %arg3[%c0_46, %c0_47] : memref<1x16xf32, #tpu.memory_space<vmem>>, vector<1x16xf32>
    %70 = arith.mulf %59, %68 : vector<1x16xf32>
    %71 = arith.subf %69, %70 : vector<1x16xf32>
    %c0_48 = arith.constant 0 : index
    %c0_49 = arith.constant 0 : index
    %c0_50 = arith.constant 0 : index
    %72 = vector.load %arg5[%c0_48, %c0_49, %c0_50] : memref<4x8x16xf32, #tpu.memory_space<vmem>>, vector<1x8x16xf32>
    %73 = vector.shape_cast %72 : vector<1x8x16xf32> to vector<8x16xf32>
    %74 = vector.broadcast %68 : vector<1x16xf32> to vector<8x16xf32>
    %75 = arith.mulf %73, %74 : vector<8x16xf32>
    %76 = vector.broadcast %71 : vector<1x16xf32> to vector<8x16xf32>
    %77 = arith.addf %75, %76 : vector<8x16xf32>
    %cst_51 = arith.constant 0.000000e+00 : f32
    %78 = vector.broadcast %cst_51 : f32 to vector<8x16xf32>
    %79 = arith.maximumf %77, %78 : vector<8x16xf32>
    %c1_52 = arith.constant 1 : index
    %c0_53 = arith.constant 0 : index
    %c0_54 = arith.constant 0 : index
    %80 = vector.load %arg5[%c1_52, %c0_53, %c0_54] : memref<4x8x16xf32, #tpu.memory_space<vmem>>, vector<1x8x16xf32>
    %81 = vector.shape_cast %80 : vector<1x8x16xf32> to vector<8x16xf32>
    %82 = vector.broadcast %68 : vector<1x16xf32> to vector<8x16xf32>
    %83 = arith.mulf %81, %82 : vector<8x16xf32>
    %84 = vector.broadcast %71 : vector<1x16xf32> to vector<8x16xf32>
    %85 = arith.addf %83, %84 : vector<8x16xf32>
    %cst_55 = arith.constant 0.000000e+00 : f32
    %86 = vector.broadcast %cst_55 : f32 to vector<8x16xf32>
    %87 = arith.maximumf %85, %86 : vector<8x16xf32>
    %88 = arith.maximumf %79, %87 : vector<8x16xf32>
    %c2_56 = arith.constant 2 : index
    %c0_57 = arith.constant 0 : index
    %c0_58 = arith.constant 0 : index
    %89 = vector.load %arg5[%c2_56, %c0_57, %c0_58] : memref<4x8x16xf32, #tpu.memory_space<vmem>>, vector<1x8x16xf32>
    %90 = vector.shape_cast %89 : vector<1x8x16xf32> to vector<8x16xf32>
    %91 = vector.broadcast %68 : vector<1x16xf32> to vector<8x16xf32>
    %92 = arith.mulf %90, %91 : vector<8x16xf32>
    %93 = vector.broadcast %71 : vector<1x16xf32> to vector<8x16xf32>
    %94 = arith.addf %92, %93 : vector<8x16xf32>
    %cst_59 = arith.constant 0.000000e+00 : f32
    %95 = vector.broadcast %cst_59 : f32 to vector<8x16xf32>
    %96 = arith.maximumf %94, %95 : vector<8x16xf32>
    %97 = arith.maximumf %88, %96 : vector<8x16xf32>
    %c3_60 = arith.constant 3 : index
    %c0_61 = arith.constant 0 : index
    %c0_62 = arith.constant 0 : index
    %98 = vector.load %arg5[%c3_60, %c0_61, %c0_62] : memref<4x8x16xf32, #tpu.memory_space<vmem>>, vector<1x8x16xf32>
    %99 = vector.shape_cast %98 : vector<1x8x16xf32> to vector<8x16xf32>
    %100 = vector.broadcast %68 : vector<1x16xf32> to vector<8x16xf32>
    %101 = arith.mulf %99, %100 : vector<8x16xf32>
    %102 = vector.broadcast %71 : vector<1x16xf32> to vector<8x16xf32>
    %103 = arith.addf %101, %102 : vector<8x16xf32>
    %cst_63 = arith.constant 0.000000e+00 : f32
    %104 = vector.broadcast %cst_63 : f32 to vector<8x16xf32>
    %105 = arith.maximumf %103, %104 : vector<8x16xf32>
    %106 = arith.maximumf %97, %105 : vector<8x16xf32>
    %c0_64 = arith.constant 0 : index
    %c0_65 = arith.constant 0 : index
    %107 = vector.load %arg4[%c0_64, %c0_65] : memref<8x16xf32, #tpu.memory_space<vmem>>, vector<8x16xf32>
    tpu.vector_store %arg4[%c0_64, %c0_65], %106 {strides = array<i32>} : memref<8x16xf32, #tpu.memory_space<vmem>>, vector<8x16xf32>,
    return
  }
}

module attributes {stable_mosaic.version = 11 : i64} {
  func.func @linear_ce_kernel(%arg0: memref<2x128xbf16, #tpu.memory_space<vmem>>, %arg1: memref<128x10xbf16, #tpu.memory_space<vmem>>, %arg2: memref<1x10xf32, #tpu.memory_space<vmem>>, %arg3: memref<2x1xi32, #tpu.memory_space<vmem>>, %arg4: memref<2x10xf32, #tpu.memory_space<vmem>>, %arg5: memref<1x1xf32, #tpu.memory_space<vmem>>) attributes {dimension_semantics = [], scalar_prefetch = 0 : i64, scratch_operands = 0 : i64, tpu.core_type = #tpu.core_type<tc>} {
    %c0 = arith.constant 0 : index
    %c0_0 = arith.constant 0 : index
    %0 = vector.load %arg0[%c0, %c0_0] : memref<2x128xbf16, #tpu.memory_space<vmem>>, vector<2x128xbf16>
    %c0_1 = arith.constant 0 : index
    %c0_2 = arith.constant 0 : index
    %1 = vector.load %arg1[%c0_1, %c0_2] : memref<128x10xbf16, #tpu.memory_space<vmem>>, vector<128x10xbf16>
    %cst = arith.constant dense<0.000000e+00> : vector<2x10xf32>
    %2 = tpu.matmul %0, %1, %cst {dimension_numbers = #tpu.dot_dimension_numbers<[1], [0], [0], [1], [0, 0, 1, 1], [], []>} : vector<2x128xbf16>, vector<128x10xbf16>, vector<2x10xf32> -> vector<2x10xf32>
    %c0_3 = arith.constant 0 : index
    %c0_4 = arith.constant 0 : index
    %3 = vector.load %arg2[%c0_3, %c0_4] : memref<1x10xf32, #tpu.memory_space<vmem>>, vector<1x10xf32>
    %4 = vector.broadcast %3 : vector<1x10xf32> to vector<2x10xf32>
    %5 = arith.addf %2, %4 : vector<2x10xf32>
    %c0_5 = arith.constant 0 : index
    %c0_6 = arith.constant 0 : index
    %6 = vector.load %arg4[%c0_5, %c0_6] : memref<2x10xf32, #tpu.memory_space<vmem>>, vector<2x10xf32>
    tpu.vector_store %arg4[%c0_5, %c0_6], %5 {strides = array<i32>} : memref<2x10xf32, #tpu.memory_space<vmem>>, vector<2x10xf32>,
    %cst_7 = arith.constant dense<0xFF800000> : vector<2xf32>
    %7 = vector.multi_reduction <maximumf>, %5, %cst_7 [1] : vector<2x10xf32> to vector<2xf32>
    %8 = vector.shape_cast %7 : vector<2xf32> to vector<2x1xf32>
    %9 = vector.broadcast %8 : vector<2x1xf32> to vector<2x10xf32>
    %10 = arith.subf %5, %9 : vector<2x10xf32>
    %11 = math.exp %10 : vector<2x10xf32>
    %cst_8 = arith.constant dense<0.000000e+00> : vector<2xf32>
    %12 = vector.multi_reduction <add>, %11, %cst_8 [1] : vector<2x10xf32> to vector<2xf32>
    %13 = vector.shape_cast %12 : vector<2xf32> to vector<2x1xf32>
    %14 = math.log %13 : vector<2x1xf32>
    %15 = arith.addf %8, %14 : vector<2x1xf32>
    %16 = tpu.iota {dimensions = array<i32: 1>} : vector<2x10xi32>
    %c0_9 = arith.constant 0 : index
    %c0_10 = arith.constant 0 : index
    %17 = vector.load %arg3[%c0_9, %c0_10] : memref<2x1xi32, #tpu.memory_space<vmem>>, vector<2x1xi32>
    %18 = vector.broadcast %17 : vector<2x1xi32> to vector<2x10xi32>
    %19 = arith.cmpi eq, %16, %18 : vector<2x10xi32>
    %20 = arith.extui %19 : vector<2x10xi1> to vector<2x10xi32>
    %21 = arith.sitofp %20 : vector<2x10xi32> to vector<2x10xf32>
    %22 = arith.mulf %5, %21 : vector<2x10xf32>
    %cst_11 = arith.constant dense<0.000000e+00> : vector<2xf32>
    %23 = vector.multi_reduction <add>, %22, %cst_11 [1] : vector<2x10xf32> to vector<2xf32>
    %24 = vector.shape_cast %23 : vector<2xf32> to vector<2x1xf32>
    %25 = arith.subf %15, %24 : vector<2x1xf32>
    %cst_12 = arith.constant dense<0.000000e+00> : vector<1xf32>
    %26 = vector.multi_reduction <add>, %25, %cst_12 [0] : vector<2x1xf32> to vector<1xf32>
    %27 = vector.shape_cast %26 : vector<1xf32> to vector<1x1xf32>
    %cst_13 = arith.constant 5.000000e-01 : f32
    %28 = vector.broadcast %cst_13 : f32 to vector<1x1xf32>
    %29 = arith.mulf %27, %28 : vector<1x1xf32>
    %c0_14 = arith.constant 0 : index
    %c0_15 = arith.constant 0 : index
    %30 = vector.load %arg5[%c0_14, %c0_15] : memref<1x1xf32, #tpu.memory_space<vmem>>, vector<1x1xf32>
    tpu.vector_store %arg5[%c0_14, %c0_15], %29 {strides = array<i32>} : memref<1x1xf32, #tpu.memory_space<vmem>>, vector<1x1xf32>,
    return
  }
}

module attributes {stable_mosaic.version = 11 : i64} {
  func.func @conv_bn_relu_pool_kernel(%arg0: memref<1x8x144xbf16, #tpu.memory_space<vmem>>, %arg1: memref<144x32xbf16, #tpu.memory_space<vmem>>, %arg2: memref<1x32xf32, #tpu.memory_space<vmem>>, %arg3: memref<1x32xf32, #tpu.memory_space<vmem>>, %arg4: memref<8x32xf32, #tpu.memory_space<vmem>>, %arg5: memref<1x8x32xf32, #tpu.memory_space<vmem>>) attributes {dimension_semantics = [], scalar_prefetch = 0 : i64, scratch_operands = 1 : i64, tpu.core_type = #tpu.core_type<tc>} {
    %cst = arith.constant 0.000000e+00 : f32
    %0 = vector.broadcast %cst : f32 to vector<1x32xf32>
    %cst_0 = arith.constant 0.000000e+00 : f32
    %1 = vector.broadcast %cst_0 : f32 to vector<1x32xf32>
    %c0 = arith.constant 0 : index
    %c0_1 = arith.constant 0 : index
    %c0_2 = arith.constant 0 : index
    %2 = vector.load %arg0[%c0, %c0_1, %c0_2] : memref<1x8x144xbf16, #tpu.memory_space<vmem>>, vector<1x8x144xbf16>
    %3 = vector.shape_cast %2 : vector<1x8x144xbf16> to vector<8x144xbf16>
    %c0_3 = arith.constant 0 : index
    %c0_4 = arith.constant 0 : index
    %4 = vector.load %arg1[%c0_3, %c0_4] : memref<144x32xbf16, #tpu.memory_space<vmem>>, vector<144x32xbf16>
    %cst_5 = arith.constant dense<0.000000e+00> : vector<8x32xf32>
    %5 = tpu.matmul %3, %4, %cst_5 {dimension_numbers = #tpu.dot_dimension_numbers<[1], [0], [0], [1], [0, 0, 1, 1], [], []>} : vector<8x144xbf16>, vector<144x32xbf16>, vector<8x32xf32> -> vector<8x32xf32>
    %c0_6 = arith.constant 0 : index
    %c0_7 = arith.constant 0 : index
    %c0_8 = arith.constant 0 : index
    %6 = vector.load %arg5[%c0_6, %c0_7, %c0_8] : memref<1x8x32xf32, #tpu.memory_space<vmem>>, vector<1x8x32xf32>
    %7 = vector.shape_cast %6 : vector<1x8x32xf32> to vector<8x32xf32>
    %8 = vector.shape_cast %5 : vector<8x32xf32> to vector<1x8x32xf32>
    tpu.vector_store %arg5[%c0_6, %c0_7, %c0_8], %8 {strides = array<i32>} : memref<1x8x32xf32, #tpu.memory_space<vmem>>, vector<1x8x32xf32>,
    %cst_9 = arith.constant dense<0.000000e+00> : vector<32xf32>
    %9 = vector.multi_reduction <add>, %5, %cst_9 [0] : vector<8x32xf32> to vector<32xf32>
    %10 = vector.shape_cast %9 : vector<32xf32> to vector<1x32xf32>
    %11 = arith.addf %0, %10 : vector<1x32xf32>
    %12 = arith.mulf %5, %5 : vector<8x32xf32>
    %cst_10 = arith.constant dense<0.000000e+00> : vector<32xf32>
    %13 = vector.multi_reduction <add>, %12, %cst_10 [0] : vector<8x32xf32> to vector<32xf32>
    %14 = vector.shape_cast %13 : vector<32xf32> to vector<1x32xf32>
    %15 = arith.addf %1, %14 : vector<1x32xf32>
    %cst_11 = arith.constant 1.250000e-01 : f32
    %16 = vector.broadcast %cst_11 : f32 to vector<1x32xf32>
    %17 = arith.mulf %11, %16 : vector<1x32xf32>
    %cst_12 = arith.constant 1.250000e-01 : f32
    %18 = vector.broadcast %cst_12 : f32 to vector<1x32xf32>
    %19 = arith.mulf %15, %18 : vector<1x32xf32>
    %20 = arith.mulf %17, %17 : vector<1x32xf32>
    %21 = arith.subf %19, %20 : vector<1x32xf32>
    %c0_13 = arith.constant 0 : index
    %c0_14 = arith.constant 0 : index
    %22 = vector.load %arg2[%c0_13, %c0_14] : memref<1x32xf32, #tpu.memory_space<vmem>>, vector<1x32xf32>
    %cst_15 = arith.constant 9.99999974E-6 : f32
    %23 = vector.broadcast %cst_15 : f32 to vector<1x32xf32>
    %24 = arith.addf %21, %23 : vector<1x32xf32>
    %25 = math.rsqrt %24 : vector<1x32xf32>
    %26 = arith.mulf %22, %25 : vector<1x32xf32>
    %c0_16 = arith.constant 0 : index
    %c0_17 = arith.constant 0 : index
    %27 = vector.load %arg3[%c0_16, %c0_17] : memref<1x32xf32, #tpu.memory_space<vmem>>, vector<1x32xf32>
    %28 = arith.mulf %17, %26 : vector<1x32xf32>
    %29 = arith.subf %27, %28 : vector<1x32xf32>
    %c0_18 = arith.constant 0 : index
    %c0_19 = arith.constant 0 : index
    %c0_20 = arith.constant 0 : index
    %30 = vector.load %arg5[%c0_18, %c0_19, %c0_20] : memref<1x8x32xf32, #tpu.memory_space<vmem>>, vector<1x8x32xf32>
    %31 = vector.shape_cast %30 : vector<1x8x32xf32> to vector<8x32xf32>
    %32 = vector.broadcast %26 : vector<1x32xf32> to vector<8x32xf32>
    %33 = arith.mulf %31, %32 : vector<8x32xf32>
    %34 = vector.broadcast %29 : vector<1x32xf32> to vector<8x32xf32>
    %35 = arith.addf %33, %34 : vector<8x32xf32>
    %cst_21 = arith.constant 0.000000e+00 : f32
    %36 = vector.broadcast %cst_21 : f32 to vector<8x32xf32>
    %37 = arith.maximumf %35, %36 : vector<8x32xf32>
    %c0_22 = arith.constant 0 : index
    %c0_23 = arith.constant 0 : index
    %38 = vector.load %arg4[%c0_22, %c0_23] : memref<8x32xf32, #tpu.memory_space<vmem>>, vector<8x32xf32>
    tpu.vector_store %arg4[%c0_22, %c0_23], %37 {strides = array<i32>} : memref<8x32xf32, #tpu.memory_space<vmem>>, vector<8x32xf32>,
    return
  }
}

</mosaic_0001>

<llo_original>
// kernel: classifier_forward.5
$region0: #{classifier_forward.5}
  #allocation0 [shape = 'u32[]', space=smem, size = 0x4, offset = 0x4, fixed_abs, tag = 'smem constant byte address 0x4 - core index']
  #allocation1 [shape = 'u32[144,128]{1,0:T(1,128)}', space=vmem, size = 0x12000, scoped, tag = 'internal scratch']
  #allocation2 [shape = 'f32[4,128,8]{2,1,0:T(8,128)}', space=vmem, size = 0x40000, scoped, tag = 'scratch operand']
  %s0 = inlined_call_operand.vmem [shape: bf16[4,128,36], index: 0, kind: input, shape index: {}]
  %s1 = inlined_call_operand.vmem [shape: bf16[36,8], index: 1, kind: input, shape index: {}]
  %s2 = inlined_call_operand.vmem [shape: f32[1,8], index: 2, kind: input, shape index: {}]
  %s3 = inlined_call_operand.vmem [shape: f32[1,8], index: 3, kind: input, shape index: {}]
  %s4 = inlined_call_operand.vmem [shape: f32[128,8], index: 4, kind: output, shape index: {}]
  %s5 = sld [smem:[#allocation0]]
  $region26: #{classifier_forward.5} parent=0
    _
  %s7 = ssub.s32 1, %s5
  %s8 = scalar_select 0, %s7, %s5
  // Predicated region
  $region2: #{classifier_forward.5} parent=0 // pred_check
    _
  $region3: #{classifier_forward.5} parent=0 // pred_check_branch
    %10 = sbr.rel (0) target = $region5
  $region4: #{classifier_forward.5} parent=0 // pred_region
    _
  $region5: #{classifier_forward.5} parent=0 // pred_fallthru
    _
  // Predicated region
  $region6: #{classifier_forward.5} parent=0 // pred_check
    _
  $region7: #{classifier_forward.5} parent=0 // pred_check_branch
    %12 = sbr.rel (0) target = $region9
  $region8: #{classifier_forward.5} parent=0 // pred_region
    _
  $region9: #{classifier_forward.5} parent=0 // pred_fallthru
    _
  // Predicated region
  $region10: #{classifier_forward.5} parent=0 // pred_check
    _
  $region11: #{classifier_forward.5} parent=0 // pred_check_branch
    %14 = sbr.rel (0) target = $region13
  $region12: #{classifier_forward.5} parent=0 // pred_region
    _
  $region13: #{classifier_forward.5} parent=0 // pred_fallthru
    _
  // Predicated region
  $region14: #{classifier_forward.5} parent=0 // pred_check
    _
  $region15: #{classifier_forward.5} parent=0 // pred_check_branch
    %16 = sbr.rel (0) target = $region17
  $region16: #{classifier_forward.5} parent=0 // pred_region
    _
  $region17: #{classifier_forward.5} parent=0 // pred_fallthru
    _
  %v18 = vld [vmem:[%s0] sm:$0xf]
  %v19 = vld [vmem:[%s0 + $0x4] sm:$0xf]
  %v20 = vld [vmem:[%s0 + $0x8] sm:$0xf]
  %v21 = vld [vmem:[%s0 + $0xc] sm:$0xf]
  %v22 = vld [vmem:[%s0 + $0x10] sm:$0xf]
  %v23 = vld [vmem:[%s0 + $0x14] sm:$0xf]
  %v24 = vld [vmem:[%s0 + $0x18] sm:$0xf]
  %v25 = vld [vmem:[%s0 + $0x1c] sm:$0xf]
  %v26 = vld [vmem:[%s0 + $0x20] sm:$0xf]
  %v27 = vld [vmem:[%s0 + $0x24] sm:$0xf]
  %v28 = vld [vmem:[%s0 + $0x28] sm:$0xf]
  %v29 = vld [vmem:[%s0 + $0x2c] sm:$0xf]
  %v30 = vld [vmem:[%s0 + $0x30] sm:$0xf]
  %v31 = vld [vmem:[%s0 + $0x34] sm:$0xf]
  %v32 = vld [vmem:[%s0 + $0x38] sm:$0xf]
  %v33 = vld [vmem:[%s0 + $0x3c] sm:$0xf]
  %v34 = vld [vmem:[%s1] sm:$0xf]
  %v35 = vld [vmem:[%s1 + $0x4] sm:$0xf]
  %v36 = vld [vmem:[%s1 + $0x8] sm:$0xf]
  %v37 = vld [vmem:[%s1 + $0xc] sm:$0xf]
  %v38 = vld [vmem:[%s1 + $0x10] sm:$0x3]
  %v55 = vunpack.c.l.b16 %v18
  %v56 = vunpack.c.l.b16 %v19
  %v57 = vunpack.c.l.b16 %v20
  %v58 = vunpack.c.l.b16 %v21
  %v59 = vunpack.c.l.b16 %v22
  %v60 = vunpack.c.l.b16 %v23
  %v61 = vunpack.c.l.b16 %v24
  %v62 = vunpack.c.l.b16 %v25
  %v63 = vunpack.c.l.b16 %v26
  %v64 = vunpack.c.l.b16 %v27
  %v65 = vunpack.c.l.b16 %v28
  %v66 = vunpack.c.l.b16 %v29
  %v67 = vunpack.c.l.b16 %v30
  %v68 = vunpack.c.l.b16 %v31
  %v69 = vunpack.c.l.b16 %v32
  %v70 = vunpack.c.l.b16 %v33
  %v71 = vpack.c.b16 %v56, %v55
  %v72 = vpack.c.b16 %v58, %v57
  %v73 = vpack.c.b16 %v60, %v59
  %v74 = vpack.c.b16 %v62, %v61
  %v75 = vpack.c.b16 %v64, %v63
  %v76 = vpack.c.b16 %v66, %v65
  %v77 = vpack.c.b16 %v68, %v67
  %v78 = vpack.c.b16 %v70, %v69
  %v84 = vunpack.c.l.b16 %v34
  %v85 = vunpack.c.l.b16 %v35
  %v86 = vunpack.c.l.b16 %v36
  %v87 = vunpack.c.l.b16 %v37
  %v88 = vunpack.c.l.b16 %v38
  %v89 = vpack.c.b16 %v85, %v84
  %v90 = vpack.c.b16 %v87, %v86
  %v91 = vpack.c.b16 %v88, %v88
  %vm94 = vcmask 293888
  %v96 = vsel %vm94, %v71, 0
  %v99 = vsel %vm94, %v72, 0
  %v102 = vsel %vm94, %v73, 0
  %v105 = vsel %vm94, %v74, 0
  %v108 = vsel %vm94, %v75, 0
  %v111 = vsel %vm94, %v76, 0
  %v114 = vsel %vm94, %v77, 0
  %v117 = vsel %vm94, %v78, 0
  %vm119 = vcmask 1041408
  %v121 = vsel %vm119, %v91, 0
  %123 = vmatprep.subr.bf16.mxu0 0
  %124 = vmatpush1.bf16.msra.mxu0 0
  %125 = vmatprep.subr.bf16.mxu0 0
  %126 = vmatpush1.bf16.msra.mxu0 0
  %127 = vmatprep.subr.bf16.mxu0 0
  %128 = vmatpush1.bf16.msra.mxu0 0
  %129 = vmatprep.subr.bf16.mxu0 0
  %130 = vmatpush1.bf16.msra.mxu0 0
  %131 = vmatprep.subr.bf16.mxu0 0
  %132 = vmatpush1.bf16.msra.mxu0 0
  %133 = vmatprep.subr.bf16.mxu0 0
  %134 = vmatpush1.bf16.msra.mxu0 %v121
  %135 = vmatprep.subr.bf16.mxu0 0
  %136 = vmatpush1.bf16.msra.mxu0 %v90
  %137 = vmatprep.subr.bf16.mxu0 0
  %138 = vmatpush1.bf16.msra.mxu0 %v89
  %139 = vmatprep.subr.bf16.mxu0 0
  %140 = vmatpush2.bf16.msra.mxu0 0
  %141 = vmatprep.subr.bf16.mxu0 0
  %142 = vmatpush2.bf16.msra.mxu0 0
  %143 = vmatprep.subr.bf16.mxu0 0
  %144 = vmatpush2.bf16.msra.mxu0 0
  %145 = vmatprep.subr.bf16.mxu0 0
  %146 = vmatpush2.bf16.msra.mxu0 0
  %147 = vmatprep.subr.bf16.mxu0 0
  %148 = vmatpush2.bf16.msra.mxu0 0
  %149 = vmatprep.subr.bf16.mxu0 0
  %150 = vmatpush2.bf16.msra.mxu0 0
  %151 = vmatprep.subr.bf16.mxu0 0
  %152 = vmatpush2.bf16.msra.mxu0 0
  %153 = vmatprep.subr.bf16.mxu0 0
  %154 = vmatpush2.bf16.msra.mxu0 0
  %155 = vmatprep.mubr.bf16.mxu0 0
  %156 = vmatmul.mubr.bf16.gmra.mxu0 %v96
  %v157 = vpop.f32.mrf.mxu0
  %v158 = vadd.f32 0.0, %v157
  %v159 = vpop.f32.mrf.mxu0
  %v160 = vpop.f32.mrf.mxu0
  %v161 = vadd.f32 0.0, %v160
  %v162 = vpop.f32.mrf.mxu0
  %163 = vmatprep.mubr.bf16.mxu0 0
  %164 = vmatmul.mubr.bf16.gmra.mxu0 %v99
  %v165 = vpop.f32.mrf.mxu0
  %v166 = vadd.f32 0.0, %v165
  %v167 = vpop.f32.mrf.mxu0
  %v168 = vpop.f32.mrf.mxu0
  %v169 = vadd.f32 0.0, %v168
  %v170 = vpop.f32.mrf.mxu0
  %171 = vmatprep.mubr.bf16.mxu0 0
  %172 = vmatmul.mubr.bf16.gmra.mxu0 %v102
  %v173 = vpop.f32.mrf.mxu0
  %v174 = vadd.f32 0.0, %v173
  %v175 = vpop.f32.mrf.mxu0
  %v176 = vpop.f32.mrf.mxu0
  %v177 = vadd.f32 0.0, %v176
  %v178 = vpop.f32.mrf.mxu0
  %179 = vmatprep.mubr.bf16.mxu0 0
  %180 = vmatmul.mubr.bf16.gmra.mxu0 %v105
  %v181 = vpop.f32.mrf.mxu0
  %v182 = vadd.f32 0.0, %v181
  %v183 = vpop.f32.mrf.mxu0
  %v184 = vpop.f32.mrf.mxu0
  %v185 = vadd.f32 0.0, %v184
  %v186 = vpop.f32.mrf.mxu0
  %187 = vmatprep.mubr.bf16.mxu0 0
  %188 = vmatmul.mubr.bf16.gmra.mxu0 %v108
  %v189 = vpop.f32.mrf.mxu0
  %v190 = vadd.f32 0.0, %v189
  %v191 = vpop.f32.mrf.mxu0
  %v192 = vpop.f32.mrf.mxu0
  %v193 = vadd.f32 0.0, %v192
  %v194 = vpop.f32.mrf.mxu0
  %195 = vmatprep.mubr.bf16.mxu0 0
  %196 = vmatmul.mubr.bf16.gmra.mxu0 %v111
  %v197 = vpop.f32.mrf.mxu0
  %v198 = vadd.f32 0.0, %v197
  %v199 = vpop.f32.mrf.mxu0
  %v200 = vpop.f32.mrf.mxu0
  %v201 = vadd.f32 0.0, %v200
  %v202 = vpop.f32.mrf.mxu0
  %203 = vmatprep.mubr.bf16.mxu0 0
  %204 = vmatmul.mubr.bf16.gmra.mxu0 %v114
  %v205 = vpop.f32.mrf.mxu0
  %v206 = vadd.f32 0.0, %v205
  %v207 = vpop.f32.mrf.mxu0
  %v208 = vpop.f32.mrf.mxu0
  %v209 = vadd.f32 0.0, %v208
  %v210 = vpop.f32.mrf.mxu0
  %211 = vmatprep.mubr.bf16.mxu0 0
  %212 = vmatmul.mubr.bf16.gmra.mxu0 %v117
  %v213 = vpop.f32.mrf.mxu0
  %v214 = vadd.f32 0.0, %v213
  %v215 = vpop.f32.mrf.mxu0
  %v216 = vpop.f32.mrf.mxu0
  %v217 = vadd.f32 0.0, %v216
  %v218 = vpop.f32.mrf.mxu0
  %219 = vdwg.mxu0
  %vm220 = vcmask 64512
  %221 = vst.msk [vmem:[#allocation2] sm:$0xff] %vm220, %v158
  %222 = vst.msk [vmem:[#allocation2 + $0x8] sm:$0xff] %vm220, %v161
  %223 = vst.msk [vmem:[#allocation2 + $0x10] sm:$0xff] %vm220, %v166
  %224 = vst.msk [vmem:[#allocation2 + $0x18] sm:$0xff] %vm220, %v169
  %225 = vst.msk [vmem:[#allocation2 + $0x20] sm:$0xff] %vm220, %v174
  %226 = vst.msk [vmem:[#allocation2 + $0x28] sm:$0xff] %vm220, %v177
  %227 = vst.msk [vmem:[#allocation2 + $0x30] sm:$0xff] %vm220, %v182
  %228 = vst.msk [vmem:[#allocation2 + $0x38] sm:$0xff] %vm220, %v185
  %229 = vst.msk [vmem:[#allocation2 + $0x40] sm:$0xff] %vm220, %v190
  %230 = vst.msk [vmem:[#allocation2 + $0x48] sm:$0xff] %vm220, %v193
  %231 = vst.msk [vmem:[#allocation2 + $0x50] sm:$0xff] %vm220, %v198
  %232 = vst.msk [vmem:[#allocation2 + $0x58] sm:$0xff] %vm220, %v201
  %233 = vst.msk [vmem:[#allocation2 + $0x60] sm:$0xff] %vm220, %v206
  %234 = vst.msk [vmem:[#allocation2 + $0x68] sm:$0xff] %vm220, %v209
  %235 = vst.msk [vmem:[#allocation2 + $0x70] sm:$0xff] %vm220, %v214
  %236 = vst.msk [vmem:[#allocation2 + $0x78] sm:$0xff] %vm220, %v217
  %v237 = vsel %vm220, %v158, 0.0
  %v238 = vsel %vm220, %v161, 0.0
  %v239 = vadd.f32 %v237, %v238
  %v240 = vsel %vm220, %v166, 0.0
  %v241 = vadd.f32 %v239, %v240
  %v242 = vsel %vm220, %v169, 0.0
  %v243 = vadd.f32 %v241, %v242
  %v244 = vsel %vm220, %v174, 0.0
  %v245 = vadd.f32 %v243, %v244
  %v246 = vsel %vm220, %v177, 0.0
  %v247 = vadd.f32 %v245, %v246
  %v248 = vsel %vm220, %v182, 0.0
  %v249 = vadd.f32 %v247, %v248
  %v250 = vsel %vm220, %v185, 0.0
  %v251 = vadd.f32 %v249, %v250
  %v252 = vsel %vm220, %v190, 0.0
  %v253 = vadd.f32 %v251, %v252
  %v254 = vsel %vm220, %v193, 0.0
  %v255 = vadd.f32 %v253, %v254
  %v256 = vsel %vm220, %v198, 0.0
  %v257 = vadd.f32 %v255, %v256
  %v258 = vsel %vm220, %v201, 0.0
  %v259 = vadd.f32 %v257, %v258
  %v260 = vsel %vm220, %v206, 0.0
  %v261 = vadd.f32 %v259, %v260
  %v262 = vsel %vm220, %v209, 0.0
  %v263 = vadd.f32 %v261, %v262
  %v264 = vsel %vm220, %v214, 0.0
  %v265 = vadd.f32 %v263, %v264
  %v266 = vsel %vm220, %v217, 0.0
  %v267 = vadd.f32 %v265, %v266
  %v268 = vrot.slane %v267, 4
  %v269 = vadd.f32 %v267, %v268
  %v270 = vrot.slane %v269, 2
  %v271 = vadd.f32 %v269, %v270
  %v272 = vrot.slane %v271, 1
  %v273 = vadd.f32 %v271, %v272
  %v274 = vadd.f32 %v273, 0.0
  %v275 = vmul.f32 %v158, %v158
  %v276 = vmul.f32 %v161, %v161
  %v277 = vmul.f32 %v166, %v166
  %v278 = vmul.f32 %v169, %v169
  %v279 = vmul.f32 %v174, %v174
  %v280 = vmul.f32 %v177, %v177
  %v281 = vmul.f32 %v182, %v182
  %v282 = vmul.f32 %v185, %v185
  %v283 = vmul.f32 %v190, %v190
  %v284 = vmul.f32 %v193, %v193
  %v285 = vmul.f32 %v198, %v198
  %v286 = vmul.f32 %v201, %v201
  %v287 = vmul.f32 %v206, %v206
  %v288 = vmul.f32 %v209, %v209
  %v289 = vmul.f32 %v214, %v214
  %v290 = vmul.f32 %v217, %v217
  %v291 = vsel %vm220, %v275, 0.0
  %v292 = vsel %vm220, %v276, 0.0
  %v293 = vadd.f32 %v291, %v292
  %v294 = vsel %vm220, %v277, 0.0
  %v295 = vadd.f32 %v293, %v294
  %v296 = vsel %vm220, %v278, 0.0
  %v297 = vadd.f32 %v295, %v296
  %v298 = vsel %vm220, %v279, 0.0
  %v299 = vadd.f32 %v297, %v298
  %v300 = vsel %vm220, %v280, 0.0
  %v301 = vadd.f32 %v299, %v300
  %v302 = vsel %vm220, %v281, 0.0
  %v303 = vadd.f32 %v301, %v302
  %v304 = vsel %vm220, %v282, 0.0
  %v305 = vadd.f32 %v303, %v304
  %v306 = vsel %vm220, %v283, 0.0
  %v307 = vadd.f32 %v305, %v306
  %v308 = vsel %vm220, %v284, 0.0
  %v309 = vadd.f32 %v307, %v308
  %v310 = vsel %vm220, %v285, 0.0
  %v311 = vadd.f32 %v309, %v310
  %v312 = vsel %vm220, %v286, 0.0
  %v313 = vadd.f32 %v311, %v312
  %v314 = vsel %vm220, %v287, 0.0
  %v315 = vadd.f32 %v313, %v314
  %v316 = vsel %vm220, %v288, 0.0
  %v317 = vadd.f32 %v315, %v316
  %v318 = vsel %vm220, %v289, 0.0
  %v319 = vadd.f32 %v317, %v318
  %v320 = vsel %vm220, %v290, 0.0
  %v321 = vadd.f32 %v319, %v320
  %v322 = vrot.slane %v321, 4
  %v323 = vadd.f32 %v321, %v322
  %v324 = vrot.slane %v323, 2
  %v325 = vadd.f32 %v323, %v324
  %v326 = vrot.slane %v325, 1
  %v327 = vadd.f32 %v325, %v326
  %v328 = vadd.f32 %v327, 0.0
  %s329 = scalar_lea.vmem %s0, 64
  %v330 = vld [vmem:[%s329] sm:$0xf]
  %v331 = vld [vmem:[%s329 + $0x4] sm:$0xf]
  %v332 = vld [vmem:[%s329 + $0x8] sm:$0xf]
  %v333 = vld [vmem:[%s329 + $0xc] sm:$0xf]
  %v334 = vld [vmem:[%s329 + $0x10] sm:$0xf]
  %v335 = vld [vmem:[%s329 + $0x14] sm:$0xf]
  %v336 = vld [vmem:[%s329 + $0x18] sm:$0xf]
  %v337 = vld [vmem:[%s329 + $0x1c] sm:$0xf]
  %v338 = vld [vmem:[%s329 + $0x20] sm:$0xf]
  %v339 = vld [vmem:[%s329 + $0x24] sm:$0xf]
  %v340 = vld [vmem:[%s329 + $0x28] sm:$0xf]
  %v341 = vld [vmem:[%s329 + $0x2c] sm:$0xf]
  %v342 = vld [vmem:[%s329 + $0x30] sm:$0xf]
  %v343 = vld [vmem:[%s329 + $0x34] sm:$0xf]
  %v344 = vld [vmem:[%s329 + $0x38] sm:$0xf]
  %v345 = vld [vmem:[%s329 + $0x3c] sm:$0xf]
  %v346 = vld [vmem:[%s1] sm:$0xf]
  %v347 = vld [vmem:[%s1 + $0x4] sm:$0xf]
  %v348 = vld [vmem:[%s1 + $0x8] sm:$0xf]
  %v349 = vld [vmem:[%s1 + $0xc] sm:$0xf]
  %v350 = vld [vmem:[%s1 + $0x10] sm:$0x3]
  %v367 = vunpack.c.l.b16 %v330
  %v368 = vunpack.c.l.b16 %v331
  %v369 = vunpack.c.l.b16 %v332
  %v370 = vunpack.c.l.b16 %v333
  %v371 = vunpack.c.l.b16 %v334
  %v372 = vunpack.c.l.b16 %v335
  %v373 = vunpack.c.l.b16 %v336
  %v374 = vunpack.c.l.b16 %v337
  %v375 = vunpack.c.l.b16 %v338
  %v376 = vunpack.c.l.b16 %v339
  %v377 = vunpack.c.l.b16 %v340
  %v378 = vunpack.c.l.b16 %v341
  %v379 = vunpack.c.l.b16 %v342
  %v380 = vunpack.c.l.b16 %v343
  %v381 = vunpack.c.l.b16 %v344
  %v382 = vunpack.c.l.b16 %v345
  %v383 = vpack.c.b16 %v368, %v367
  %v384 = vpack.c.b16 %v370, %v369
  %v385 = vpack.c.b16 %v372, %v371
  %v386 = vpack.c.b16 %v374, %v373
  %v387 = vpack.c.b16 %v376, %v375
  %v388 = vpack.c.b16 %v378, %v377
  %v389 = vpack.c.b16 %v380, %v379
  %v390 = vpack.c.b16 %v382, %v381
  %v396 = vunpack.c.l.b16 %v346
  %v397 = vunpack.c.l.b16 %v347
  %v398 = vunpack.c.l.b16 %v348
  %v399 = vunpack.c.l.b16 %v349
  %v400 = vunpack.c.l.b16 %v350
  %v401 = vpack.c.b16 %v397, %v396
  %v402 = vpack.c.b16 %v399, %v398
  %v403 = vpack.c.b16 %v400, %v400
  %v407 = vsel %vm94, %v383, 0
  %v410 = vsel %vm94, %v384, 0
  %v413 = vsel %vm94, %v385, 0
  %v416 = vsel %vm94, %v386, 0
  %v419 = vsel %vm94, %v387, 0
  %v422 = vsel %vm94, %v388, 0
  %v425 = vsel %vm94, %v389, 0
  %v428 = vsel %vm94, %v390, 0
  %v431 = vsel %vm119, %v403, 0
  %433 = vmatprep.subr.bf16.mxu0 0
  %434 = vmatpush1.bf16.msra.mxu0 0
  %435 = vmatprep.subr.bf16.mxu0 0
  %436 = vmatpush1.bf16.msra.mxu0 0
  %437 = vmatprep.subr.bf16.mxu0 0
  %438 = vmatpush1.bf16.msra.mxu0 0
  %439 = vmatprep.subr.bf16.mxu0 0
  %440 = vmatpush1.bf16.msra.mxu0 0
  %441 = vmatprep.subr.bf16.mxu0 0
  %442 = vmatpush1.bf16.msra.mxu0 0
  %443 = vmatprep.subr.bf16.mxu0 0
  %444 = vmatpush1.bf16.msra.mxu0 %v431
  %445 = vmatprep.subr.bf16.mxu0 0
  %446 = vmatpush1.bf16.msra.mxu0 %v402
  %447 = vmatprep.subr.bf16.mxu0 0
  %448 = vmatpush1.bf16.msra.mxu0 %v401
  %449 = vmatprep.subr.bf16.mxu0 0
  %450 = vmatpush2.bf16.msra.mxu0 0
  %451 = vmatprep.subr.bf16.mxu0 0
  %452 = vmatpush2.bf16.msra.mxu0 0
  %453 = vmatprep.subr.bf16.mxu0 0
  %454 = vmatpush2.bf16.msra.mxu0 0
  %455 = vmatprep.subr.bf16.mxu0 0
  %456 = vmatpush2.bf16.msra.mxu0 0
  %457 = vmatprep.subr.bf16.mxu0 0
  %458 = vmatpush2.bf16.msra.mxu0 0
  %459 = vmatprep.subr.bf16.mxu0 0
  %460 = vmatpush2.bf16.msra.mxu0 0
  %461 = vmatprep.subr.bf16.mxu0 0
  %462 = vmatpush2.bf16.msra.mxu0 0
  %463 = vmatprep.subr.bf16.mxu0 0
  %464 = vmatpush2.bf16.msra.mxu0 0
  %465 = vmatprep.mubr.bf16.mxu0 0
  %466 = vmatmul.mubr.bf16.gmra.mxu0 %v407
  %v467 = vpop.f32.mrf.mxu0
  %v468 = vadd.f32 0.0, %v467
  %v469 = vpop.f32.mrf.mxu0
  %v470 = vpop.f32.mrf.mxu0
  %v471 = vadd.f32 0.0, %v470
  %v472 = vpop.f32.mrf.mxu0
  %473 = vmatprep.mubr.bf16.mxu0 0
  %474 = vmatmul.mubr.bf16.gmra.mxu0 %v410
  %v475 = vpop.f32.mrf.mxu0
  %v476 = vadd.f32 0.0, %v475
  %v477 = vpop.f32.mrf.mxu0
  %v478 = vpop.f32.mrf.mxu0
  %v479 = vadd.f32 0.0, %v478
  %v480 = vpop.f32.mrf.mxu0
  %481 = vmatprep.mubr.bf16.mxu0 0
  %482 = vmatmul.mubr.bf16.gmra.mxu0 %v413
  %v483 = vpop.f32.mrf.mxu0
  %v484 = vadd.f32 0.0, %v483
  %v485 = vpop.f32.mrf.mxu0
  %v486 = vpop.f32.mrf.mxu0
  %v487 = vadd.f32 0.0, %v486
  %v488 = vpop.f32.mrf.mxu0
  %489 = vmatprep.mubr.bf16.mxu0 0
  %490 = vmatmul.mubr.bf16.gmra.mxu0 %v416
  %v491 = vpop.f32.mrf.mxu0
  %v492 = vadd.f32 0.0, %v491
  %v493 = vpop.f32.mrf.mxu0
  %v494 = vpop.f32.mrf.mxu0
  %v495 = vadd.f32 0.0, %v494
  %v496 = vpop.f32.mrf.mxu0
  %497 = vmatprep.mubr.bf16.mxu0 0
  %498 = vmatmul.mubr.bf16.gmra.mxu0 %v419
  %v499 = vpop.f32.mrf.mxu0
  %v500 = vadd.f32 0.0, %v499
  %v501 = vpop.f32.mrf.mxu0
  %v502 = vpop.f32.mrf.mxu0
  %v503 = vadd.f32 0.0, %v502
  %v504 = vpop.f32.mrf.mxu0
  %505 = vmatprep.mubr.bf16.mxu0 0
  %506 = vmatmul.mubr.bf16.gmra.mxu0 %v422
  %v507 = vpop.f32.mrf.mxu0
  %v508 = vadd.f32 0.0, %v507
  %v509 = vpop.f32.mrf.mxu0
  %v510 = vpop.f32.mrf.mxu0
  %v511 = vadd.f32 0.0, %v510
  %v512 = vpop.f32.mrf.mxu0
  %513 = vmatprep.mubr.bf16.mxu0 0
  %514 = vmatmul.mubr.bf16.gmra.mxu0 %v425
  %v515 = vpop.f32.mrf.mxu0
  %v516 = vadd.f32 0.0, %v515
  %v517 = vpop.f32.mrf.mxu0
  %v518 = vpop.f32.mrf.mxu0
  %v519 = vadd.f32 0.0, %v518
  %v520 = vpop.f32.mrf.mxu0
  %521 = vmatprep.mubr.bf16.mxu0 0
  %522 = vmatmul.mubr.bf16.gmra.mxu0 %v428
  %v523 = vpop.f32.mrf.mxu0
  %v524 = vadd.f32 0.0, %v523
  %v525 = vpop.f32.mrf.mxu0
  %v526 = vpop.f32.mrf.mxu0
  %v527 = vadd.f32 0.0, %v526
  %v528 = vpop.f32.mrf.mxu0
  %529 = vdwg.mxu0
  %s530 = scalar_lea.vmem [#allocation2], 128
  %531 = vst.msk [vmem:[%s530] sm:$0xff] %vm220, %v468
  %532 = vst.msk [vmem:[%s530 + $0x8] sm:$0xff] %vm220, %v471
  %533 = vst.msk [vmem:[%s530 + $0x10] sm:$0xff] %vm220, %v476
  %534 = vst.msk [vmem:[%s530 + $0x18] sm:$0xff] %vm220, %v479
  %535 = vst.msk [vmem:[%s530 + $0x20] sm:$0xff] %vm220, %v484
  %536 = vst.msk [vmem:[%s530 + $0x28] sm:$0xff] %vm220, %v487
  %537 = vst.msk [vmem:[%s530 + $0x30] sm:$0xff] %vm220, %v492
  %538 = vst.msk [vmem:[%s530 + $0x38] sm:$0xff] %vm220, %v495
  %539 = vst.msk [vmem:[%s530 + $0x40] sm:$0xff] %vm220, %v500
  %540 = vst.msk [vmem:[%s530 + $0x48] sm:$0xff] %vm220, %v503
  %541 = vst.msk [vmem:[%s530 + $0x50] sm:$0xff] %vm220, %v508
  %542 = vst.msk [vmem:[%s530 + $0x58] sm:$0xff] %vm220, %v511
  %543 = vst.msk [vmem:[%s530 + $0x60] sm:$0xff] %vm220, %v516
  %544 = vst.msk [vmem:[%s530 + $0x68] sm:$0xff] %vm220, %v519
  %545 = vst.msk [vmem:[%s530 + $0x70] sm:$0xff] %vm220, %v524
  %546 = vst.msk [vmem:[%s530 + $0x78] sm:$0xff] %vm220, %v527
  %v547 = vsel %vm220, %v468, 0.0
  %v548 = vsel %vm220, %v471, 0.0
  %v549 = vadd.f32 %v547, %v548
  %v550 = vsel %vm220, %v476, 0.0
  %v551 = vadd.f32 %v549, %v550
  %v552 = vsel %vm220, %v479, 0.0
  %v553 = vadd.f32 %v551, %v552
  %v554 = vsel %vm220, %v484, 0.0
  %v555 = vadd.f32 %v553, %v554
  %v556 = vsel %vm220, %v487, 0.0
  %v557 = vadd.f32 %v555, %v556
  %v558 = vsel %vm220, %v492, 0.0
  %v559 = vadd.f32 %v557, %v558
  %v560 = vsel %vm220, %v495, 0.0
  %v561 = vadd.f32 %v559, %v560
  %v562 = vsel %vm220, %v500, 0.0
  %v563 = vadd.f32 %v561, %v562
  %v564 = vsel %vm220, %v503, 0.0
  %v565 = vadd.f32 %v563, %v564
  %v566 = vsel %vm220, %v508, 0.0
  %v567 = vadd.f32 %v565, %v566
  %v568 = vsel %vm220, %v511, 0.0
  %v569 = vadd.f32 %v567, %v568
  %v570 = vsel %vm220, %v516, 0.0
  %v571 = vadd.f32 %v569, %v570
  %v572 = vsel %vm220, %v519, 0.0
  %v573 = vadd.f32 %v571, %v572
  %v574 = vsel %vm220, %v524, 0.0
  %v575 = vadd.f32 %v573, %v574
  %v576 = vsel %vm220, %v527, 0.0
  %v577 = vadd.f32 %v575, %v576
  %v578 = vrot.slane %v577, 4
  %v579 = vadd.f32 %v577, %v578
  %v580 = vrot.slane %v579, 2
  %v581 = vadd.f32 %v579, %v580
  %v582 = vrot.slane %v581, 1
  %v583 = vadd.f32 %v581, %v582
  %v584 = vadd.f32 %v274, %v583
  %v585 = vmul.f32 %v468, %v468
  %v586 = vmul.f32 %v471, %v471
  %v587 = vmul.f32 %v476, %v476
  %v588 = vmul.f32 %v479, %v479
  %v589 = vmul.f32 %v484, %v484
  %v590 = vmul.f32 %v487, %v487
  %v591 = vmul.f32 %v492, %v492
  %v592 = vmul.f32 %v495, %v495
  %v593 = vmul.f32 %v500, %v500
  %v594 = vmul.f32 %v503, %v503
  %v595 = vmul.f32 %v508, %v508
  %v596 = vmul.f32 %v511, %v511
  %v597 = vmul.f32 %v516, %v516
  %v598 = vmul.f32 %v519, %v519
  %v599 = vmul.f32 %v524, %v524
  %v600 = vmul.f32 %v527, %v527
  %v601 = vsel %vm220, %v585, 0.0
  %v602 = vsel %vm220, %v586, 0.0
  %v603 = vadd.f32 %v601, %v602
  %v604 = vsel %vm220, %v587, 0.0
  %v605 = vadd.f32 %v603, %v604
  %v606 = vsel %vm220, %v588, 0.0
  %v607 = vadd.f32 %v605, %v606
  %v608 = vsel %vm220, %v589, 0.0
  %v609 = vadd.f32 %v607, %v608
  %v610 = vsel %vm220, %v590, 0.0
  %v611 = vadd.f32 %v609, %v610
  %v612 = vsel %vm220, %v591, 0.0
  %v613 = vadd.f32 %v611, %v612
  %v614 = vsel %vm220, %v592, 0.0
  %v615 = vadd.f32 %v613, %v614
  %v616 = vsel %vm220, %v593, 0.0
  %v617 = vadd.f32 %v615, %v616
  %v618 = vsel %vm220, %v594, 0.0
  %v619 = vadd.f32 %v617, %v618
  %v620 = vsel %vm220, %v595, 0.0
  %v621 = vadd.f32 %v619, %v620
  %v622 = vsel %vm220, %v596, 0.0
  %v623 = vadd.f32 %v621, %v622
  %v624 = vsel %vm220, %v597, 0.0
  %v625 = vadd.f32 %v623, %v624
  %v626 = vsel %vm220, %v598, 0.0
  %v627 = vadd.f32 %v625, %v626
  %v628 = vsel %vm220, %v599, 0.0
  %v629 = vadd.f32 %v627, %v628
  %v630 = vsel %vm220, %v600, 0.0
  %v631 = vadd.f32 %v629, %v630
  %v632 = vrot.slane %v631, 4
  %v633 = vadd.f32 %v631, %v632
  %v634 = vrot.slane %v633, 2
  %v635 = vadd.f32 %v633, %v634
  %v636 = vrot.slane %v635, 1
  %v637 = vadd.f32 %v635, %v636
  %v638 = vadd.f32 %v328, %v637
  %s639 = scalar_lea.vmem %s0, 128
  %v640 = vld [vmem:[%s639] sm:$0xf]
  %v641 = vld [vmem:[%s639 + $0x4] sm:$0xf]
  %v642 = vld [vmem:[%s639 + $0x8] sm:$0xf]
  %v643 = vld [vmem:[%s639 + $0xc] sm:$0xf]
  %v644 = vld [vmem:[%s639 + $0x10] sm:$0xf]
  %v645 = vld [vmem:[%s639 + $0x14] sm:$0xf]
  %v646 = vld [vmem:[%s639 + $0x18] sm:$0xf]
  %v647 = vld [vmem:[%s639 + $0x1c] sm:$0xf]
  %v648 = vld [vmem:[%s639 + $0x20] sm:$0xf]
  %v649 = vld [vmem:[%s639 + $0x24] sm:$0xf]
  %v650 = vld [vmem:[%s639 + $0x28] sm:$0xf]
  %v651 = vld [vmem:[%s639 + $0x2c] sm:$0xf]
  %v652 = vld [vmem:[%s639 + $0x30] sm:$0xf]
  %v653 = vld [vmem:[%s639 + $0x34] sm:$0xf]
  %v654 = vld [vmem:[%s639 + $0x38] sm:$0xf]
  %v655 = vld [vmem:[%s639 + $0x3c] sm:$0xf]
  %v656 = vld [vmem:[%s1] sm:$0xf]
  %v657 = vld [vmem:[%s1 + $0x4] sm:$0xf]
  %v658 = vld [vmem:[%s1 + $0x8] sm:$0xf]
  %v659 = vld [vmem:[%s1 + $0xc] sm:$0xf]
  %v660 = vld [vmem:[%s1 + $0x10] sm:$0x3]
  %v677 = vunpack.c.l.b16 %v640
  %v678 = vunpack.c.l.b16 %v641
  %v679 = vunpack.c.l.b16 %v642
  %v680 = vunpack.c.l.b16 %v643
  %v681 = vunpack.c.l.b16 %v644
  %v682 = vunpack.c.l.b16 %v645
  %v683 = vunpack.c.l.b16 %v646
  %v684 = vunpack.c.l.b16 %v647
  %v685 = vunpack.c.l.b16 %v648
  %v686 = vunpack.c.l.b16 %v649
  %v687 = vunpack.c.l.b16 %v650
  %v688 = vunpack.c.l.b16 %v651
  %v689 = vunpack.c.l.b16 %v652
  %v690 = vunpack.c.l.b16 %v653
  %v691 = vunpack.c.l.b16 %v654
  %v692 = vunpack.c.l.b16 %v655
  %v693 = vpack.c.b16 %v678, %v677
  %v694 = vpack.c.b16 %v680, %v679
  %v695 = vpack.c.b16 %v682, %v681
  %v696 = vpack.c.b16 %v684, %v683
  %v697 = vpack.c.b16 %v686, %v685
  %v698 = vpack.c.b16 %v688, %v687
  %v699 = vpack.c.b16 %v690, %v689
  %v700 = vpack.c.b16 %v692, %v691
  %v706 = vunpack.c.l.b16 %v656
  %v707 = vunpack.c.l.b16 %v657
  %v708 = vunpack.c.l.b16 %v658
  %v709 = vunpack.c.l.b16 %v659
  %v710 = vunpack.c.l.b16 %v660
  %v711 = vpack.c.b16 %v707, %v706
  %v712 = vpack.c.b16 %v709, %v708
  %v713 = vpack.c.b16 %v710, %v710
  %v717 = vsel %vm94, %v693, 0
  %v720 = vsel %vm94, %v694, 0
  %v723 = vsel %vm94, %v695, 0
  %v726 = vsel %vm94, %v696, 0
  %v729 = vsel %vm94, %v697, 0
  %v732 = vsel %vm94, %v698, 0
  %v735 = vsel %vm94, %v699, 0
  %v738 = vsel %vm94, %v700, 0
  %v741 = vsel %vm119, %v713, 0
  %743 = vmatprep.subr.bf16.mxu0 0
  %744 = vmatpush1.bf16.msra.mxu0 0
  %745 = vmatprep.subr.bf16.mxu0 0
  %746 = vmatpush1.bf16.msra.mxu0 0
  %747 = vmatprep.subr.bf16.mxu0 0
  %748 = vmatpush1.bf16.msra.mxu0 0
  %749 = vmatprep.subr.bf16.mxu0 0
  %750 = vmatpush1.bf16.msra.mxu0 0
  %751 = vmatprep.subr.bf16.mxu0 0
  %752 = vmatpush1.bf16.msra.mxu0 0
  %753 = vmatprep.subr.bf16.mxu0 0
  %754 = vmatpush1.bf16.msra.mxu0 %v741
  %755 = vmatprep.subr.bf16.mxu0 0
  %756 = vmatpush1.bf16.msra.mxu0 %v712
  %757 = vmatprep.subr.bf16.mxu0 0
  %758 = vmatpush1.bf16.msra.mxu0 %v711
  %759 = vmatprep.subr.bf16.mxu0 0
  %760 = vmatpush2.bf16.msra.mxu0 0
  %761 = vmatprep.subr.bf16.mxu0 0
  %762 = vmatpush2.bf16.msra.mxu0 0
  %763 = vmatprep.subr.bf16.mxu0 0
  %764 = vmatpush2.bf16.msra.mxu0 0
  %765 = vmatprep.subr.bf16.mxu0 0
  %766 = vmatpush2.bf16.msra.mxu0 0
  %767 = vmatprep.subr.bf16.mxu0 0
  %768 = vmatpush2.bf16.msra.mxu0 0
  %769 = vmatprep.subr.bf16.mxu0 0
  %770 = vmatpush2.bf16.msra.mxu0 0
  %771 = vmatprep.subr.bf16.mxu0 0
  %772 = vmatpush2.bf16.msra.mxu0 0
  %773 = vmatprep.subr.bf16.mxu0 0
  %774 = vmatpush2.bf16.msra.mxu0 0
  %775 = vmatprep.mubr.bf16.mxu0 0
  %776 = vmatmul.mubr.bf16.gmra.mxu0 %v717
  %v777 = vpop.f32.mrf.mxu0
  %v778 = vadd.f32 0.0, %v777
  %v779 = vpop.f32.mrf.mxu0
  %v780 = vpop.f32.mrf.mxu0
  %v781 = vadd.f32 0.0, %v780
  %v782 = vpop.f32.mrf.mxu0
  %783 = vmatprep.mubr.bf16.mxu0 0
  %784 = vmatmul.mubr.bf16.gmra.mxu0 %v720
  %v785 = vpop.f32.mrf.mxu0
  %v786 = vadd.f32 0.0, %v785
  %v787 = vpop.f32.mrf.mxu0
  %v788 = vpop.f32.mrf.mxu0
  %v789 = vadd.f32 0.0, %v788
  %v790 = vpop.f32.mrf.mxu0
  %791 = vmatprep.mubr.bf16.mxu0 0
  %792 = vmatmul.mubr.bf16.gmra.mxu0 %v723
  %v793 = vpop.f32.mrf.mxu0
  %v794 = vadd.f32 0.0, %v793
  %v795 = vpop.f32.mrf.mxu0
  %v796 = vpop.f32.mrf.mxu0
  %v797 = vadd.f32 0.0, %v796
  %v798 = vpop.f32.mrf.mxu0
  %799 = vmatprep.mubr.bf16.mxu0 0
  %800 = vmatmul.mubr.bf16.gmra.mxu0 %v726
  %v801 = vpop.f32.mrf.mxu0
  %v802 = vadd.f32 0.0, %v801
  %v803 = vpop.f32.mrf.mxu0
  %v804 = vpop.f32.mrf.mxu0
  %v805 = vadd.f32 0.0, %v804
  %v806 = vpop.f32.mrf.mxu0
  %807 = vmatprep.mubr.bf16.mxu0 0
  %808 = vmatmul.mubr.bf16.gmra.mxu0 %v729
  %v809 = vpop.f32.mrf.mxu0
  %v810 = vadd.f32 0.0, %v809
  %v811 = vpop.f32.mrf.mxu0
  %v812 = vpop.f32.mrf.mxu0
  %v813 = vadd.f32 0.0, %v812
  %v814 = vpop.f32.mrf.mxu0
  %815 = vmatprep.mubr.bf16.mxu0 0
  %816 = vmatmul.mubr.bf16.gmra.mxu0 %v732
  %v817 = vpop.f32.mrf.mxu0
  %v818 = vadd.f32 0.0, %v817
  %v819 = vpop.f32.mrf.mxu0
  %v820 = vpop.f32.mrf.mxu0
  %v821 = vadd.f32 0.0, %v820
  %v822 = vpop.f32.mrf.mxu0
  %823 = vmatprep.mubr.bf16.mxu0 0
  %824 = vmatmul.mubr.bf16.gmra.mxu0 %v735
  %v825 = vpop.f32.mrf.mxu0
  %v826 = vadd.f32 0.0, %v825
  %v827 = vpop.f32.mrf.mxu0
  %v828 = vpop.f32.mrf.mxu0
  %v829 = vadd.f32 0.0, %v828
  %v830 = vpop.f32.mrf.mxu0
  %831 = vmatprep.mubr.bf16.mxu0 0
  %832 = vmatmul.mubr.bf16.gmra.mxu0 %v738
  %v833 = vpop.f32.mrf.mxu0
  %v834 = vadd.f32 0.0, %v833
  %v835 = vpop.f32.mrf.mxu0
  %v836 = vpop.f32.mrf.mxu0
  %v837 = vadd.f32 0.0, %v836
  %v838 = vpop.f32.mrf.mxu0
  %839 = vdwg.mxu0
  %s840 = scalar_lea.vmem [#allocation2], 256
  %841 = vst.msk [vmem:[%s840] sm:$0xff] %vm220, %v778
  %842 = vst.msk [vmem:[%s840 + $0x8] sm:$0xff] %vm220, %v781
  %843 = vst.msk [vmem:[%s840 + $0x10] sm:$0xff] %vm220, %v786
  %844 = vst.msk [vmem:[%s840 + $0x18] sm:$0xff] %vm220, %v789
  %845 = vst.msk [vmem:[%s840 + $0x20] sm:$0xff] %vm220, %v794
  %846 = vst.msk [vmem:[%s840 + $0x28] sm:$0xff] %vm220, %v797
  %847 = vst.msk [vmem:[%s840 + $0x30] sm:$0xff] %vm220, %v802
  %848 = vst.msk [vmem:[%s840 + $0x38] sm:$0xff] %vm220, %v805
  %849 = vst.msk [vmem:[%s840 + $0x40] sm:$0xff] %vm220, %v810
  %850 = vst.msk [vmem:[%s840 + $0x48] sm:$0xff] %vm220, %v813
  %851 = vst.msk [vmem:[%s840 + $0x50] sm:$0xff] %vm220, %v818
  %852 = vst.msk [vmem:[%s840 + $0x58] sm:$0xff] %vm220, %v821
  %853 = vst.msk [vmem:[%s840 + $0x60] sm:$0xff] %vm220, %v826
  %854 = vst.msk [vmem:[%s840 + $0x68] sm:$0xff] %vm220, %v829
  %855 = vst.msk [vmem:[%s840 + $0x70] sm:$0xff] %vm220, %v834
  %856 = vst.msk [vmem:[%s840 + $0x78] sm:$0xff] %vm220, %v837
  %v857 = vsel %vm220, %v778, 0.0
  %v858 = vsel %vm220, %v781, 0.0
  %v859 = vadd.f32 %v857, %v858
  %v860 = vsel %vm220, %v786, 0.0
  %v861 = vadd.f32 %v859, %v860
  %v862 = vsel %vm220, %v789, 0.0
  %v863 = vadd.f32 %v861, %v862
  %v864 = vsel %vm220, %v794, 0.0
  %v865 = vadd.f32 %v863, %v864
  %v866 = vsel %vm220, %v797, 0.0
  %v867 = vadd.f32 %v865, %v866
  %v868 = vsel %vm220, %v802, 0.0
  %v869 = vadd.f32 %v867, %v868
  %v870 = vsel %vm220, %v805, 0.0
  %v871 = vadd.f32 %v869, %v870
  %v872 = vsel %vm220, %v810, 0.0
  %v873 = vadd.f32 %v871, %v872
  %v874 = vsel %vm220, %v813, 0.0
  %v875 = vadd.f32 %v873, %v874
  %v876 = vsel %vm220, %v818, 0.0
  %v877 = vadd.f32 %v875, %v876
  %v878 = vsel %vm220, %v821, 0.0
  %v879 = vadd.f32 %v877, %v878
  %v880 = vsel %vm220, %v826, 0.0
  %v881 = vadd.f32 %v879, %v880
  %v882 = vsel %vm220, %v829, 0.0
  %v883 = vadd.f32 %v881, %v882
  %v884 = vsel %vm220, %v834, 0.0
  %v885 = vadd.f32 %v883, %v884
  %v886 = vsel %vm220, %v837, 0.0
  %v887 = vadd.f32 %v885, %v886
  %v888 = vrot.slane %v887, 4
  %v889 = vadd.f32 %v887, %v888
  %v890 = vrot.slane %v889, 2
  %v891 = vadd.f32 %v889, %v890
  %v892 = vrot.slane %v891, 1
  %v893 = vadd.f32 %v891, %v892
  %v894 = vadd.f32 %v584, %v893
  %v895 = vmul.f32 %v778, %v778
  %v896 = vmul.f32 %v781, %v781
  %v897 = vmul.f32 %v786, %v786
  %v898 = vmul.f32 %v789, %v789
  %v899 = vmul.f32 %v794, %v794
  %v900 = vmul.f32 %v797, %v797
  %v901 = vmul.f32 %v802, %v802
  %v902 = vmul.f32 %v805, %v805
  %v903 = vmul.f32 %v810, %v810
  %v904 = vmul.f32 %v813, %v813
  %v905 = vmul.f32 %v818, %v818
  %v906 = vmul.f32 %v821, %v821
  %v907 = vmul.f32 %v826, %v826
  %v908 = vmul.f32 %v829, %v829
  %v909 = vmul.f32 %v834, %v834
  %v910 = vmul.f32 %v837, %v837
  %v911 = vsel %vm220, %v895, 0.0
  %v912 = vsel %vm220, %v896, 0.0
  %v913 = vadd.f32 %v911, %v912
  %v914 = vsel %vm220, %v897, 0.0
  %v915 = vadd.f32 %v913, %v914
  %v916 = vsel %vm220, %v898, 0.0
  %v917 = vadd.f32 %v915, %v916
  %v918 = vsel %vm220, %v899, 0.0
  %v919 = vadd.f32 %v917, %v918
  %v920 = vsel %vm220, %v900, 0.0
  %v921 = vadd.f32 %v919, %v920
  %v922 = vsel %vm220, %v901, 0.0
  %v923 = vadd.f32 %v921, %v922
  %v924 = vsel %vm220, %v902, 0.0
  %v925 = vadd.f32 %v923, %v924
  %v926 = vsel %vm220, %v903, 0.0
  %v927 = vadd.f32 %v925, %v926
  %v928 = vsel %vm220, %v904, 0.0
  %v929 = vadd.f32 %v927, %v928
  %v930 = vsel %vm220, %v905, 0.0
  %v931 = vadd.f32 %v929, %v930
  %v932 = vsel %vm220, %v906, 0.0
  %v933 = vadd.f32 %v931, %v932
  %v934 = vsel %vm220, %v907, 0.0
  %v935 = vadd.f32 %v933, %v934
  %v936 = vsel %vm220, %v908, 0.0
  %v937 = vadd.f32 %v935, %v936
  %v938 = vsel %vm220, %v909, 0.0
  %v939 = vadd.f32 %v937, %v938
  %v940 = vsel %vm220, %v910, 0.0
  %v941 = vadd.f32 %v939, %v940
  %v942 = vrot.slane %v941, 4
  %v943 = vadd.f32 %v941, %v942
  %v944 = vrot.slane %v943, 2
  %v945 = vadd.f32 %v943, %v944
  %v946 = vrot.slane %v945, 1
  %v947 = vadd.f32 %v945, %v946
  %v948 = vadd.f32 %v638, %v947
  %s949 = scalar_lea.vmem %s0, 192
  %v950 = vld [vmem:[%s949] sm:$0xf]
  %v951 = vld [vmem:[%s949 + $0x4] sm:$0xf]
  %v952 = vld [vmem:[%s949 + $0x8] sm:$0xf]
  %v953 = vld [vmem:[%s949 + $0xc] sm:$0xf]
  %v954 = vld [vmem:[%s949 + $0x10] sm:$0xf]
  %v955 = vld [vmem:[%s949 + $0x14] sm:$0xf]
  %v956 = vld [vmem:[%s949 + $0x18] sm:$0xf]
  %v957 = vld [vmem:[%s949 + $0x1c] sm:$0xf]
  %v958 = vld [vmem:[%s949 + $0x20] sm:$0xf]
  %v959 = vld [vmem:[%s949 + $0x24] sm:$0xf]
  %v960 = vld [vmem:[%s949 + $0x28] sm:$0xf]
  %v961 = vld [vmem:[%s949 + $0x2c] sm:$0xf]
  %v962 = vld [vmem:[%s949 + $0x30] sm:$0xf]
  %v963 = vld [vmem:[%s949 + $0x34] sm:$0xf]
  %v964 = vld [vmem:[%s949 + $0x38] sm:$0xf]
  %v965 = vld [vmem:[%s949 + $0x3c] sm:$0xf]
  %v966 = vld [vmem:[%s1] sm:$0xf]
  %v967 = vld [vmem:[%s1 + $0x4] sm:$0xf]
  %v968 = vld [vmem:[%s1 + $0x8] sm:$0xf]
  %v969 = vld [vmem:[%s1 + $0xc] sm:$0xf]
  %v970 = vld [vmem:[%s1 + $0x10] sm:$0x3]
  %v987 = vunpack.c.l.b16 %v950
  %v988 = vunpack.c.l.b16 %v951
  %v989 = vunpack.c.l.b16 %v952
  %v990 = vunpack.c.l.b16 %v953
  %v991 = vunpack.c.l.b16 %v954
  %v992 = vunpack.c.l.b16 %v955
  %v993 = vunpack.c.l.b16 %v956
  %v994 = vunpack.c.l.b16 %v957
  %v995 = vunpack.c.l.b16 %v958
  %v996 = vunpack.c.l.b16 %v959
  %v997 = vunpack.c.l.b16 %v960
  %v998 = vunpack.c.l.b16 %v961
  %v999 = vunpack.c.l.b16 %v962
  %v1000 = vunpack.c.l.b16 %v963
  %v1001 = vunpack.c.l.b16 %v964
  %v1002 = vunpack.c.l.b16 %v965
  %v1003 = vpack.c.b16 %v988, %v987
  %v1004 = vpack.c.b16 %v990, %v989
  %v1005 = vpack.c.b16 %v992, %v991
  %v1006 = vpack.c.b16 %v994, %v993
  %v1007 = vpack.c.b16 %v996, %v995
  %v1008 = vpack.c.b16 %v998, %v997
  %v1009 = vpack.c.b16 %v1000, %v999
  %v1010 = vpack.c.b16 %v1002, %v1001
  %v1016 = vunpack.c.l.b16 %v966
  %v1017 = vunpack.c.l.b16 %v967
  %v1018 = vunpack.c.l.b16 %v968
  %v1019 = vunpack.c.l.b16 %v969
  %v1020 = vunpack.c.l.b16 %v970
  %v1021 = vpack.c.b16 %v1017, %v1016
  %v1022 = vpack.c.b16 %v1019, %v1018
  %v1023 = vpack.c.b16 %v1020, %v1020
  %v1027 = vsel %vm94, %v1003, 0
  %v1030 = vsel %vm94, %v1004, 0
  %v1033 = vsel %vm94, %v1005, 0
  %v1036 = vsel %vm94, %v1006, 0
  %v1039 = vsel %vm94, %v1007, 0
  %v1042 = vsel %vm94, %v1008, 0
  %v1045 = vsel %vm94, %v1009, 0
  %v1048 = vsel %vm94, %v1010, 0
  %v1051 = vsel %vm119, %v1023, 0
  %1053 = vmatprep.subr.bf16.mxu0 0
  %1054 = vmatpush1.bf16.msra.mxu0 0
  %1055 = vmatprep.subr.bf16.mxu0 0
  %1056 = vmatpush1.bf16.msra.mxu0 0
  %1057 = vmatprep.subr.bf16.mxu0 0
  %1058 = vmatpush1.bf16.msra.mxu0 0
  %1059 = vmatprep.subr.bf16.mxu0 0
  %1060 = vmatpush1.bf16.msra.mxu0 0
  %1061 = vmatprep.subr.bf16.mxu0 0
  %1062 = vmatpush1.bf16.msra.mxu0 0
  %1063 = vmatprep.subr.bf16.mxu0 0
  %1064 = vmatpush1.bf16.msra.mxu0 %v1051
  %1065 = vmatprep.subr.bf16.mxu0 0
  %1066 = vmatpush1.bf16.msra.mxu0 %v1022
  %1067 = vmatprep.subr.bf16.mxu0 0
  %1068 = vmatpush1.bf16.msra.mxu0 %v1021
  %1069 = vmatprep.subr.bf16.mxu0 0
  %1070 = vmatpush2.bf16.msra.mxu0 0
  %1071 = vmatprep.subr.bf16.mxu0 0
  %1072 = vmatpush2.bf16.msra.mxu0 0
  %1073 = vmatprep.subr.bf16.mxu0 0
  %1074 = vmatpush2.bf16.msra.mxu0 0
  %1075 = vmatprep.subr.bf16.mxu0 0
  %1076 = vmatpush2.bf16.msra.mxu0 0
  %1077 = vmatprep.subr.bf16.mxu0 0
  %1078 = vmatpush2.bf16.msra.mxu0 0
  %1079 = vmatprep.subr.bf16.mxu0 0
  %1080 = vmatpush2.bf16.msra.mxu0 0
  %1081 = vmatprep.subr.bf16.mxu0 0
  %1082 = vmatpush2.bf16.msra.mxu0 0
  %1083 = vmatprep.subr.bf16.mxu0 0
  %1084 = vmatpush2.bf16.msra.mxu0 0
  %1085 = vmatprep.mubr.bf16.mxu0 0
  %1086 = vmatmul.mubr.bf16.gmra.mxu0 %v1027
  %v1087 = vpop.f32.mrf.mxu0
  %v1088 = vadd.f32 0.0, %v1087
  %v1089 = vpop.f32.mrf.mxu0
  %v1090 = vpop.f32.mrf.mxu0
  %v1091 = vadd.f32 0.0, %v1090
  %v1092 = vpop.f32.mrf.mxu0
  %1093 = vmatprep.mubr.bf16.mxu0 0
  %1094 = vmatmul.mubr.bf16.gmra.mxu0 %v1030
  %v1095 = vpop.f32.mrf.mxu0
  %v1096 = vadd.f32 0.0, %v1095
  %v1097 = vpop.f32.mrf.mxu0
  %v1098 = vpop.f32.mrf.mxu0
  %v1099 = vadd.f32 0.0, %v1098
  %v1100 = vpop.f32.mrf.mxu0
  %1101 = vmatprep.mubr.bf16.mxu0 0
  %1102 = vmatmul.mubr.bf16.gmra.mxu0 %v1033
  %v1103 = vpop.f32.mrf.mxu0
  %v1104 = vadd.f32 0.0, %v1103
  %v1105 = vpop.f32.mrf.mxu0
  %v1106 = vpop.f32.mrf.mxu0
  %v1107 = vadd.f32 0.0, %v1106
  %v1108 = vpop.f32.mrf.mxu0
  %1109 = vmatprep.mubr.bf16.mxu0 0
  %1110 = vmatmul.mubr.bf16.gmra.mxu0 %v1036
  %v1111 = vpop.f32.mrf.mxu0
  %v1112 = vadd.f32 0.0, %v1111
  %v1113 = vpop.f32.mrf.mxu0
  %v1114 = vpop.f32.mrf.mxu0
  %v1115 = vadd.f32 0.0, %v1114
  %v1116 = vpop.f32.mrf.mxu0
  %1117 = vmatprep.mubr.bf16.mxu0 0
  %1118 = vmatmul.mubr.bf16.gmra.mxu0 %v1039
  %v1119 = vpop.f32.mrf.mxu0
  %v1120 = vadd.f32 0.0, %v1119
  %v1121 = vpop.f32.mrf.mxu0
  %v1122 = vpop.f32.mrf.mxu0
  %v1123 = vadd.f32 0.0, %v1122
  %v1124 = vpop.f32.mrf.mxu0
  %1125 = vmatprep.mubr.bf16.mxu0 0
  %1126 = vmatmul.mubr.bf16.gmra.mxu0 %v1042
  %v1127 = vpop.f32.mrf.mxu0
  %v1128 = vadd.f32 0.0, %v1127
  %v1129 = vpop.f32.mrf.mxu0
  %v1130 = vpop.f32.mrf.mxu0
  %v1131 = vadd.f32 0.0, %v1130
  %v1132 = vpop.f32.mrf.mxu0
  %1133 = vmatprep.mubr.bf16.mxu0 0
  %1134 = vmatmul.mubr.bf16.gmra.mxu0 %v1045
  %v1135 = vpop.f32.mrf.mxu0
  %v1136 = vadd.f32 0.0, %v1135
  %v1137 = vpop.f32.mrf.mxu0
  %v1138 = vpop.f32.mrf.mxu0
  %v1139 = vadd.f32 0.0, %v1138
  %v1140 = vpop.f32.mrf.mxu0
  %1141 = vmatprep.mubr.bf16.mxu0 0
  %1142 = vmatmul.mubr.bf16.gmra.mxu0 %v1048
  %v1143 = vpop.f32.mrf.mxu0
  %v1144 = vadd.f32 0.0, %v1143
  %v1145 = vpop.f32.mrf.mxu0
  %v1146 = vpop.f32.mrf.mxu0
  %v1147 = vadd.f32 0.0, %v1146
  %v1148 = vpop.f32.mrf.mxu0
  %1149 = vdwg.mxu0
  %s1150 = scalar_lea.vmem [#allocation2], 384
  %1151 = vst.msk [vmem:[%s1150] sm:$0xff] %vm220, %v1088
  %1152 = vst.msk [vmem:[%s1150 + $0x8] sm:$0xff] %vm220, %v1091
  %1153 = vst.msk [vmem:[%s1150 + $0x10] sm:$0xff] %vm220, %v1096
  %1154 = vst.msk [vmem:[%s1150 + $0x18] sm:$0xff] %vm220, %v1099
  %1155 = vst.msk [vmem:[%s1150 + $0x20] sm:$0xff] %vm220, %v1104
  %1156 = vst.msk [vmem:[%s1150 + $0x28] sm:$0xff] %vm220, %v1107
  %1157 = vst.msk [vmem:[%s1150 + $0x30] sm:$0xff] %vm220, %v1112
  %1158 = vst.msk [vmem:[%s1150 + $0x38] sm:$0xff] %vm220, %v1115
  %1159 = vst.msk [vmem:[%s1150 + $0x40] sm:$0xff] %vm220, %v1120
  %1160 = vst.msk [vmem:[%s1150 + $0x48] sm:$0xff] %vm220, %v1123
  %1161 = vst.msk [vmem:[%s1150 + $0x50] sm:$0xff] %vm220, %v1128
  %1162 = vst.msk [vmem:[%s1150 + $0x58] sm:$0xff] %vm220, %v1131
  %1163 = vst.msk [vmem:[%s1150 + $0x60] sm:$0xff] %vm220, %v1136
  %1164 = vst.msk [vmem:[%s1150 + $0x68] sm:$0xff] %vm220, %v1139
  %1165 = vst.msk [vmem:[%s1150 + $0x70] sm:$0xff] %vm220, %v1144
  %1166 = vst.msk [vmem:[%s1150 + $0x78] sm:$0xff] %vm220, %v1147
  %v1167 = vsel %vm220, %v1088, 0.0
  %v1168 = vsel %vm220, %v1091, 0.0
  %v1169 = vadd.f32 %v1167, %v1168
  %v1170 = vsel %vm220, %v1096, 0.0
  %v1171 = vadd.f32 %v1169, %v1170
  %v1172 = vsel %vm220, %v1099, 0.0
  %v1173 = vadd.f32 %v1171, %v1172
  %v1174 = vsel %vm220, %v1104, 0.0
  %v1175 = vadd.f32 %v1173, %v1174
  %v1176 = vsel %vm220, %v1107, 0.0
  %v1177 = vadd.f32 %v1175, %v1176
  %v1178 = vsel %vm220, %v1112, 0.0
  %v1179 = vadd.f32 %v1177, %v1178
  %v1180 = vsel %vm220, %v1115, 0.0
  %v1181 = vadd.f32 %v1179, %v1180
  %v1182 = vsel %vm220, %v1120, 0.0
  %v1183 = vadd.f32 %v1181, %v1182
  %v1184 = vsel %vm220, %v1123, 0.0
  %v1185 = vadd.f32 %v1183, %v1184
  %v1186 = vsel %vm220, %v1128, 0.0
  %v1187 = vadd.f32 %v1185, %v1186
  %v1188 = vsel %vm220, %v1131, 0.0
  %v1189 = vadd.f32 %v1187, %v1188
  %v1190 = vsel %vm220, %v1136, 0.0
  %v1191 = vadd.f32 %v1189, %v1190
  %v1192 = vsel %vm220, %v1139, 0.0
  %v1193 = vadd.f32 %v1191, %v1192
  %v1194 = vsel %vm220, %v1144, 0.0
  %v1195 = vadd.f32 %v1193, %v1194
  %v1196 = vsel %vm220, %v1147, 0.0
  %v1197 = vadd.f32 %v1195, %v1196
  %v1198 = vrot.slane %v1197, 4
  %v1199 = vadd.f32 %v1197, %v1198
  %v1200 = vrot.slane %v1199, 2
  %v1201 = vadd.f32 %v1199, %v1200
  %v1202 = vrot.slane %v1201, 1
  %v1203 = vadd.f32 %v1201, %v1202
  %v1204 = vadd.f32 %v894, %v1203
  %v1205 = vmul.f32 %v1088, %v1088
  %v1206 = vmul.f32 %v1091, %v1091
  %v1207 = vmul.f32 %v1096, %v1096
  %v1208 = vmul.f32 %v1099, %v1099
  %v1209 = vmul.f32 %v1104, %v1104
  %v1210 = vmul.f32 %v1107, %v1107
  %v1211 = vmul.f32 %v1112, %v1112
  %v1212 = vmul.f32 %v1115, %v1115
  %v1213 = vmul.f32 %v1120, %v1120
  %v1214 = vmul.f32 %v1123, %v1123
  %v1215 = vmul.f32 %v1128, %v1128
  %v1216 = vmul.f32 %v1131, %v1131
  %v1217 = vmul.f32 %v1136, %v1136
  %v1218 = vmul.f32 %v1139, %v1139
  %v1219 = vmul.f32 %v1144, %v1144
  %v1220 = vmul.f32 %v1147, %v1147
  %v1221 = vsel %vm220, %v1205, 0.0
  %v1222 = vsel %vm220, %v1206, 0.0
  %v1223 = vadd.f32 %v1221, %v1222
  %v1224 = vsel %vm220, %v1207, 0.0
  %v1225 = vadd.f32 %v1223, %v1224
  %v1226 = vsel %vm220, %v1208, 0.0
  %v1227 = vadd.f32 %v1225, %v1226
  %v1228 = vsel %vm220, %v1209, 0.0
  %v1229 = vadd.f32 %v1227, %v1228
  %v1230 = vsel %vm220, %v1210, 0.0
  %v1231 = vadd.f32 %v1229, %v1230
  %v1232 = vsel %vm220, %v1211, 0.0
  %v1233 = vadd.f32 %v1231, %v1232
  %v1234 = vsel %vm220, %v1212, 0.0
  %v1235 = vadd.f32 %v1233, %v1234
  %v1236 = vsel %vm220, %v1213, 0.0
  %v1237 = vadd.f32 %v1235, %v1236
  %v1238 = vsel %vm220, %v1214, 0.0
  %v1239 = vadd.f32 %v1237, %v1238
  %v1240 = vsel %vm220, %v1215, 0.0
  %v1241 = vadd.f32 %v1239, %v1240
  %v1242 = vsel %vm220, %v1216, 0.0
  %v1243 = vadd.f32 %v1241, %v1242
  %v1244 = vsel %vm220, %v1217, 0.0
  %v1245 = vadd.f32 %v1243, %v1244
  %v1246 = vsel %vm220, %v1218, 0.0
  %v1247 = vadd.f32 %v1245, %v1246
  %v1248 = vsel %vm220, %v1219, 0.0
  %v1249 = vadd.f32 %v1247, %v1248
  %v1250 = vsel %vm220, %v1220, 0.0
  %v1251 = vadd.f32 %v1249, %v1250
  %v1252 = vrot.slane %v1251, 4
  %v1253 = vadd.f32 %v1251, %v1252
  %v1254 = vrot.slane %v1253, 2
  %v1255 = vadd.f32 %v1253, %v1254
  %v1256 = vrot.slane %v1255, 1
  %v1257 = vadd.f32 %v1255, %v1256
  %v1258 = vadd.f32 %v948, %v1257
  %v1259 = vmul.f32 %v1204, 0.001953125
  %v1260 = vmul.f32 %v1258, 0.001953125
  %v1261 = vmul.f32 %v1259, %v1259
  %v1262 = vsub.f32 %v1260, %v1261
  %v1263 = vld [vmem:[%s2] sm:$0x1]
  %v1264 = vadd.f32 %v1262, 1e-05
  %v1265 = vrsqrt.pop %v1264
  %v1266 = vmul.f32 %v1263, %v1265
  %v1267 = vld [vmem:[%s3] sm:$0x1]
  %v1268 = vmul.f32 %v1259, %v1266
  %v1269 = vsub.f32 %v1267, %v1268
  %v1270 = vld [vmem:[#allocation2] sm:$0xff]
  %v1271 = vld [vmem:[#allocation2 + $0x8] sm:$0xff]
  %v1272 = vld [vmem:[#allocation2 + $0x10] sm:$0xff]
  %v1273 = vld [vmem:[#allocation2 + $0x18] sm:$0xff]
  %v1274 = vld [vmem:[#allocation2 + $0x20] sm:$0xff]
  %v1275 = vld [vmem:[#allocation2 + $0x28] sm:$0xff]
  %v1276 = vld [vmem:[#allocation2 + $0x30] sm:$0xff]
  %v1277 = vld [vmem:[#allocation2 + $0x38] sm:$0xff]
  %v1278 = vld [vmem:[#allocation2 + $0x40] sm:$0xff]
  %v1279 = vld [vmem:[#allocation2 + $0x48] sm:$0xff]
  %v1280 = vld [vmem:[#allocation2 + $0x50] sm:$0xff]
  %v1281 = vld [vmem:[#allocation2 + $0x58] sm:$0xff]
  %v1282 = vld [vmem:[#allocation2 + $0x60] sm:$0xff]
  %v1283 = vld [vmem:[#allocation2 + $0x68] sm:$0xff]
  %v1284 = vld [vmem:[#allocation2 + $0x70] sm:$0xff]
  %v1285 = vld [vmem:[#allocation2 + $0x78] sm:$0xff]
  %v1287 = vlaneseq
  %v1288 = vshrl.u32 %v1287, 7
  %v1289 = vsub.s32 0, %v1288
  %v1290 = vrot.slane %v1266, %v1289
  %v1292 = vmul.f32 %v1270, %v1290
  %v1293 = vmul.f32 %v1271, %v1290
  %v1294 = vmul.f32 %v1272, %v1290
  %v1295 = vmul.f32 %v1273, %v1290
  %v1296 = vmul.f32 %v1274, %v1290
  %v1297 = vmul.f32 %v1275, %v1290
  %v1298 = vmul.f32 %v1276, %v1290
  %v1299 = vmul.f32 %v1277, %v1290
  %v1300 = vmul.f32 %v1278, %v1290
  %v1301 = vmul.f32 %v1279, %v1290
  %v1302 = vmul.f32 %v1280, %v1290
  %v1303 = vmul.f32 %v1281, %v1290
  %v1304 = vmul.f32 %v1282, %v1290
  %v1305 = vmul.f32 %v1283, %v1290
  %v1306 = vmul.f32 %v1284, %v1290
  %v1307 = vmul.f32 %v1285, %v1290
  %v1309 = vlaneseq
  %v1310 = vshrl.u32 %v1309, 7
  %v1311 = vsub.s32 0, %v1310
  %v1312 = vrot.slane %v1269, %v1311
  %v1314 = vadd.f32 %v1292, %v1312
  %v1315 = vadd.f32 %v1293, %v1312
  %v1316 = vadd.f32 %v1294, %v1312
  %v1317 = vadd.f32 %v1295, %v1312
  %v1318 = vadd.f32 %v1296, %v1312
  %v1319 = vadd.f32 %v1297, %v1312
  %v1320 = vadd.f32 %v1298, %v1312
  %v1321 = vadd.f32 %v1299, %v1312
  %v1322 = vadd.f32 %v1300, %v1312
  %v1323 = vadd.f32 %v1301, %v1312
  %v1324 = vadd.f32 %v1302, %v1312
  %v1325 = vadd.f32 %v1303, %v1312
  %v1326 = vadd.f32 %v1304, %v1312
  %v1327 = vadd.f32 %v1305, %v1312
  %v1328 = vadd.f32 %v1306, %v1312
  %v1329 = vadd.f32 %v1307, %v1312
  %v1330 = vmax.f32 %v1314, 0.0
  %v1331 = vmax.f32 %v1315, 0.0
  %v1332 = vmax.f32 %v1316, 0.0
  %v1333 = vmax.f32 %v1317, 0.0
  %v1334 = vmax.f32 %v1318, 0.0
  %v1335 = vmax.f32 %v1319, 0.0
  %v1336 = vmax.f32 %v1320, 0.0
  %v1337 = vmax.f32 %v1321, 0.0
  %v1338 = vmax.f32 %v1322, 0.0
  %v1339 = vmax.f32 %v1323, 0.0
  %v1340 = vmax.f32 %v1324, 0.0
  %v1341 = vmax.f32 %v1325, 0.0
  %v1342 = vmax.f32 %v1326, 0.0
  %v1343 = vmax.f32 %v1327, 0.0
  %v1344 = vmax.f32 %v1328, 0.0
  %v1345 = vmax.f32 %v1329, 0.0
  %v1346 = vld [vmem:[%s530] sm:$0xff]
  %v1347 = vld [vmem:[%s530 + $0x8] sm:$0xff]
  %v1348 = vld [vmem:[%s530 + $0x10] sm:$0xff]
  %v1349 = vld [vmem:[%s530 + $0x18] sm:$0xff]
  %v1350 = vld [vmem:[%s530 + $0x20] sm:$0xff]
  %v1351 = vld [vmem:[%s530 + $0x28] sm:$0xff]
  %v1352 = vld [vmem:[%s530 + $0x30] sm:$0xff]
  %v1353 = vld [vmem:[%s530 + $0x38] sm:$0xff]
  %v1354 = vld [vmem:[%s530 + $0x40] sm:$0xff]
  %v1355 = vld [vmem:[%s530 + $0x48] sm:$0xff]
  %v1356 = vld [vmem:[%s530 + $0x50] sm:$0xff]
  %v1357 = vld [vmem:[%s530 + $0x58] sm:$0xff]
  %v1358 = vld [vmem:[%s530 + $0x60] sm:$0xff]
  %v1359 = vld [vmem:[%s530 + $0x68] sm:$0xff]
  %v1360 = vld [vmem:[%s530 + $0x70] sm:$0xff]
  %v1361 = vld [vmem:[%s530 + $0x78] sm:$0xff]
  %v1362 = vmul.f32 %v1346, %v1290
  %v1363 = vmul.f32 %v1347, %v1290
  %v1364 = vmul.f32 %v1348, %v1290
  %v1365 = vmul.f32 %v1349, %v1290
  %v1366 = vmul.f32 %v1350, %v1290
  %v1367 = vmul.f32 %v1351, %v1290
  %v1368 = vmul.f32 %v1352, %v1290
  %v1369 = vmul.f32 %v1353, %v1290
  %v1370 = vmul.f32 %v1354, %v1290
  %v1371 = vmul.f32 %v1355, %v1290
  %v1372 = vmul.f32 %v1356, %v1290
  %v1373 = vmul.f32 %v1357, %v1290
  %v1374 = vmul.f32 %v1358, %v1290
  %v1375 = vmul.f32 %v1359, %v1290
  %v1376 = vmul.f32 %v1360, %v1290
  %v1377 = vmul.f32 %v1361, %v1290
  %v1378 = vadd.f32 %v1362, %v1312
  %v1379 = vadd.f32 %v1363, %v1312
  %v1380 = vadd.f32 %v1364, %v1312
  %v1381 = vadd.f32 %v1365, %v1312
  %v1382 = vadd.f32 %v1366, %v1312
  %v1383 = vadd.f32 %v1367, %v1312
  %v1384 = vadd.f32 %v1368, %v1312
  %v1385 = vadd.f32 %v1369, %v1312
  %v1386 = vadd.f32 %v1370, %v1312
  %v1387 = vadd.f32 %v1371, %v1312
  %v1388 = vadd.f32 %v1372, %v1312
  %v1389 = vadd.f32 %v1373, %v1312
  %v1390 = vadd.f32 %v1374, %v1312
  %v1391 = vadd.f32 %v1375, %v1312
  %v1392 = vadd.f32 %v1376, %v1312
  %v1393 = vadd.f32 %v1377, %v1312
  %v1394 = vmax.f32 %v1378, 0.0
  %v1395 = vmax.f32 %v1379, 0.0
  %v1396 = vmax.f32 %v1380, 0.0
  %v1397 = vmax.f32 %v1381, 0.0
  %v1398 = vmax.f32 %v1382, 0.0
  %v1399 = vmax.f32 %v1383, 0.0
  %v1400 = vmax.f32 %v1384, 0.0
  %v1401 = vmax.f32 %v1385, 0.0
  %v1402 = vmax.f32 %v1386, 0.0
  %v1403 = vmax.f32 %v1387, 0.0
  %v1404 = vmax.f32 %v1388, 0.0
  %v1405 = vmax.f32 %v1389, 0.0
  %v1406 = vmax.f32 %v1390, 0.0
  %v1407 = vmax.f32 %v1391, 0.0
  %v1408 = vmax.f32 %v1392, 0.0
  %v1409 = vmax.f32 %v1393, 0.0
  %v1410 = vmax.f32 %v1330, %v1394
  %v1411 = vmax.f32 %v1331, %v1395
  %v1412 = vmax.f32 %v1332, %v1396
  %v1413 = vmax.f32 %v1333, %v1397
  %v1414 = vmax.f32 %v1334, %v1398
  %v1415 = vmax.f32 %v1335, %v1399
  %v1416 = vmax.f32 %v1336, %v1400
  %v1417 = vmax.f32 %v1337, %v1401
  %v1418 = vmax.f32 %v1338, %v1402
  %v1419 = vmax.f32 %v1339, %v1403
  %v1420 = vmax.f32 %v1340, %v1404
  %v1421 = vmax.f32 %v1341, %v1405
  %v1422 = vmax.f32 %v1342, %v1406
  %v1423 = vmax.f32 %v1343, %v1407
  %v1424 = vmax.f32 %v1344, %v1408
  %v1425 = vmax.f32 %v1345, %v1409
  %v1426 = vld [vmem:[%s840] sm:$0xff]
  %v1427 = vld [vmem:[%s840 + $0x8] sm:$0xff]
  %v1428 = vld [vmem:[%s840 + $0x10] sm:$0xff]
  %v1429 = vld [vmem:[%s840 + $0x18] sm:$0xff]
  %v1430 = vld [vmem:[%s840 + $0x20] sm:$0xff]
  %v1431 = vld [vmem:[%s840 + $0x28] sm:$0xff]
  %v1432 = vld [vmem:[%s840 + $0x30] sm:$0xff]
  %v1433 = vld [vmem:[%s840 + $0x38] sm:$0xff]
  %v1434 = vld [vmem:[%s840 + $0x40] sm:$0xff]
  %v1435 = vld [vmem:[%s840 + $0x48] sm:$0xff]
  %v1436 = vld [vmem:[%s840 + $0x50] sm:$0xff]
  %v1437 = vld [vmem:[%s840 + $0x58] sm:$0xff]
  %v1438 = vld [vmem:[%s840 + $0x60] sm:$0xff]
  %v1439 = vld [vmem:[%s840 + $0x68] sm:$0xff]
  %v1440 = vld [vmem:[%s840 + $0x70] sm:$0xff]
  %v1441 = vld [vmem:[%s840 + $0x78] sm:$0xff]
  %v1442 = vmul.f32 %v1426, %v1290
  %v1443 = vmul.f32 %v1427, %v1290
  %v1444 = vmul.f32 %v1428, %v1290
  %v1445 = vmul.f32 %v1429, %v1290
  %v1446 = vmul.f32 %v1430, %v1290
  %v1447 = vmul.f32 %v1431, %v1290
  %v1448 = vmul.f32 %v1432, %v1290
  %v1449 = vmul.f32 %v1433, %v1290
  %v1450 = vmul.f32 %v1434, %v1290
  %v1451 = vmul.f32 %v1435, %v1290
  %v1452 = vmul.f32 %v1436, %v1290
  %v1453 = vmul.f32 %v1437, %v1290
  %v1454 = vmul.f32 %v1438, %v1290
  %v1455 = vmul.f32 %v1439, %v1290
  %v1456 = vmul.f32 %v1440, %v1290
  %v1457 = vmul.f32 %v1441, %v1290
  %v1458 = vadd.f32 %v1442, %v1312
  %v1459 = vadd.f32 %v1443, %v1312
  %v1460 = vadd.f32 %v1444, %v1312
  %v1461 = vadd.f32 %v1445, %v1312
  %v1462 = vadd.f32 %v1446, %v1312
  %v1463 = vadd.f32 %v1447, %v1312
  %v1464 = vadd.f32 %v1448, %v1312
  %v1465 = vadd.f32 %v1449, %v1312
  %v1466 = vadd.f32 %v1450, %v1312
  %v1467 = vadd.f32 %v1451, %v1312
  %v1468 = vadd.f32 %v1452, %v1312
  %v1469 = vadd.f32 %v1453, %v1312
  %v1470 = vadd.f32 %v1454, %v1312
  %v1471 = vadd.f32 %v1455, %v1312
  %v1472 = vadd.f32 %v1456, %v1312
  %v1473 = vadd.f32 %v1457, %v1312
  %v1474 = vmax.f32 %v1458, 0.0
  %v1475 = vmax.f32 %v1459, 0.0
  %v1476 = vmax.f32 %v1460, 0.0
  %v1477 = vmax.f32 %v1461, 0.0
  %v1478 = vmax.f32 %v1462, 0.0
  %v1479 = vmax.f32 %v1463, 0.0
  %v1480 = vmax.f32 %v1464, 0.0
  %v1481 = vmax.f32 %v1465, 0.0
  %v1482 = vmax.f32 %v1466, 0.0
  %v1483 = vmax.f32 %v1467, 0.0
  %v1484 = vmax.f32 %v1468, 0.0
  %v1485 = vmax.f32 %v1469, 0.0
  %v1486 = vmax.f32 %v1470, 0.0
  %v1487 = vmax.f32 %v1471, 0.0
  %v1488 = vmax.f32 %v1472, 0.0
  %v1489 = vmax.f32 %v1473, 0.0
  %v1490 = vmax.f32 %v1410, %v1474
  %v1491 = vmax.f32 %v1411, %v1475
  %v1492 = vmax.f32 %v1412, %v1476
  %v1493 = vmax.f32 %v1413, %v1477
  %v1494 = vmax.f32 %v1414, %v1478
  %v1495 = vmax.f32 %v1415, %v1479
  %v1496 = vmax.f32 %v1416, %v1480
  %v1497 = vmax.f32 %v1417, %v1481
  %v1498 = vmax.f32 %v1418, %v1482
  %v1499 = vmax.f32 %v1419, %v1483
  %v1500 = vmax.f32 %v1420, %v1484
  %v1501 = vmax.f32 %v1421, %v1485
  %v1502 = vmax.f32 %v1422, %v1486
  %v1503 = vmax.f32 %v1423, %v1487
  %v1504 = vmax.f32 %v1424, %v1488
  %v1505 = vmax.f32 %v1425, %v1489
  %v1506 = vld [vmem:[%s1150] sm:$0xff]
  %v1507 = vld [vmem:[%s1150 + $0x8] sm:$0xff]
  %v1508 = vld [vmem:[%s1150 + $0x10] sm:$0xff]
  %v1509 = vld [vmem:[%s1150 + $0x18] sm:$0xff]
  %v1510 = vld [vmem:[%s1150 + $0x20] sm:$0xff]
  %v1511 = vld [vmem:[%s1150 + $0x28] sm:$0xff]
  %v1512 = vld [vmem:[%s1150 + $0x30] sm:$0xff]
  %v1513 = vld [vmem:[%s1150 + $0x38] sm:$0xff]
  %v1514 = vld [vmem:[%s1150 + $0x40] sm:$0xff]
  %v1515 = vld [vmem:[%s1150 + $0x48] sm:$0xff]
  %v1516 = vld [vmem:[%s1150 + $0x50] sm:$0xff]
  %v1517 = vld [vmem:[%s1150 + $0x58] sm:$0xff]
  %v1518 = vld [vmem:[%s1150 + $0x60] sm:$0xff]
  %v1519 = vld [vmem:[%s1150 + $0x68] sm:$0xff]
  %v1520 = vld [vmem:[%s1150 + $0x70] sm:$0xff]
  %v1521 = vld [vmem:[%s1150 + $0x78] sm:$0xff]
  %v1522 = vmul.f32 %v1506, %v1290
  %v1523 = vmul.f32 %v1507, %v1290
  %v1524 = vmul.f32 %v1508, %v1290
  %v1525 = vmul.f32 %v1509, %v1290
  %v1526 = vmul.f32 %v1510, %v1290
  %v1527 = vmul.f32 %v1511, %v1290
  %v1528 = vmul.f32 %v1512, %v1290
  %v1529 = vmul.f32 %v1513, %v1290
  %v1530 = vmul.f32 %v1514, %v1290
  %v1531 = vmul.f32 %v1515, %v1290
  %v1532 = vmul.f32 %v1516, %v1290
  %v1533 = vmul.f32 %v1517, %v1290
  %v1534 = vmul.f32 %v1518, %v1290
  %v1535 = vmul.f32 %v1519, %v1290
  %v1536 = vmul.f32 %v1520, %v1290
  %v1537 = vmul.f32 %v1521, %v1290
  %v1538 = vadd.f32 %v1522, %v1312
  %v1539 = vadd.f32 %v1523, %v1312
  %v1540 = vadd.f32 %v1524, %v1312
  %v1541 = vadd.f32 %v1525, %v1312
  %v1542 = vadd.f32 %v1526, %v1312
  %v1543 = vadd.f32 %v1527, %v1312
  %v1544 = vadd.f32 %v1528, %v1312
  %v1545 = vadd.f32 %v1529, %v1312
  %v1546 = vadd.f32 %v1530, %v1312
  %v1547 = vadd.f32 %v1531, %v1312
  %v1548 = vadd.f32 %v1532, %v1312
  %v1549 = vadd.f32 %v1533, %v1312
  %v1550 = vadd.f32 %v1534, %v1312
  %v1551 = vadd.f32 %v1535, %v1312
  %v1552 = vadd.f32 %v1536, %v1312
  %v1553 = vadd.f32 %v1537, %v1312
  %v1554 = vmax.f32 %v1538, 0.0
  %v1555 = vmax.f32 %v1539, 0.0
  %v1556 = vmax.f32 %v1540, 0.0
  %v1557 = vmax.f32 %v1541, 0.0
  %v1558 = vmax.f32 %v1542, 0.0
  %v1559 = vmax.f32 %v1543, 0.0
  %v1560 = vmax.f32 %v1544, 0.0
  %v1561 = vmax.f32 %v1545, 0.0
  %v1562 = vmax.f32 %v1546, 0.0
  %v1563 = vmax.f32 %v1547, 0.0
  %v1564 = vmax.f32 %v1548, 0.0
  %v1565 = vmax.f32 %v1549, 0.0
  %v1566 = vmax.f32 %v1550, 0.0
  %v1567 = vmax.f32 %v1551, 0.0
  %v1568 = vmax.f32 %v1552, 0.0
  %v1569 = vmax.f32 %v1553, 0.0
  %v1570 = vmax.f32 %v1490, %v1554
  %v1571 = vmax.f32 %v1491, %v1555
  %v1572 = vmax.f32 %v1492, %v1556
  %v1573 = vmax.f32 %v1493, %v1557
  %v1574 = vmax.f32 %v1494, %v1558
  %v1575 = vmax.f32 %v1495, %v1559
  %v1576 = vmax.f32 %v1496, %v1560
  %v1577 = vmax.f32 %v1497, %v1561
  %v1578 = vmax.f32 %v1498, %v1562
  %v1579 = vmax.f32 %v1499, %v1563
  %v1580 = vmax.f32 %v1500, %v1564
  %v1581 = vmax.f32 %v1501, %v1565
  %v1582 = vmax.f32 %v1502, %v1566
  %v1583 = vmax.f32 %v1503, %v1567
  %v1584 = vmax.f32 %v1504, %v1568
  %v1585 = vmax.f32 %v1505, %v1569
  %1586 = vst.msk [vmem:[%s4] sm:$0xff] %vm220, %v1570
  %1587 = vst.msk [vmem:[%s4 + $0x8] sm:$0xff] %vm220, %v1571
  %1588 = vst.msk [vmem:[%s4 + $0x10] sm:$0xff] %vm220, %v1572
  %1589 = vst.msk [vmem:[%s4 + $0x18] sm:$0xff] %vm220, %v1573
  %1590 = vst.msk [vmem:[%s4 + $0x20] sm:$0xff] %vm220, %v1574
  %1591 = vst.msk [vmem:[%s4 + $0x28] sm:$0xff] %vm220, %v1575
  %1592 = vst.msk [vmem:[%s4 + $0x30] sm:$0xff] %vm220, %v1576
  %1593 = vst.msk [vmem:[%s4 + $0x38] sm:$0xff] %vm220, %v1577
  %1594 = vst.msk [vmem:[%s4 + $0x40] sm:$0xff] %vm220, %v1578
  %1595 = vst.msk [vmem:[%s4 + $0x48] sm:$0xff] %vm220, %v1579
  %1596 = vst.msk [vmem:[%s4 + $0x50] sm:$0xff] %vm220, %v1580
  %1597 = vst.msk [vmem:[%s4 + $0x58] sm:$0xff] %vm220, %v1581
  %1598 = vst.msk [vmem:[%s4 + $0x60] sm:$0xff] %vm220, %v1582
  %1599 = vst.msk [vmem:[%s4 + $0x68] sm:$0xff] %vm220, %v1583
  %1600 = vst.msk [vmem:[%s4 + $0x70] sm:$0xff] %vm220, %v1584
  %1601 = vst.msk [vmem:[%s4 + $0x78] sm:$0xff] %vm220, %v1585
  // Predicated region
  $region18: #{classifier_forward.5} parent=0 // pred_check
    _
  $region19: #{classifier_forward.5} parent=0 // pred_check_branch
    %1603 = sbr.rel (0) target = $region21
  $region20: #{classifier_forward.5} parent=0 // pred_region
    _
  $region21: #{classifier_forward.5} parent=0 // pred_fallthru
    _
  // Predicated region
  $region22: #{classifier_forward.5} parent=0 // pred_check
    _
  $region23: #{classifier_forward.5} parent=0 // pred_check_branch
    %1605 = sbr.rel (0) target = $region25
  $region24: #{classifier_forward.5} parent=0 // pred_region
    _
  $region25: #{classifier_forward.5} parent=0 // pred_fallthru
    _

// kernel: classifier_forward.6
$region0: #{classifier_forward.6}
  #allocation0 [shape = 'u32[]', space=smem, size = 0x4, offset = 0x4, fixed_abs, tag = 'smem constant byte address 0x4 - core index']
  #allocation1 [shape = 'u32[144,128]{1,0:T(1,128)}', space=vmem, size = 0x12000, scoped, tag = 'internal scratch']
  #allocation2 [shape = 'f32[4,32,16]{2,1,0:T(8,128)}', space=vmem, size = 0x10000, scoped, tag = 'scratch operand']
  %s0 = inlined_call_operand.vmem [shape: bf16[4,32,72], index: 0, kind: input, shape index: {}]
  %s1 = inlined_call_operand.vmem [shape: bf16[72,16], index: 1, kind: input, shape index: {}]
  %s2 = inlined_call_operand.vmem [shape: f32[1,16], index: 2, kind: input, shape index: {}]
  %s3 = inlined_call_operand.vmem [shape: f32[1,16], index: 3, kind: input, shape index: {}]
  %s4 = inlined_call_operand.vmem [shape: f32[32,16], index: 4, kind: output, shape index: {}]
  %s5 = sld [smem:[#allocation0]]
  $region26: #{classifier_forward.6} parent=0
    _
  %s7 = ssub.s32 1, %s5
  %s8 = scalar_select 0, %s7, %s5
  // Predicated region
  $region2: #{classifier_forward.6} parent=0 // pred_check
    _
  $region3: #{classifier_forward.6} parent=0 // pred_check_branch
    %10 = sbr.rel (0) target = $region5
  $region4: #{classifier_forward.6} parent=0 // pred_region
    _
  $region5: #{classifier_forward.6} parent=0 // pred_fallthru
    _
  // Predicated region
  $region6: #{classifier_forward.6} parent=0 // pred_check
    _
  $region7: #{classifier_forward.6} parent=0 // pred_check_branch
    %12 = sbr.rel (0) target = $region9
  $region8: #{classifier_forward.6} parent=0 // pred_region
    _
  $region9: #{classifier_forward.6} parent=0 // pred_fallthru
    _
  // Predicated region
  $region10: #{classifier_forward.6} parent=0 // pred_check
    _
  $region11: #{classifier_forward.6} parent=0 // pred_check_branch
    %14 = sbr.rel (0) target = $region13
  $region12: #{classifier_forward.6} parent=0 // pred_region
    _
  $region13: #{classifier_forward.6} parent=0 // pred_fallthru
    _
  // Predicated region
  $region14: #{classifier_forward.6} parent=0 // pred_check
    _
  $region15: #{classifier_forward.6} parent=0 // pred_check_branch
    %16 = sbr.rel (0) target = $region17
  $region16: #{classifier_forward.6} parent=0 // pred_region
    _
  $region17: #{classifier_forward.6} parent=0 // pred_fallthru
    _
  %v18 = vld [vmem:[%s0] sm:$0xf]
  %v19 = vld [vmem:[%s0 + $0x4] sm:$0xf]
  %v20 = vld [vmem:[%s0 + $0x8] sm:$0xf]
  %v21 = vld [vmem:[%s0 + $0xc] sm:$0xf]
  %v22 = vld [vmem:[%s1] sm:$0xf]
  %v23 = vld [vmem:[%s1 + $0x4] sm:$0xf]
  %v24 = vld [vmem:[%s1 + $0x8] sm:$0xf]
  %v25 = vld [vmem:[%s1 + $0xc] sm:$0xf]
  %v26 = vld [vmem:[%s1 + $0x10] sm:$0xf]
  %v27 = vld [vmem:[%s1 + $0x14] sm:$0xf]
  %v28 = vld [vmem:[%s1 + $0x18] sm:$0xf]
  %v29 = vld [vmem:[%s1 + $0x1c] sm:$0xf]
  %v30 = vld [vmem:[%s1 + $0x20] sm:$0xf]
  %v35 = vunpack.c.l.b16 %v18
  %v36 = vunpack.c.l.b16 %v19
  %v37 = vunpack.c.l.b16 %v20
  %v38 = vunpack.c.l.b16 %v21
  %v39 = vpack.c.b16 %v36, %v35
  %v40 = vpack.c.b16 %v38, %v37
  %v50 = vunpack.c.l.b16 %v22
  %v51 = vunpack.c.l.b16 %v23
  %v52 = vunpack.c.l.b16 %v24
  %v53 = vunpack.c.l.b16 %v25
  %v54 = vunpack.c.l.b16 %v26
  %v55 = vunpack.c.l.b16 %v27
  %v56 = vunpack.c.l.b16 %v28
  %v57 = vunpack.c.l.b16 %v29
  %v58 = vunpack.c.l.b16 %v30
  %v59 = vpack.c.b16 %v51, %v50
  %v60 = vpack.c.b16 %v53, %v52
  %v61 = vpack.c.b16 %v55, %v54
  %v62 = vpack.c.b16 %v57, %v56
  %v63 = vpack.c.b16 %v58, %v58
  %vm68 = vcmask 588800
  %v70 = vsel %vm68, %v39, 0
  %v73 = vsel %vm68, %v40, 0
  %vm75 = vcmask 1043456
  %v77 = vsel %vm75, %v63, 0
  %79 = vmatprep.subr.bf16.mxu0 0
  %80 = vmatpush1.bf16.msra.mxu0 0
  %81 = vmatprep.subr.bf16.mxu0 0
  %82 = vmatpush1.bf16.msra.mxu0 0
  %83 = vmatprep.subr.bf16.mxu0 0
  %84 = vmatpush1.bf16.msra.mxu0 0
  %85 = vmatprep.subr.bf16.mxu0 0
  %86 = vmatpush1.bf16.msra.mxu0 %v77
  %87 = vmatprep.subr.bf16.mxu0 0
  %88 = vmatpush1.bf16.msra.mxu0 %v62
  %89 = vmatprep.subr.bf16.mxu0 0
  %90 = vmatpush1.bf16.msra.mxu0 %v61
  %91 = vmatprep.subr.bf16.mxu0 0
  %92 = vmatpush1.bf16.msra.mxu0 %v60
  %93 = vmatprep.subr.bf16.mxu0 0
  %94 = vmatpush1.bf16.msra.mxu0 %v59
  %95 = vmatprep.subr.bf16.mxu0 0
  %96 = vmatpush2.bf16.msra.mxu0 0
  %97 = vmatprep.subr.bf16.mxu0 0
  %98 = vmatpush2.bf16.msra.mxu0 0
  %99 = vmatprep.subr.bf16.mxu0 0
  %100 = vmatpush2.bf16.msra.mxu0 0
  %101 = vmatprep.subr.bf16.mxu0 0
  %102 = vmatpush2.bf16.msra.mxu0 0
  %103 = vmatprep.subr.bf16.mxu0 0
  %104 = vmatpush2.bf16.msra.mxu0 0
  %105 = vmatprep.subr.bf16.mxu0 0
  %106 = vmatpush2.bf16.msra.mxu0 0
  %107 = vmatprep.subr.bf16.mxu0 0
  %108 = vmatpush2.bf16.msra.mxu0 0
  %109 = vmatprep.subr.bf16.mxu0 0
  %110 = vmatpush2.bf16.msra.mxu0 0
  %111 = vmatprep.mubr.bf16.mxu0 0
  %112 = vmatmul.mubr.bf16.gmra.mxu0 %v70
  %v113 = vpop.f32.mrf.mxu0
  %v114 = vadd.f32 0.0, %v113
  %v115 = vpop.f32.mrf.mxu0
  %v116 = vpop.f32.mrf.mxu0
  %v117 = vadd.f32 0.0, %v116
  %v118 = vpop.f32.mrf.mxu0
  %119 = vmatprep.mubr.bf16.mxu0 0
  %120 = vmatmul.mubr.bf16.gmra.mxu0 %v73
  %v121 = vpop.f32.mrf.mxu0
  %v122 = vadd.f32 0.0, %v121
  %v123 = vpop.f32.mrf.mxu0
  %v124 = vpop.f32.mrf.mxu0
  %v125 = vadd.f32 0.0, %v124
  %v126 = vpop.f32.mrf.mxu0
  %127 = vdwg.mxu0
  %vm128 = vcmask 130048
  %129 = vst.msk [vmem:[#allocation2] sm:$0xff] %vm128, %v114
  %130 = vst.msk [vmem:[#allocation2 + $0x8] sm:$0xff] %vm128, %v117
  %131 = vst.msk [vmem:[#allocation2 + $0x10] sm:$0xff] %vm128, %v122
  %132 = vst.msk [vmem:[#allocation2 + $0x18] sm:$0xff] %vm128, %v125
  %v133 = vsel %vm128, %v114, 0.0
  %v134 = vsel %vm128, %v117, 0.0
  %v135 = vadd.f32 %v133, %v134
  %v136 = vsel %vm128, %v122, 0.0
  %v137 = vadd.f32 %v135, %v136
  %v138 = vsel %vm128, %v125, 0.0
  %v139 = vadd.f32 %v137, %v138
  %v140 = vrot.slane %v139, 4
  %v141 = vadd.f32 %v139, %v140
  %v142 = vrot.slane %v141, 2
  %v143 = vadd.f32 %v141, %v142
  %v144 = vrot.slane %v143, 1
  %v145 = vadd.f32 %v143, %v144
  %v146 = vadd.f32 %v145, 0.0
  %v147 = vmul.f32 %v114, %v114
  %v148 = vmul.f32 %v117, %v117
  %v149 = vmul.f32 %v122, %v122
  %v150 = vmul.f32 %v125, %v125
  %v151 = vsel %vm128, %v147, 0.0
  %v152 = vsel %vm128, %v148, 0.0
  %v153 = vadd.f32 %v151, %v152
  %v154 = vsel %vm128, %v149, 0.0
  %v155 = vadd.f32 %v153, %v154
  %v156 = vsel %vm128, %v150, 0.0
  %v157 = vadd.f32 %v155, %v156
  %v158 = vrot.slane %v157, 4
  %v159 = vadd.f32 %v157, %v158
  %v160 = vrot.slane %v159, 2
  %v161 = vadd.f32 %v159, %v160
  %v162 = vrot.slane %v161, 1
  %v163 = vadd.f32 %v161, %v162
  %v164 = vadd.f32 %v163, 0.0
  %s165 = scalar_lea.vmem %s0, 16
  %v166 = vld [vmem:[%s165] sm:$0xf]
  %v167 = vld [vmem:[%s165 + $0x4] sm:$0xf]
  %v168 = vld [vmem:[%s165 + $0x8] sm:$0xf]
  %v169 = vld [vmem:[%s165 + $0xc] sm:$0xf]
  %v170 = vld [vmem:[%s1] sm:$0xf]
  %v171 = vld [vmem:[%s1 + $0x4] sm:$0xf]
  %v172 = vld [vmem:[%s1 + $0x8] sm:$0xf]
  %v173 = vld [vmem:[%s1 + $0xc] sm:$0xf]
  %v174 = vld [vmem:[%s1 + $0x10] sm:$0xf]
  %v175 = vld [vmem:[%s1 + $0x14] sm:$0xf]
  %v176 = vld [vmem:[%s1 + $0x18] sm:$0xf]
  %v177 = vld [vmem:[%s1 + $0x1c] sm:$0xf]
  %v178 = vld [vmem:[%s1 + $0x20] sm:$0xf]
  %v183 = vunpack.c.l.b16 %v166
  %v184 = vunpack.c.l.b16 %v167
  %v185 = vunpack.c.l.b16 %v168
  %v186 = vunpack.c.l.b16 %v169
  %v187 = vpack.c.b16 %v184, %v183
  %v188 = vpack.c.b16 %v186, %v185
  %v198 = vunpack.c.l.b16 %v170
  %v199 = vunpack.c.l.b16 %v171
  %v200 = vunpack.c.l.b16 %v172
  %v201 = vunpack.c.l.b16 %v173
  %v202 = vunpack.c.l.b16 %v174
  %v203 = vunpack.c.l.b16 %v175
  %v204 = vunpack.c.l.b16 %v176
  %v205 = vunpack.c.l.b16 %v177
  %v206 = vunpack.c.l.b16 %v178
  %v207 = vpack.c.b16 %v199, %v198
  %v208 = vpack.c.b16 %v201, %v200
  %v209 = vpack.c.b16 %v203, %v202
  %v210 = vpack.c.b16 %v205, %v204
  %v211 = vpack.c.b16 %v206, %v206
  %v217 = vsel %vm68, %v187, 0
  %v220 = vsel %vm68, %v188, 0
  %v223 = vsel %vm75, %v211, 0
  %225 = vmatprep.subr.bf16.mxu0 0
  %226 = vmatpush1.bf16.msra.mxu0 0
  %227 = vmatprep.subr.bf16.mxu0 0
  %228 = vmatpush1.bf16.msra.mxu0 0
  %229 = vmatprep.subr.bf16.mxu0 0
  %230 = vmatpush1.bf16.msra.mxu0 0
  %231 = vmatprep.subr.bf16.mxu0 0
  %232 = vmatpush1.bf16.msra.mxu0 %v223
  %233 = vmatprep.subr.bf16.mxu0 0
  %234 = vmatpush1.bf16.msra.mxu0 %v210
  %235 = vmatprep.subr.bf16.mxu0 0
  %236 = vmatpush1.bf16.msra.mxu0 %v209
  %237 = vmatprep.subr.bf16.mxu0 0
  %238 = vmatpush1.bf16.msra.mxu0 %v208
  %239 = vmatprep.subr.bf16.mxu0 0
  %240 = vmatpush1.bf16.msra.mxu0 %v207
  %241 = vmatprep.subr.bf16.mxu0 0
  %242 = vmatpush2.bf16.msra.mxu0 0
  %243 = vmatprep.subr.bf16.mxu0 0
  %244 = vmatpush2.bf16.msra.mxu0 0
  %245 = vmatprep.subr.bf16.mxu0 0
  %246 = vmatpush2.bf16.msra.mxu0 0
  %247 = vmatprep.subr.bf16.mxu0 0
  %248 = vmatpush2.bf16.msra.mxu0 0
  %249 = vmatprep.subr.bf16.mxu0 0
  %250 = vmatpush2.bf16.msra.mxu0 0
  %251 = vmatprep.subr.bf16.mxu0 0
  %252 = vmatpush2.bf16.msra.mxu0 0
  %253 = vmatprep.subr.bf16.mxu0 0
  %254 = vmatpush2.bf16.msra.mxu0 0
  %255 = vmatprep.subr.bf16.mxu0 0
  %256 = vmatpush2.bf16.msra.mxu0 0
  %257 = vmatprep.mubr.bf16.mxu0 0
  %258 = vmatmul.mubr.bf16.gmra.mxu0 %v217
  %v259 = vpop.f32.mrf.mxu0
  %v260 = vadd.f32 0.0, %v259
  %v261 = vpop.f32.mrf.mxu0
  %v262 = vpop.f32.mrf.mxu0
  %v263 = vadd.f32 0.0, %v262
  %v264 = vpop.f32.mrf.mxu0
  %265 = vmatprep.mubr.bf16.mxu0 0
  %266 = vmatmul.mubr.bf16.gmra.mxu0 %v220
  %v267 = vpop.f32.mrf.mxu0
  %v268 = vadd.f32 0.0, %v267
  %v269 = vpop.f32.mrf.mxu0
  %v270 = vpop.f32.mrf.mxu0
  %v271 = vadd.f32 0.0, %v270
  %v272 = vpop.f32.mrf.mxu0
  %273 = vdwg.mxu0
  %s274 = scalar_lea.vmem [#allocation2], 32
  %275 = vst.msk [vmem:[%s274] sm:$0xff] %vm128, %v260
  %276 = vst.msk [vmem:[%s274 + $0x8] sm:$0xff] %vm128, %v263
  %277 = vst.msk [vmem:[%s274 + $0x10] sm:$0xff] %vm128, %v268
  %278 = vst.msk [vmem:[%s274 + $0x18] sm:$0xff] %vm128, %v271
  %v279 = vsel %vm128, %v260, 0.0
  %v280 = vsel %vm128, %v263, 0.0
  %v281 = vadd.f32 %v279, %v280
  %v282 = vsel %vm128, %v268, 0.0
  %v283 = vadd.f32 %v281, %v282
  %v284 = vsel %vm128, %v271, 0.0
  %v285 = vadd.f32 %v283, %v284
  %v286 = vrot.slane %v285, 4
  %v287 = vadd.f32 %v285, %v286
  %v288 = vrot.slane %v287, 2
  %v289 = vadd.f32 %v287, %v288
  %v290 = vrot.slane %v289, 1
  %v291 = vadd.f32 %v289, %v290
  %v292 = vadd.f32 %v146, %v291
  %v293 = vmul.f32 %v260, %v260
  %v294 = vmul.f32 %v263, %v263
  %v295 = vmul.f32 %v268, %v268
  %v296 = vmul.f32 %v271, %v271
  %v297 = vsel %vm128, %v293, 0.0
  %v298 = vsel %vm128, %v294, 0.0
  %v299 = vadd.f32 %v297, %v298
  %v300 = vsel %vm128, %v295, 0.0
  %v301 = vadd.f32 %v299, %v300
  %v302 = vsel %vm128, %v296, 0.0
  %v303 = vadd.f32 %v301, %v302
  %v304 = vrot.slane %v303, 4
  %v305 = vadd.f32 %v303, %v304
  %v306 = vrot.slane %v305, 2
  %v307 = vadd.f32 %v305, %v306
  %v308 = vrot.slane %v307, 1
  %v309 = vadd.f32 %v307, %v308
  %v310 = vadd.f32 %v164, %v309
  %s311 = scalar_lea.vmem %s0, 32
  %v312 = vld [vmem:[%s311] sm:$0xf]
  %v313 = vld [vmem:[%s311 + $0x4] sm:$0xf]
  %v314 = vld [vmem:[%s311 + $0x8] sm:$0xf]
  %v315 = vld [vmem:[%s311 + $0xc] sm:$0xf]
  %v316 = vld [vmem:[%s1] sm:$0xf]
  %v317 = vld [vmem:[%s1 + $0x4] sm:$0xf]
  %v318 = vld [vmem:[%s1 + $0x8] sm:$0xf]
  %v319 = vld [vmem:[%s1 + $0xc] sm:$0xf]
  %v320 = vld [vmem:[%s1 + $0x10] sm:$0xf]
  %v321 = vld [vmem:[%s1 + $0x14] sm:$0xf]
  %v322 = vld [vmem:[%s1 + $0x18] sm:$0xf]
  %v323 = vld [vmem:[%s1 + $0x1c] sm:$0xf]
  %v324 = vld [vmem:[%s1 + $0x20] sm:$0xf]
  %v329 = vunpack.c.l.b16 %v312
  %v330 = vunpack.c.l.b16 %v313
  %v331 = vunpack.c.l.b16 %v314
  %v332 = vunpack.c.l.b16 %v315
  %v333 = vpack.c.b16 %v330, %v329
  %v334 = vpack.c.b16 %v332, %v331
  %v344 = vunpack.c.l.b16 %v316
  %v345 = vunpack.c.l.b16 %v317
  %v346 = vunpack.c.l.b16 %v318
  %v347 = vunpack.c.l.b16 %v319
  %v348 = vunpack.c.l.b16 %v320
  %v349 = vunpack.c.l.b16 %v321
  %v350 = vunpack.c.l.b16 %v322
  %v351 = vunpack.c.l.b16 %v323
  %v352 = vunpack.c.l.b16 %v324
  %v353 = vpack.c.b16 %v345, %v344
  %v354 = vpack.c.b16 %v347, %v346
  %v355 = vpack.c.b16 %v349, %v348
  %v356 = vpack.c.b16 %v351, %v350
  %v357 = vpack.c.b16 %v352, %v352
  %v363 = vsel %vm68, %v333, 0
  %v366 = vsel %vm68, %v334, 0
  %v369 = vsel %vm75, %v357, 0
  %371 = vmatprep.subr.bf16.mxu0 0
  %372 = vmatpush1.bf16.msra.mxu0 0
  %373 = vmatprep.subr.bf16.mxu0 0
  %374 = vmatpush1.bf16.msra.mxu0 0
  %375 = vmatprep.subr.bf16.mxu0 0
  %376 = vmatpush1.bf16.msra.mxu0 0
  %377 = vmatprep.subr.bf16.mxu0 0
  %378 = vmatpush1.bf16.msra.mxu0 %v369
  %379 = vmatprep.subr.bf16.mxu0 0
  %380 = vmatpush1.bf16.msra.mxu0 %v356
  %381 = vmatprep.subr.bf16.mxu0 0
  %382 = vmatpush1.bf16.msra.mxu0 %v355
  %383 = vmatprep.subr.bf16.mxu0 0
  %384 = vmatpush1.bf16.msra.mxu0 %v354
  %385 = vmatprep.subr.bf16.mxu0 0
  %386 = vmatpush1.bf16.msra.mxu0 %v353
  %387 = vmatprep.subr.bf16.mxu0 0
  %388 = vmatpush2.bf16.msra.mxu0 0
  %389 = vmatprep.subr.bf16.mxu0 0
  %390 = vmatpush2.bf16.msra.mxu0 0
  %391 = vmatprep.subr.bf16.mxu0 0
  %392 = vmatpush2.bf16.msra.mxu0 0
  %393 = vmatprep.subr.bf16.mxu0 0
  %394 = vmatpush2.bf16.msra.mxu0 0
  %395 = vmatprep.subr.bf16.mxu0 0
  %396 = vmatpush2.bf16.msra.mxu0 0
  %397 = vmatprep.subr.bf16.mxu0 0
  %398 = vmatpush2.bf16.msra.mxu0 0
  %399 = vmatprep.subr.bf16.mxu0 0
  %400 = vmatpush2.bf16.msra.mxu0 0
  %401 = vmatprep.subr.bf16.mxu0 0
  %402 = vmatpush2.bf16.msra.mxu0 0
  %403 = vmatprep.mubr.bf16.mxu0 0
  %404 = vmatmul.mubr.bf16.gmra.mxu0 %v363
  %v405 = vpop.f32.mrf.mxu0
  %v406 = vadd.f32 0.0, %v405
  %v407 = vpop.f32.mrf.mxu0
  %v408 = vpop.f32.mrf.mxu0
  %v409 = vadd.f32 0.0, %v408
  %v410 = vpop.f32.mrf.mxu0
  %411 = vmatprep.mubr.bf16.mxu0 0
  %412 = vmatmul.mubr.bf16.gmra.mxu0 %v366
  %v413 = vpop.f32.mrf.mxu0
  %v414 = vadd.f32 0.0, %v413
  %v415 = vpop.f32.mrf.mxu0
  %v416 = vpop.f32.mrf.mxu0
  %v417 = vadd.f32 0.0, %v416
  %v418 = vpop.f32.mrf.mxu0
  %419 = vdwg.mxu0
  %s420 = scalar_lea.vmem [#allocation2], 64
  %421 = vst.msk [vmem:[%s420] sm:$0xff] %vm128, %v406
  %422 = vst.msk [vmem:[%s420 + $0x8] sm:$0xff] %vm128, %v409
  %423 = vst.msk [vmem:[%s420 + $0x10] sm:$0xff] %vm128, %v414
  %424 = vst.msk [vmem:[%s420 + $0x18] sm:$0xff] %vm128, %v417
  %v425 = vsel %vm128, %v406, 0.0
  %v426 = vsel %vm128, %v409, 0.0
  %v427 = vadd.f32 %v425, %v426
  %v428 = vsel %vm128, %v414, 0.0
  %v429 = vadd.f32 %v427, %v428
  %v430 = vsel %vm128, %v417, 0.0
  %v431 = vadd.f32 %v429, %v430
  %v432 = vrot.slane %v431, 4
  %v433 = vadd.f32 %v431, %v432
  %v434 = vrot.slane %v433, 2
  %v435 = vadd.f32 %v433, %v434
  %v436 = vrot.slane %v435, 1
  %v437 = vadd.f32 %v435, %v436
  %v438 = vadd.f32 %v292, %v437
  %v439 = vmul.f32 %v406, %v406
  %v440 = vmul.f32 %v409, %v409
  %v441 = vmul.f32 %v414, %v414
  %v442 = vmul.f32 %v417, %v417
  %v443 = vsel %vm128, %v439, 0.0
  %v444 = vsel %vm128, %v440, 0.0
  %v445 = vadd.f32 %v443, %v444
  %v446 = vsel %vm128, %v441, 0.0
  %v447 = vadd.f32 %v445, %v446
  %v448 = vsel %vm128, %v442, 0.0
  %v449 = vadd.f32 %v447, %v448
  %v450 = vrot.slane %v449, 4
  %v451 = vadd.f32 %v449, %v450
  %v452 = vrot.slane %v451, 2
  %v453 = vadd.f32 %v451, %v452
  %v454 = vrot.slane %v453, 1
  %v455 = vadd.f32 %v453, %v454
  %v456 = vadd.f32 %v310, %v455
  %s457 = scalar_lea.vmem %s0, 48
  %v458 = vld [vmem:[%s457] sm:$0xf]
  %v459 = vld [vmem:[%s457 + $0x4] sm:$0xf]
  %v460 = vld [vmem:[%s457 + $0x8] sm:$0xf]
  %v461 = vld [vmem:[%s457 + $0xc] sm:$0xf]
  %v462 = vld [vmem:[%s1] sm:$0xf]
  %v463 = vld [vmem:[%s1 + $0x4] sm:$0xf]
  %v464 = vld [vmem:[%s1 + $0x8] sm:$0xf]
  %v465 = vld [vmem:[%s1 + $0xc] sm:$0xf]
  %v466 = vld [vmem:[%s1 + $0x10] sm:$0xf]
  %v467 = vld [vmem:[%s1 + $0x14] sm:$0xf]
  %v468 = vld [vmem:[%s1 + $0x18] sm:$0xf]
  %v469 = vld [vmem:[%s1 + $0x1c] sm:$0xf]
  %v470 = vld [vmem:[%s1 + $0x20] sm:$0xf]
  %v475 = vunpack.c.l.b16 %v458
  %v476 = vunpack.c.l.b16 %v459
  %v477 = vunpack.c.l.b16 %v460
  %v478 = vunpack.c.l.b16 %v461
  %v479 = vpack.c.b16 %v476, %v475
  %v480 = vpack.c.b16 %v478, %v477
  %v490 = vunpack.c.l.b16 %v462
  %v491 = vunpack.c.l.b16 %v463
  %v492 = vunpack.c.l.b16 %v464
  %v493 = vunpack.c.l.b16 %v465
  %v494 = vunpack.c.l.b16 %v466
  %v495 = vunpack.c.l.b16 %v467
  %v496 = vunpack.c.l.b16 %v468
  %v497 = vunpack.c.l.b16 %v469
  %v498 = vunpack.c.l.b16 %v470
  %v499 = vpack.c.b16 %v491, %v490
  %v500 = vpack.c.b16 %v493, %v492
  %v501 = vpack.c.b16 %v495, %v494
  %v502 = vpack.c.b16 %v497, %v496
  %v503 = vpack.c.b16 %v498, %v498
  %v509 = vsel %vm68, %v479, 0
  %v512 = vsel %vm68, %v480, 0
  %v515 = vsel %vm75, %v503, 0
  %517 = vmatprep.subr.bf16.mxu0 0
  %518 = vmatpush1.bf16.msra.mxu0 0
  %519 = vmatprep.subr.bf16.mxu0 0
  %520 = vmatpush1.bf16.msra.mxu0 0
  %521 = vmatprep.subr.bf16.mxu0 0
  %522 = vmatpush1.bf16.msra.mxu0 0
  %523 = vmatprep.subr.bf16.mxu0 0
  %524 = vmatpush1.bf16.msra.mxu0 %v515
  %525 = vmatprep.subr.bf16.mxu0 0
  %526 = vmatpush1.bf16.msra.mxu0 %v502
  %527 = vmatprep.subr.bf16.mxu0 0
  %528 = vmatpush1.bf16.msra.mxu0 %v501
  %529 = vmatprep.subr.bf16.mxu0 0
  %530 = vmatpush1.bf16.msra.mxu0 %v500
  %531 = vmatprep.subr.bf16.mxu0 0
  %532 = vmatpush1.bf16.msra.mxu0 %v499
  %533 = vmatprep.subr.bf16.mxu0 0
  %534 = vmatpush2.bf16.msra.mxu0 0
  %535 = vmatprep.subr.bf16.mxu0 0
  %536 = vmatpush2.bf16.msra.mxu0 0
  %537 = vmatprep.subr.bf16.mxu0 0
  %538 = vmatpush2.bf16.msra.mxu0 0
  %539 = vmatprep.subr.bf16.mxu0 0
  %540 = vmatpush2.bf16.msra.mxu0 0
  %541 = vmatprep.subr.bf16.mxu0 0
  %542 = vmatpush2.bf16.msra.mxu0 0
  %543 = vmatprep.subr.bf16.mxu0 0
  %544 = vmatpush2.bf16.msra.mxu0 0
  %545 = vmatprep.subr.bf16.mxu0 0
  %546 = vmatpush2.bf16.msra.mxu0 0
  %547 = vmatprep.subr.bf16.mxu0 0
  %548 = vmatpush2.bf16.msra.mxu0 0
  %549 = vmatprep.mubr.bf16.mxu0 0
  %550 = vmatmul.mubr.bf16.gmra.mxu0 %v509
  %v551 = vpop.f32.mrf.mxu0
  %v552 = vadd.f32 0.0, %v551
  %v553 = vpop.f32.mrf.mxu0
  %v554 = vpop.f32.mrf.mxu0
  %v555 = vadd.f32 0.0, %v554
  %v556 = vpop.f32.mrf.mxu0
  %557 = vmatprep.mubr.bf16.mxu0 0
  %558 = vmatmul.mubr.bf16.gmra.mxu0 %v512
  %v559 = vpop.f32.mrf.mxu0
  %v560 = vadd.f32 0.0, %v559
  %v561 = vpop.f32.mrf.mxu0
  %v562 = vpop.f32.mrf.mxu0
  %v563 = vadd.f32 0.0, %v562
  %v564 = vpop.f32.mrf.mxu0
  %565 = vdwg.mxu0
  %s566 = scalar_lea.vmem [#allocation2], 96
  %567 = vst.msk [vmem:[%s566] sm:$0xff] %vm128, %v552
  %568 = vst.msk [vmem:[%s566 + $0x8] sm:$0xff] %vm128, %v555
  %569 = vst.msk [vmem:[%s566 + $0x10] sm:$0xff] %vm128, %v560
  %570 = vst.msk [vmem:[%s566 + $0x18] sm:$0xff] %vm128, %v563
  %v571 = vsel %vm128, %v552, 0.0
  %v572 = vsel %vm128, %v555, 0.0
  %v573 = vadd.f32 %v571, %v572
  %v574 = vsel %vm128, %v560, 0.0
  %v575 = vadd.f32 %v573, %v574
  %v576 = vsel %vm128, %v563, 0.0
  %v577 = vadd.f32 %v575, %v576
  %v578 = vrot.slane %v577, 4
  %v579 = vadd.f32 %v577, %v578
  %v580 = vrot.slane %v579, 2
  %v581 = vadd.f32 %v579, %v580
  %v582 = vrot.slane %v581, 1
  %v583 = vadd.f32 %v581, %v582
  %v584 = vadd.f32 %v438, %v583
  %v585 = vmul.f32 %v552, %v552
  %v586 = vmul.f32 %v555, %v555
  %v587 = vmul.f32 %v560, %v560
  %v588 = vmul.f32 %v563, %v563
  %v589 = vsel %vm128, %v585, 0.0
  %v590 = vsel %vm128, %v586, 0.0
  %v591 = vadd.f32 %v589, %v590
  %v592 = vsel %vm128, %v587, 0.0
  %v593 = vadd.f32 %v591, %v592
  %v594 = vsel %vm128, %v588, 0.0
  %v595 = vadd.f32 %v593, %v594
  %v596 = vrot.slane %v595, 4
  %v597 = vadd.f32 %v595, %v596
  %v598 = vrot.slane %v597, 2
  %v599 = vadd.f32 %v597, %v598
  %v600 = vrot.slane %v599, 1
  %v601 = vadd.f32 %v599, %v600
  %v602 = vadd.f32 %v456, %v601
  %v603 = vmul.f32 %v584, 0.0078125
  %v604 = vmul.f32 %v602, 0.0078125
  %v605 = vmul.f32 %v603, %v603
  %v606 = vsub.f32 %v604, %v605
  %v607 = vld [vmem:[%s2] sm:$0x1]
  %v608 = vadd.f32 %v606, 1e-05
  %v609 = vrsqrt.pop %v608
  %v610 = vmul.f32 %v607, %v609
  %v611 = vld [vmem:[%s3] sm:$0x1]
  %v612 = vmul.f32 %v603, %v610
  %v613 = vsub.f32 %v611, %v612
  %v614 = vld [vmem:[#allocation2] sm:$0xff]
  %v615 = vld [vmem:[#allocation2 + $0x8] sm:$0xff]
  %v616 = vld [vmem:[#allocation2 + $0x10] sm:$0xff]
  %v617 = vld [vmem:[#allocation2 + $0x18] sm:$0xff]
  %v619 = vlaneseq
  %v620 = vshrl.u32 %v619, 7
  %v621 = vsub.s32 0, %v620
  %v622 = vrot.slane %v610, %v621
  %v624 = vmul.f32 %v614, %v622
  %v625 = vmul.f32 %v615, %v622
  %v626 = vmul.f32 %v616, %v622
  %v627 = vmul.f32 %v617, %v622
  %v629 = vlaneseq
  %v630 = vshrl.u32 %v629, 7
  %v631 = vsub.s32 0, %v630
  %v632 = vrot.slane %v613, %v631
  %v634 = vadd.f32 %v624, %v632
  %v635 = vadd.f32 %v625, %v632
  %v636 = vadd.f32 %v626, %v632
  %v637 = vadd.f32 %v627, %v632
  %v638 = vmax.f32 %v634, 0.0
  %v639 = vmax.f32 %v635, 0.0
  %v640 = vmax.f32 %v636, 0.0
  %v641 = vmax.f32 %v637, 0.0
  %v642 = vld [vmem:[%s274] sm:$0xff]
  %v643 = vld [vmem:[%s274 + $0x8] sm:$0xff]
  %v644 = vld [vmem:[%s274 + $0x10] sm:$0xff]
  %v645 = vld [vmem:[%s274 + $0x18] sm:$0xff]
  %v646 = vmul.f32 %v642, %v622
  %v647 = vmul.f32 %v643, %v622
  %v648 = vmul.f32 %v644, %v622
  %v649 = vmul.f32 %v645, %v622
  %v650 = vadd.f32 %v646, %v632
  %v651 = vadd.f32 %v647, %v632
  %v652 = vadd.f32 %v648, %v632
  %v653 = vadd.f32 %v649, %v632
  %v654 = vmax.f32 %v650, 0.0
  %v655 = vmax.f32 %v651, 0.0
  %v656 = vmax.f32 %v652, 0.0
  %v657 = vmax.f32 %v653, 0.0
  %v658 = vmax.f32 %v638, %v654
  %v659 = vmax.f32 %v639, %v655
  %v660 = vmax.f32 %v640, %v656
  %v661 = vmax.f32 %v641, %v657
  %v662 = vld [vmem:[%s420] sm:$0xff]
  %v663 = vld [vmem:[%s420 + $0x8] sm:$0xff]
  %v664 = vld [vmem:[%s420 + $0x10] sm:$0xff]
  %v665 = vld [vmem:[%s420 + $0x18] sm:$0xff]
  %v666 = vmul.f32 %v662, %v622
  %v667 = vmul.f32 %v663, %v622
  %v668 = vmul.f32 %v664, %v622
  %v669 = vmul.f32 %v665, %v622
  %v670 = vadd.f32 %v666, %v632
  %v671 = vadd.f32 %v667, %v632
  %v672 = vadd.f32 %v668, %v632
  %v673 = vadd.f32 %v669, %v632
  %v674 = vmax.f32 %v670, 0.0
  %v675 = vmax.f32 %v671, 0.0
  %v676 = vmax.f32 %v672, 0.0
  %v677 = vmax.f32 %v673, 0.0
  %v678 = vmax.f32 %v658, %v674
  %v679 = vmax.f32 %v659, %v675
  %v680 = vmax.f32 %v660, %v676
  %v681 = vmax.f32 %v661, %v677
  %v682 = vld [vmem:[%s566] sm:$0xff]
  %v683 = vld [vmem:[%s566 + $0x8] sm:$0xff]
  %v684 = vld [vmem:[%s566 + $0x10] sm:$0xff]
  %v685 = vld [vmem:[%s566 + $0x18] sm:$0xff]
  %v686 = vmul.f32 %v682, %v622
  %v687 = vmul.f32 %v683, %v622
  %v688 = vmul.f32 %v684, %v622
  %v689 = vmul.f32 %v685, %v622
  %v690 = vadd.f32 %v686, %v632
  %v691 = vadd.f32 %v687, %v632
  %v692 = vadd.f32 %v688, %v632
  %v693 = vadd.f32 %v689, %v632
  %v694 = vmax.f32 %v690, 0.0
  %v695 = vmax.f32 %v691, 0.0
  %v696 = vmax.f32 %v692, 0.0
  %v697 = vmax.f32 %v693, 0.0
  %v698 = vmax.f32 %v678, %v694
  %v699 = vmax.f32 %v679, %v695
  %v700 = vmax.f32 %v680, %v696
  %v701 = vmax.f32 %v681, %v697
  %702 = vst.msk [vmem:[%s4] sm:$0xff] %vm128, %v698
  %703 = vst.msk [vmem:[%s4 + $0x8] sm:$0xff] %vm128, %v699
  %704 = vst.msk [vmem:[%s4 + $0x10] sm:$0xff] %vm128, %v700
  %705 = vst.msk [vmem:[%s4 + $0x18] sm:$0xff] %vm128, %v701
  // Predicated region
  $region18: #{classifier_forward.6} parent=0 // pred_check
    _
  $region19: #{classifier_forward.6} parent=0 // pred_check_branch
    %707 = sbr.rel (0) target = $region21
  $region20: #{classifier_forward.6} parent=0 // pred_region
    _
  $region21: #{classifier_forward.6} parent=0 // pred_fallthru
    _
  // Predicated region
  $region22: #{classifier_forward.6} parent=0 // pred_check
    _
  $region23: #{classifier_forward.6} parent=0 // pred_check_branch
    %709 = sbr.rel (0) target = $region25
  $region24: #{classifier_forward.6} parent=0 // pred_region
    _
  $region25: #{classifier_forward.6} parent=0 // pred_fallthru
    _

// kernel: classifier_forward.9
$region0: #{classifier_forward.9}
  #allocation0 [shape = 'u32[]', space=smem, size = 0x4, offset = 0x4, fixed_abs, tag = 'smem constant byte address 0x4 - core index']
  #allocation1 [shape = 'u32[144,128]{1,0:T(1,128)}', space=vmem, size = 0x12000, scoped, tag = 'internal scratch']
  %s0 = inlined_call_operand.vmem [shape: bf16[2,128], index: 0, kind: input, shape index: {}]
  %s1 = inlined_call_operand.vmem [shape: bf16[128,10], index: 1, kind: input, shape index: {}]
  %s2 = inlined_call_operand.vmem [shape: f32[1,10], index: 2, kind: input, shape index: {}]
  %s3 = inlined_call_operand.vmem [shape: s32[2,1], index: 3, kind: input, shape index: {}]
  %s4 = inlined_call_operand.hbm [shape: f32[2,10], index: 4, kind: output, shape index: {0}]
  %s5 = inlined_call_operand.hbm [shape: f32[1,1], index: 5, kind: output, shape index: {1}]
  %6 = xla_tuple %s4, %s5
  %s7 = sld [smem:[#allocation0]]
  $region34: #{classifier_forward.9} parent=0
    _
  %s9 = ssub.s32 1, %s7
  %s10 = scalar_select 0, %s9, %s7
  $region1: #{classifier_forward.9} parent=0
    #allocation2 [shape = 'u8[1024]{0}', space=vmem, size = 0x400, scoped, tag = 'output window, operand 0, single buffered']
    #allocation3 [shape = 's32[1]{0}', space=sflag, size = 0x4, scoped, tag = 'scoped memory for classifier_forward.9']
    #allocation4 [shape = 'u8[512]{0}', space=vmem, size = 0x400, scoped, tag = 'output window, operand 1, single buffered']
    #allocation5 [shape = 's32[1]{0}', space=sflag, size = 0x4, scoped, tag = 'scoped memory for classifier_forward.9']
    %11 = vsyncpa [#allocation3], 0
    %12 = vsyncpa [#allocation5], 0
    // Predicated region
    $region2: #{classifier_forward.9} parent=1 // pred_check
      _
    $region3: #{classifier_forward.9} parent=1 // pred_check_branch
      %14 = sbr.rel (0) target = $region5
    $region4: #{classifier_forward.9} parent=1 // pred_region
      _
    $region5: #{classifier_forward.9} parent=1 // pred_fallthru
      _
    // Predicated region
    $region6: #{classifier_forward.9} parent=1 // pred_check
      _
    $region7: #{classifier_forward.9} parent=1 // pred_check_branch
      %16 = sbr.rel (0) target = $region9
    $region8: #{classifier_forward.9} parent=1 // pred_region
      _
    $region9: #{classifier_forward.9} parent=1 // pred_fallthru
      _
    // Predicated region
    $region10: #{classifier_forward.9} parent=1 // pred_check
      _
    $region11: #{classifier_forward.9} parent=1 // pred_check_branch
      %18 = sbr.rel (0) target = $region13
    $region12: #{classifier_forward.9} parent=1 // pred_region
      _
    $region13: #{classifier_forward.9} parent=1 // pred_fallthru
      _
    // Predicated region
    $region14: #{classifier_forward.9} parent=1 // pred_check
      _
    $region15: #{classifier_forward.9} parent=1 // pred_check_branch
      %20 = sbr.rel (0) target = $region17
    $region16: #{classifier_forward.9} parent=1 // pred_region
      _
    $region17: #{classifier_forward.9} parent=1 // pred_fallthru
      _
    %v22 = vld [vmem:[%s0] sm:$0x1]
    %v23 = vld [vmem:[%s1] sm:$0xf]
    %v24 = vld [vmem:[%s1 + $0x4] sm:$0xf]
    %v25 = vld [vmem:[%s1 + $0x8] sm:$0xf]
    %v26 = vld [vmem:[%s1 + $0xc] sm:$0xf]
    %v27 = vld [vmem:[%s1 + $0x10] sm:$0xf]
    %v28 = vld [vmem:[%s1 + $0x14] sm:$0xf]
    %v29 = vld [vmem:[%s1 + $0x18] sm:$0xf]
    %v30 = vld [vmem:[%s1 + $0x1c] sm:$0xf]
    %v31 = vld [vmem:[%s1 + $0x20] sm:$0xf]
    %v32 = vld [vmem:[%s1 + $0x24] sm:$0xf]
    %v33 = vld [vmem:[%s1 + $0x28] sm:$0xf]
    %v34 = vld [vmem:[%s1 + $0x2c] sm:$0xf]
    %v35 = vld [vmem:[%s1 + $0x30] sm:$0xf]
    %v36 = vld [vmem:[%s1 + $0x34] sm:$0xf]
    %v37 = vld [vmem:[%s1 + $0x38] sm:$0xf]
    %v38 = vld [vmem:[%s1 + $0x3c] sm:$0xf]
    %v39 = vld [vmem:[%s2] sm:$0x1]
    %v41 = vlaneseq
    %v42 = vshrl.u32 %v41, 7
    %v43 = vsub.s32 0, %v42
    %v44 = vrot.slane %v39, %v43
    %v62 = vunpack.c.l.b16 %v23
    %v63 = vunpack.c.l.b16 %v24
    %v64 = vunpack.c.l.b16 %v25
    %v65 = vunpack.c.l.b16 %v26
    %v66 = vunpack.c.l.b16 %v27
    %v67 = vunpack.c.l.b16 %v28
    %v68 = vunpack.c.l.b16 %v29
    %v69 = vunpack.c.l.b16 %v30
    %v70 = vunpack.c.l.b16 %v31
    %v71 = vunpack.c.l.b16 %v32
    %v72 = vunpack.c.l.b16 %v33
    %v73 = vunpack.c.l.b16 %v34
    %v74 = vunpack.c.l.b16 %v35
    %v75 = vunpack.c.l.b16 %v36
    %v76 = vunpack.c.l.b16 %v37
    %v77 = vunpack.c.l.b16 %v38
    %v78 = vpack.c.b16 %v63, %v62
    %v79 = vpack.c.b16 %v65, %v64
    %v80 = vpack.c.b16 %v67, %v66
    %v81 = vpack.c.b16 %v69, %v68
    %v82 = vpack.c.b16 %v71, %v70
    %v83 = vpack.c.b16 %v73, %v72
    %v84 = vpack.c.b16 %v75, %v74
    %v85 = vpack.c.b16 %v77, %v76
    %94 = vmatprep.subr.bf16.mxu0 0
    %95 = vmatpush1.bf16.msra.mxu0 %v85
    %96 = vmatprep.subr.bf16.mxu0 0
    %97 = vmatpush1.bf16.msra.mxu0 %v84
    %98 = vmatprep.subr.bf16.mxu0 0
    %99 = vmatpush1.bf16.msra.mxu0 %v83
    %100 = vmatprep.subr.bf16.mxu0 0
    %101 = vmatpush1.bf16.msra.mxu0 %v82
    %102 = vmatprep.subr.bf16.mxu0 0
    %103 = vmatpush1.bf16.msra.mxu0 %v81
    %104 = vmatprep.subr.bf16.mxu0 0
    %105 = vmatpush1.bf16.msra.mxu0 %v80
    %106 = vmatprep.subr.bf16.mxu0 0
    %107 = vmatpush1.bf16.msra.mxu0 %v79
    %108 = vmatprep.subr.bf16.mxu0 0
    %109 = vmatpush1.bf16.msra.mxu0 %v78
    %110 = vmatprep.subr.bf16.mxu0 0
    %111 = vmatpush2.bf16.msra.mxu0 0
    %112 = vmatprep.subr.bf16.mxu0 0
    %113 = vmatpush2.bf16.msra.mxu0 0
    %114 = vmatprep.subr.bf16.mxu0 0
    %115 = vmatpush2.bf16.msra.mxu0 0
    %116 = vmatprep.subr.bf16.mxu0 0
    %117 = vmatpush2.bf16.msra.mxu0 0
    %118 = vmatprep.subr.bf16.mxu0 0
    %119 = vmatpush2.bf16.msra.mxu0 0
    %120 = vmatprep.subr.bf16.mxu0 0
    %121 = vmatpush2.bf16.msra.mxu0 0
    %122 = vmatprep.subr.bf16.mxu0 0
    %123 = vmatpush2.bf16.msra.mxu0 0
    %124 = vmatprep.subr.bf16.mxu0 0
    %125 = vmatpush2.bf16.msra.mxu0 0
    %126 = vmatprep.mubr.bf16.mxu0 0
    %127 = vmatmul.mubr.bf16.gmra.mxu0 %v22
    %v128 = vpop.f32.mrf.mxu0
    %v129 = vadd.f32 %v44, %v128
    %v130 = vpop.f32.mrf.mxu0
    %v131 = vpop.f32.mrf.mxu0
    %v132 = vpop.f32.mrf.mxu0
    %133 = vdwg.mxu0
    %vm134 = vcmask 74752
    %135 = vst.msk [vmem:[#allocation2] sm:$0x3] %vm134, %v129
    %v136 = vsel %vm134, %v129, -inf
    %137 = vmax.xlane.f32.xlu0 %v136
    %v138 = vpop.xlane.xlu0 %137
    %v139 = vsub.f32 %v129, %v138
    %v140 = vmul.f32 %v139, 1.442695
    %v141 = vpow.pop %v140
    %v142 = vsel %vm134, %v141, 0.0
    %143 = vadd.xlane.f32.xlu0 %v142
    %v144 = vpop.xlane.xlu0 %143
    %v145 = vlog2.pop %v144
    %v146 = vmul.f32 %v145, 0.6931472
    %v147 = vadd.f32 %v138, %v146
    %v148 = vlaneseq
    %v149 = vand.u32 %v148, 127
    %v150 = vld [vmem:[%s3] sm:$0x3]
    %151 = vset.pattern.permute.xlu0 0
    %152 = vperm.xlu0 %151, %v150
    %v153 = vpop.permute.xlu0 %152
    %vm154 = vcmp.eq.s32.totalorder %v149, %v153
    %v155 = vsel %vm154, 1, 0
    %v156 = vcvt.s32.f32 %v155
    %v157 = vmul.f32 %v129, %v156
    %v158 = vsel %vm134, %v157, 0.0
    %159 = vadd.xlane.f32.xlu0 %v158
    %v160 = vpop.xlane.xlu0 %159
    %v161 = vsub.f32 %v147, %v160
    %vm162 = vcmask 1041408
    %v163 = vsel %vm162, %v161, 0.0
    %v164 = vrot.slane %v163, 4
    %v165 = vadd.f32 %v163, %v164
    %v166 = vrot.slane %v165, 2
    %v167 = vadd.f32 %v165, %v166
    %v168 = vrot.slane %v167, 1
    %v169 = vadd.f32 %v167, %v168
    %v170 = vmul.f32 %v169, 0.5
    %vm171 = vcmask 0
    %172 = vst.msk [vmem:[#allocation4] sm:$0x1] %vm171, %v170
    // Predicated region
    $region18: #{classifier_forward.9} parent=1 // pred_check
      _
    $region19: #{classifier_forward.9} parent=1 // pred_check_branch
      %174 = sbr.rel (0) target = $region21
    $region20: #{classifier_forward.9} parent=1 // pred_region
      %s176 = ssub.s32 32, 32
      %177 = vsyncadd [#allocation3], %s176
      %s179 = sshll.u32 [#allocation2], 4
      %s180 = int_to_ptr.vmem [resolvable:$true] %s179
      %182 = dma.vmem_to_hbm [thread:$0]  %s180, 32, %s4, [#allocation3]
    $region21: #{classifier_forward.9} parent=1 // pred_fallthru
      _
    // Predicated region
    $region22: #{classifier_forward.9} parent=1 // pred_check
      _
    $region23: #{classifier_forward.9} parent=1 // pred_check_branch
      %184 = sbr.rel (0) target = $region25
    $region24: #{classifier_forward.9} parent=1 // pred_region
      %s186 = ssub.s32 16, 16
      %187 = vsyncadd [#allocation5], %s186
      %s189 = sshll.u32 [#allocation4], 4
      %s190 = int_to_ptr.vmem [resolvable:$true] %s189
      %192 = dma.vmem_to_hbm [thread:$0]  %s190, 16, %s5, [#allocation5]
    $region25: #{classifier_forward.9} parent=1 // pred_fallthru
      _
    // Predicated region
    $region26: #{classifier_forward.9} parent=1 // pred_check
      _
    $region27: #{classifier_forward.9} parent=1 // pred_check_branch
      %194 = sbr.rel (0) target = $region29
    $region28: #{classifier_forward.9} parent=1 // pred_region
      %195 = dma.done [#allocation3], 32
    $region29: #{classifier_forward.9} parent=1 // pred_fallthru
      _
    // Predicated region
    $region30: #{classifier_forward.9} parent=1 // pred_check
      _
    $region31: #{classifier_forward.9} parent=1 // pred_check_branch
      %197 = sbr.rel (0) target = $region33
    $region32: #{classifier_forward.9} parent=1 // pred_region
      %198 = dma.done [#allocation5], 16
    $region33: #{classifier_forward.9} parent=1 // pred_fallthru
      _
    %199 = vsyncpa [#allocation3], 1
    %200 = vsyncpa [#allocation5], 1

// kernel: classifier_forward.8
$region0: #{classifier_forward.8}
  #allocation0 [shape = 'u32[]', space=smem, size = 0x4, offset = 0x4, fixed_abs, tag = 'smem constant byte address 0x4 - core index']
  #allocation1 [shape = 'u32[144,128]{1,0:T(1,128)}', space=vmem, size = 0x12000, scoped, tag = 'internal scratch']
  #allocation2 [shape = 'f32[1,8,32]{2,1,0:T(8,128)}', space=vmem, size = 0x1000, scoped, tag = 'scratch operand']
  %s0 = inlined_call_operand.vmem [shape: bf16[1,8,144], index: 0, kind: input, shape index: {}]
  %s1 = inlined_call_operand.vmem [shape: bf16[144,32], index: 1, kind: input, shape index: {}]
  %s2 = inlined_call_operand.vmem [shape: f32[1,32], index: 2, kind: input, shape index: {}]
  %s3 = inlined_call_operand.vmem [shape: f32[1,32], index: 3, kind: input, shape index: {}]
  %s4 = inlined_call_operand.vmem [shape: f32[8,32], index: 4, kind: output, shape index: {}]
  %s5 = sld [smem:[#allocation0]]
  $region26: #{classifier_forward.8} parent=0
    _
  %s7 = ssub.s32 1, %s5
  %s8 = scalar_select 0, %s7, %s5
  // Predicated region
  $region2: #{classifier_forward.8} parent=0 // pred_check
    _
  $region3: #{classifier_forward.8} parent=0 // pred_check_branch
    %10 = sbr.rel (0) target = $region5
  $region4: #{classifier_forward.8} parent=0 // pred_region
    _
  $region5: #{classifier_forward.8} parent=0 // pred_fallthru
    _
  // Predicated region
  $region6: #{classifier_forward.8} parent=0 // pred_check
    _
  $region7: #{classifier_forward.8} parent=0 // pred_check_branch
    %12 = sbr.rel (0) target = $region9
  $region8: #{classifier_forward.8} parent=0 // pred_region
    _
  $region9: #{classifier_forward.8} parent=0 // pred_fallthru
    _
  // Predicated region
  $region10: #{classifier_forward.8} parent=0 // pred_check
    _
  $region11: #{classifier_forward.8} parent=0 // pred_check_branch
    %14 = sbr.rel (0) target = $region13
  $region12: #{classifier_forward.8} parent=0 // pred_region
    _
  $region13: #{classifier_forward.8} parent=0 // pred_fallthru
    _
  // Predicated region
  $region14: #{classifier_forward.8} parent=0 // pred_check
    _
  $region15: #{classifier_forward.8} parent=0 // pred_check_branch
    %16 = sbr.rel (0) target = $region17
  $region16: #{classifier_forward.8} parent=0 // pred_region
    _
  $region17: #{classifier_forward.8} parent=0 // pred_fallthru
    _
  %v18 = vld [vmem:[%s0] sm:$0xff]
  %v19 = vld [vmem:[%s1] sm:$0xf]
  %v20 = vld [vmem:[%s1 + $0x4] sm:$0xf]
  %v21 = vld [vmem:[%s1 + $0x8] sm:$0xf]
  %v22 = vld [vmem:[%s1 + $0xc] sm:$0xf]
  %v23 = vld [vmem:[%s1 + $0x10] sm:$0xf]
  %v24 = vld [vmem:[%s1 + $0x14] sm:$0xf]
  %v25 = vld [vmem:[%s1 + $0x18] sm:$0xf]
  %v26 = vld [vmem:[%s1 + $0x1c] sm:$0xf]
  %v27 = vld [vmem:[%s1 + $0x20] sm:$0xf]
  %v28 = vld [vmem:[%s1 + $0x24] sm:$0xf]
  %v29 = vld [vmem:[%s1 + $0x28] sm:$0xf]
  %v30 = vld [vmem:[%s1 + $0x2c] sm:$0xf]
  %v31 = vld [vmem:[%s1 + $0x30] sm:$0xf]
  %v32 = vld [vmem:[%s1 + $0x34] sm:$0xf]
  %v33 = vld [vmem:[%s1 + $0x38] sm:$0xf]
  %v34 = vld [vmem:[%s1 + $0x3c] sm:$0xf]
  %v35 = vld [vmem:[%s1 + $0x40] sm:$0xf]
  %v36 = vld [vmem:[%s1 + $0x44] sm:$0xf]
  %v38 = vunpack.c.l.b16 %v18
  %v39 = vunpack.c.h.b16 %v18
  %v40 = vpack.c.b16 %v38, %v38
  %v41 = vpack.c.b16 %v39, %v39
  %v61 = vunpack.c.l.b16 %v19
  %v62 = vunpack.c.l.b16 %v20
  %v63 = vunpack.c.l.b16 %v21
  %v64 = vunpack.c.l.b16 %v22
  %v65 = vunpack.c.l.b16 %v23
  %v66 = vunpack.c.l.b16 %v24
  %v67 = vunpack.c.l.b16 %v25
  %v68 = vunpack.c.l.b16 %v26
  %v69 = vunpack.c.l.b16 %v27
  %v70 = vunpack.c.l.b16 %v28
  %v71 = vunpack.c.l.b16 %v29
  %v72 = vunpack.c.l.b16 %v30
  %v73 = vunpack.c.l.b16 %v31
  %v74 = vunpack.c.l.b16 %v32
  %v75 = vunpack.c.l.b16 %v33
  %v76 = vunpack.c.l.b16 %v34
  %v77 = vunpack.c.l.b16 %v35
  %v78 = vunpack.c.l.b16 %v36
  %v79 = vpack.c.b16 %v62, %v61
  %v80 = vpack.c.b16 %v64, %v63
  %v81 = vpack.c.b16 %v66, %v65
  %v82 = vpack.c.b16 %v68, %v67
  %v83 = vpack.c.b16 %v70, %v69
  %v84 = vpack.c.b16 %v72, %v71
  %v85 = vpack.c.b16 %v74, %v73
  %v86 = vpack.c.b16 %v76, %v75
  %v87 = vpack.c.b16 %v78, %v77
  %vm97 = vcmask 130048
  %v99 = vsel %vm97, %v41, 0
  %101 = vmatprep.subr.bf16.mxu0 0
  %102 = vmatpush1.bf16.msra.mxu0 %v86
  %103 = vmatprep.subr.bf16.mxu0 0
  %104 = vmatpush1.bf16.msra.mxu0 %v85
  %105 = vmatprep.subr.bf16.mxu0 0
  %106 = vmatpush1.bf16.msra.mxu0 %v84
  %107 = vmatprep.subr.bf16.mxu0 0
  %108 = vmatpush1.bf16.msra.mxu0 %v83
  %109 = vmatprep.subr.bf16.mxu0 0
  %110 = vmatpush1.bf16.msra.mxu0 %v82
  %111 = vmatprep.subr.bf16.mxu0 0
  %112 = vmatpush1.bf16.msra.mxu0 %v81
  %113 = vmatprep.subr.bf16.mxu0 0
  %114 = vmatpush1.bf16.msra.mxu0 %v80
  %115 = vmatprep.subr.bf16.mxu0 0
  %116 = vmatpush1.bf16.msra.mxu0 %v79
  %117 = vmatprep.subr.bf16.mxu0 0
  %118 = vmatpush2.bf16.msra.mxu0 0
  %119 = vmatprep.subr.bf16.mxu0 0
  %120 = vmatpush2.bf16.msra.mxu0 0
  %121 = vmatprep.subr.bf16.mxu0 0
  %122 = vmatpush2.bf16.msra.mxu0 0
  %123 = vmatprep.subr.bf16.mxu0 0
  %124 = vmatpush2.bf16.msra.mxu0 0
  %125 = vmatprep.subr.bf16.mxu0 0
  %126 = vmatpush2.bf16.msra.mxu0 0
  %127 = vmatprep.subr.bf16.mxu0 0
  %128 = vmatpush2.bf16.msra.mxu0 0
  %129 = vmatprep.subr.bf16.mxu0 0
  %130 = vmatpush2.bf16.msra.mxu0 0
  %131 = vmatprep.subr.bf16.mxu0 0
  %132 = vmatpush2.bf16.msra.mxu0 %v87
  %133 = vmatprep.mubr.bf16.mxu0 %v99
  %134 = vmatmul.mubr.bf16.gmra.mxu0 %v40
  %v135 = vpop.f32.mrf.mxu0
  %v136 = vadd.f32 0.0, %v135
  %v137 = vpop.f32.mrf.mxu0
  %v138 = vpop.f32.mrf.mxu0
  %v139 = vpop.f32.mrf.mxu0
  %140 = vdwg.mxu0
  %vm141 = vcmask 261120
  %142 = vst.msk [vmem:[#allocation2] sm:$0xff] %vm141, %v136
  %v143 = vsel %vm141, %v136, 0.0
  %v144 = vrot.slane %v143, 4
  %v145 = vadd.f32 %v143, %v144
  %v146 = vrot.slane %v145, 2
  %v147 = vadd.f32 %v145, %v146
  %v148 = vrot.slane %v147, 1
  %v149 = vadd.f32 %v147, %v148
  %v150 = vadd.f32 %v149, 0.0
  %v151 = vmul.f32 %v136, %v136
  %v152 = vsel %vm141, %v151, 0.0
  %v153 = vrot.slane %v152, 4
  %v154 = vadd.f32 %v152, %v153
  %v155 = vrot.slane %v154, 2
  %v156 = vadd.f32 %v154, %v155
  %v157 = vrot.slane %v156, 1
  %v158 = vadd.f32 %v156, %v157
  %v159 = vadd.f32 %v158, 0.0
  %v160 = vmul.f32 %v150, 0.125
  %v161 = vmul.f32 %v159, 0.125
  %v162 = vmul.f32 %v160, %v160
  %v163 = vsub.f32 %v161, %v162
  %v164 = vld [vmem:[%s2] sm:$0x1]
  %v165 = vadd.f32 %v163, 1e-05
  %v166 = vrsqrt.pop %v165
  %v167 = vmul.f32 %v164, %v166
  %v168 = vld [vmem:[%s3] sm:$0x1]
  %v169 = vmul.f32 %v160, %v167
  %v170 = vsub.f32 %v168, %v169
  %v171 = vld [vmem:[#allocation2] sm:$0xff]
  %v173 = vlaneseq
  %v174 = vshrl.u32 %v173, 7
  %v175 = vsub.s32 0, %v174
  %v176 = vrot.slane %v167, %v175
  %v178 = vmul.f32 %v171, %v176
  %v180 = vlaneseq
  %v181 = vshrl.u32 %v180, 7
  %v182 = vsub.s32 0, %v181
  %v183 = vrot.slane %v170, %v182
  %v185 = vadd.f32 %v178, %v183
  %v186 = vmax.f32 %v185, 0.0
  %187 = vst.msk [vmem:[%s4] sm:$0xff] %vm141, %v186
  // Predicated region
  $region18: #{classifier_forward.8} parent=0 // pred_check
    _
  $region19: #{classifier_forward.8} parent=0 // pred_check_branch
    %189 = sbr.rel (0) target = $region21
  $region20: #{classifier_forward.8} parent=0 // pred_region
    _
  $region21: #{classifier_forward.8} parent=0 // pred_fallthru
    _
  // Predicated region
  $region22: #{classifier_forward.8} parent=0 // pred_check
    _
  $region23: #{classifier_forward.8} parent=0 // pred_check_branch
    %191 = sbr.rel (0) target = $region25
  $region24: #{classifier_forward.8} parent=0 // pred_region
    _
  $region25: #{classifier_forward.8} parent=0 // pred_fallthru
    _

// kernel: classifier_forward.7
$region0: #{classifier_forward.7}
  #allocation0 [shape = 'u32[]', space=smem, size = 0x4, offset = 0x4, fixed_abs, tag = 'smem constant byte address 0x4 - core index']
  #allocation1 [shape = 'u32[144,128]{1,0:T(1,128)}', space=vmem, size = 0x12000, scoped, tag = 'internal scratch']
  #allocation2 [shape = 'f32[4,8,16]{2,1,0:T(8,128)}', space=vmem, size = 0x4000, scoped, tag = 'scratch operand']
  %s0 = inlined_call_operand.vmem [shape: bf16[4,8,144], index: 0, kind: input, shape index: {}]
  %s1 = inlined_call_operand.vmem [shape: bf16[144,16], index: 1, kind: input, shape index: {}]
  %s2 = inlined_call_operand.vmem [shape: f32[1,16], index: 2, kind: input, shape index: {}]
  %s3 = inlined_call_operand.vmem [shape: f32[1,16], index: 3, kind: input, shape index: {}]
  %s4 = inlined_call_operand.vmem [shape: f32[8,16], index: 4, kind: output, shape index: {}]
  %s5 = sld [smem:[#allocation0]]
  $region26: #{classifier_forward.7} parent=0
    _
  %s7 = ssub.s32 1, %s5
  %s8 = scalar_select 0, %s7, %s5
  // Predicated region
  $region2: #{classifier_forward.7} parent=0 // pred_check
    _
  $region3: #{classifier_forward.7} parent=0 // pred_check_branch
    %10 = sbr.rel (0) target = $region5
  $region4: #{classifier_forward.7} parent=0 // pred_region
    _
  $region5: #{classifier_forward.7} parent=0 // pred_fallthru
    _
  // Predicated region
  $region6: #{classifier_forward.7} parent=0 // pred_check
    _
  $region7: #{classifier_forward.7} parent=0 // pred_check_branch
    %12 = sbr.rel (0) target = $region9
  $region8: #{classifier_forward.7} parent=0 // pred_region
    _
  $region9: #{classifier_forward.7} parent=0 // pred_fallthru
    _
  // Predicated region
  $region10: #{classifier_forward.7} parent=0 // pred_check
    _
  $region11: #{classifier_forward.7} parent=0 // pred_check_branch
    %14 = sbr.rel (0) target = $region13
  $region12: #{classifier_forward.7} parent=0 // pred_region
    _
  $region13: #{classifier_forward.7} parent=0 // pred_fallthru
    _
  // Predicated region
  $region14: #{classifier_forward.7} parent=0 // pred_check
    _
  $region15: #{classifier_forward.7} parent=0 // pred_check_branch
    %16 = sbr.rel (0) target = $region17
  $region16: #{classifier_forward.7} parent=0 // pred_region
    _
  $region17: #{classifier_forward.7} parent=0 // pred_fallthru
    _
  %v18 = vld [vmem:[%s0] sm:$0xff]
  %v19 = vld [vmem:[%s1] sm:$0xf]
  %v20 = vld [vmem:[%s1 + $0x4] sm:$0xf]
  %v21 = vld [vmem:[%s1 + $0x8] sm:$0xf]
  %v22 = vld [vmem:[%s1 + $0xc] sm:$0xf]
  %v23 = vld [vmem:[%s1 + $0x10] sm:$0xf]
  %v24 = vld [vmem:[%s1 + $0x14] sm:$0xf]
  %v25 = vld [vmem:[%s1 + $0x18] sm:$0xf]
  %v26 = vld [vmem:[%s1 + $0x1c] sm:$0xf]
  %v27 = vld [vmem:[%s1 + $0x20] sm:$0xf]
  %v28 = vld [vmem:[%s1 + $0x24] sm:$0xf]
  %v29 = vld [vmem:[%s1 + $0x28] sm:$0xf]
  %v30 = vld [vmem:[%s1 + $0x2c] sm:$0xf]
  %v31 = vld [vmem:[%s1 + $0x30] sm:$0xf]
  %v32 = vld [vmem:[%s1 + $0x34] sm:$0xf]
  %v33 = vld [vmem:[%s1 + $0x38] sm:$0xf]
  %v34 = vld [vmem:[%s1 + $0x3c] sm:$0xf]
  %v35 = vld [vmem:[%s1 + $0x40] sm:$0xf]
  %v36 = vld [vmem:[%s1 + $0x44] sm:$0xf]
  %v38 = vunpack.c.l.b16 %v18
  %v39 = vunpack.c.h.b16 %v18
  %v40 = vpack.c.b16 %v38, %v38
  %v41 = vpack.c.b16 %v39, %v39
  %v61 = vunpack.c.l.b16 %v19
  %v62 = vunpack.c.l.b16 %v20
  %v63 = vunpack.c.l.b16 %v21
  %v64 = vunpack.c.l.b16 %v22
  %v65 = vunpack.c.l.b16 %v23
  %v66 = vunpack.c.l.b16 %v24
  %v67 = vunpack.c.l.b16 %v25
  %v68 = vunpack.c.l.b16 %v26
  %v69 = vunpack.c.l.b16 %v27
  %v70 = vunpack.c.l.b16 %v28
  %v71 = vunpack.c.l.b16 %v29
  %v72 = vunpack.c.l.b16 %v30
  %v73 = vunpack.c.l.b16 %v31
  %v74 = vunpack.c.l.b16 %v32
  %v75 = vunpack.c.l.b16 %v33
  %v76 = vunpack.c.l.b16 %v34
  %v77 = vunpack.c.l.b16 %v35
  %v78 = vunpack.c.l.b16 %v36
  %v79 = vpack.c.b16 %v62, %v61
  %v80 = vpack.c.b16 %v64, %v63
  %v81 = vpack.c.b16 %v66, %v65
  %v82 = vpack.c.b16 %v68, %v67
  %v83 = vpack.c.b16 %v70, %v69
  %v84 = vpack.c.b16 %v72, %v71
  %v85 = vpack.c.b16 %v74, %v73
  %v86 = vpack.c.b16 %v76, %v75
  %v87 = vpack.c.b16 %v78, %v77
  %vm97 = vcmask 130048
  %v99 = vsel %vm97, %v41, 0
  %101 = vmatprep.subr.bf16.mxu0 0
  %102 = vmatpush1.bf16.msra.mxu0 %v86
  %103 = vmatprep.subr.bf16.mxu0 0
  %104 = vmatpush1.bf16.msra.mxu0 %v85
  %105 = vmatprep.subr.bf16.mxu0 0
  %106 = vmatpush1.bf16.msra.mxu0 %v84
  %107 = vmatprep.subr.bf16.mxu0 0
  %108 = vmatpush1.bf16.msra.mxu0 %v83
  %109 = vmatprep.subr.bf16.mxu0 0
  %110 = vmatpush1.bf16.msra.mxu0 %v82
  %111 = vmatprep.subr.bf16.mxu0 0
  %112 = vmatpush1.bf16.msra.mxu0 %v81
  %113 = vmatprep.subr.bf16.mxu0 0
  %114 = vmatpush1.bf16.msra.mxu0 %v80
  %115 = vmatprep.subr.bf16.mxu0 0
  %116 = vmatpush1.bf16.msra.mxu0 %v79
  %117 = vmatprep.subr.bf16.mxu0 0
  %118 = vmatpush2.bf16.msra.mxu0 0
  %119 = vmatprep.subr.bf16.mxu0 0
  %120 = vmatpush2.bf16.msra.mxu0 0
  %121 = vmatprep.subr.bf16.mxu0 0
  %122 = vmatpush2.bf16.msra.mxu0 0
  %123 = vmatprep.subr.bf16.mxu0 0
  %124 = vmatpush2.bf16.msra.mxu0 0
  %125 = vmatprep.subr.bf16.mxu0 0
  %126 = vmatpush2.bf16.msra.mxu0 0
  %127 = vmatprep.subr.bf16.mxu0 0
  %128 = vmatpush2.bf16.msra.mxu0 0
  %129 = vmatprep.subr.bf16.mxu0 0
  %130 = vmatpush2.bf16.msra.mxu0 0
  %131 = vmatprep.subr.bf16.mxu0 0
  %132 = vmatpush2.bf16.msra.mxu0 %v87
  %133 = vmatprep.mubr.bf16.mxu0 %v99
  %134 = vmatmul.mubr.bf16.gmra.mxu0 %v40
  %v135 = vpop.f32.mrf.mxu0
  %v136 = vadd.f32 0.0, %v135
  %v137 = vpop.f32.mrf.mxu0
  %v138 = vpop.f32.mrf.mxu0
  %v139 = vpop.f32.mrf.mxu0
  %140 = vdwg.mxu0
  %141 = vst.msk [vmem:[#allocation2] sm:$0xff] %vm97, %v136
  %v142 = vsel %vm97, %v136, 0.0
  %v143 = vrot.slane %v142, 4
  %v144 = vadd.f32 %v142, %v143
  %v145 = vrot.slane %v144, 2
  %v146 = vadd.f32 %v144, %v145
  %v147 = vrot.slane %v146, 1
  %v148 = vadd.f32 %v146, %v147
  %v149 = vadd.f32 %v148, 0.0
  %v150 = vmul.f32 %v136, %v136
  %v151 = vsel %vm97, %v150, 0.0
  %v152 = vrot.slane %v151, 4
  %v153 = vadd.f32 %v151, %v152
  %v154 = vrot.slane %v153, 2
  %v155 = vadd.f32 %v153, %v154
  %v156 = vrot.slane %v155, 1
  %v157 = vadd.f32 %v155, %v156
  %v158 = vadd.f32 %v157, 0.0
  %s159 = scalar_lea.vmem %s0, 8
  %v160 = vld [vmem:[%s159] sm:$0xff]
  %v161 = vld [vmem:[%s1] sm:$0xf]
  %v162 = vld [vmem:[%s1 + $0x4] sm:$0xf]
  %v163 = vld [vmem:[%s1 + $0x8] sm:$0xf]
  %v164 = vld [vmem:[%s1 + $0xc] sm:$0xf]
  %v165 = vld [vmem:[%s1 + $0x10] sm:$0xf]
  %v166 = vld [vmem:[%s1 + $0x14] sm:$0xf]
  %v167 = vld [vmem:[%s1 + $0x18] sm:$0xf]
  %v168 = vld [vmem:[%s1 + $0x1c] sm:$0xf]
  %v169 = vld [vmem:[%s1 + $0x20] sm:$0xf]
  %v170 = vld [vmem:[%s1 + $0x24] sm:$0xf]
  %v171 = vld [vmem:[%s1 + $0x28] sm:$0xf]
  %v172 = vld [vmem:[%s1 + $0x2c] sm:$0xf]
  %v173 = vld [vmem:[%s1 + $0x30] sm:$0xf]
  %v174 = vld [vmem:[%s1 + $0x34] sm:$0xf]
  %v175 = vld [vmem:[%s1 + $0x38] sm:$0xf]
  %v176 = vld [vmem:[%s1 + $0x3c] sm:$0xf]
  %v177 = vld [vmem:[%s1 + $0x40] sm:$0xf]
  %v178 = vld [vmem:[%s1 + $0x44] sm:$0xf]
  %v180 = vunpack.c.l.b16 %v160
  %v181 = vunpack.c.h.b16 %v160
  %v182 = vpack.c.b16 %v180, %v180
  %v183 = vpack.c.b16 %v181, %v181
  %v203 = vunpack.c.l.b16 %v161
  %v204 = vunpack.c.l.b16 %v162
  %v205 = vunpack.c.l.b16 %v163
  %v206 = vunpack.c.l.b16 %v164
  %v207 = vunpack.c.l.b16 %v165
  %v208 = vunpack.c.l.b16 %v166
  %v209 = vunpack.c.l.b16 %v167
  %v210 = vunpack.c.l.b16 %v168
  %v211 = vunpack.c.l.b16 %v169
  %v212 = vunpack.c.l.b16 %v170
  %v213 = vunpack.c.l.b16 %v171
  %v214 = vunpack.c.l.b16 %v172
  %v215 = vunpack.c.l.b16 %v173
  %v216 = vunpack.c.l.b16 %v174
  %v217 = vunpack.c.l.b16 %v175
  %v218 = vunpack.c.l.b16 %v176
  %v219 = vunpack.c.l.b16 %v177
  %v220 = vunpack.c.l.b16 %v178
  %v221 = vpack.c.b16 %v204, %v203
  %v222 = vpack.c.b16 %v206, %v205
  %v223 = vpack.c.b16 %v208, %v207
  %v224 = vpack.c.b16 %v210, %v209
  %v225 = vpack.c.b16 %v212, %v211
  %v226 = vpack.c.b16 %v214, %v213
  %v227 = vpack.c.b16 %v216, %v215
  %v228 = vpack.c.b16 %v218, %v217
  %v229 = vpack.c.b16 %v220, %v219
  %v240 = vsel %vm97, %v183, 0
  %242 = vmatprep.subr.bf16.mxu0 0
  %243 = vmatpush1.bf16.msra.mxu0 %v228
  %244 = vmatprep.subr.bf16.mxu0 0
  %245 = vmatpush1.bf16.msra.mxu0 %v227
  %246 = vmatprep.subr.bf16.mxu0 0
  %247 = vmatpush1.bf16.msra.mxu0 %v226
  %248 = vmatprep.subr.bf16.mxu0 0
  %249 = vmatpush1.bf16.msra.mxu0 %v225
  %250 = vmatprep.subr.bf16.mxu0 0
  %251 = vmatpush1.bf16.msra.mxu0 %v224
  %252 = vmatprep.subr.bf16.mxu0 0
  %253 = vmatpush1.bf16.msra.mxu0 %v223
  %254 = vmatprep.subr.bf16.mxu0 0
  %255 = vmatpush1.bf16.msra.mxu0 %v222
  %256 = vmatprep.subr.bf16.mxu0 0
  %257 = vmatpush1.bf16.msra.mxu0 %v221
  %258 = vmatprep.subr.bf16.mxu0 0
  %259 = vmatpush2.bf16.msra.mxu0 0
  %260 = vmatprep.subr.bf16.mxu0 0
  %261 = vmatpush2.bf16.msra.mxu0 0
  %262 = vmatprep.subr.bf16.mxu0 0
  %263 = vmatpush2.bf16.msra.mxu0 0
  %264 = vmatprep.subr.bf16.mxu0 0
  %265 = vmatpush2.bf16.msra.mxu0 0
  %266 = vmatprep.subr.bf16.mxu0 0
  %267 = vmatpush2.bf16.msra.mxu0 0
  %268 = vmatprep.subr.bf16.mxu0 0
  %269 = vmatpush2.bf16.msra.mxu0 0
  %270 = vmatprep.subr.bf16.mxu0 0
  %271 = vmatpush2.bf16.msra.mxu0 0
  %272 = vmatprep.subr.bf16.mxu0 0
  %273 = vmatpush2.bf16.msra.mxu0 %v229
  %274 = vmatprep.mubr.bf16.mxu0 %v240
  %275 = vmatmul.mubr.bf16.gmra.mxu0 %v182
  %v276 = vpop.f32.mrf.mxu0
  %v277 = vadd.f32 0.0, %v276
  %v278 = vpop.f32.mrf.mxu0
  %v279 = vpop.f32.mrf.mxu0
  %v280 = vpop.f32.mrf.mxu0
  %281 = vdwg.mxu0
  %s282 = scalar_lea.vmem [#allocation2], 8
  %283 = vst.msk [vmem:[%s282] sm:$0xff] %vm97, %v277
  %v284 = vsel %vm97, %v277, 0.0
  %v285 = vrot.slane %v284, 4
  %v286 = vadd.f32 %v284, %v285
  %v287 = vrot.slane %v286, 2
  %v288 = vadd.f32 %v286, %v287
  %v289 = vrot.slane %v288, 1
  %v290 = vadd.f32 %v288, %v289
  %v291 = vadd.f32 %v149, %v290
  %v292 = vmul.f32 %v277, %v277
  %v293 = vsel %vm97, %v292, 0.0
  %v294 = vrot.slane %v293, 4
  %v295 = vadd.f32 %v293, %v294
  %v296 = vrot.slane %v295, 2
  %v297 = vadd.f32 %v295, %v296
  %v298 = vrot.slane %v297, 1
  %v299 = vadd.f32 %v297, %v298
  %v300 = vadd.f32 %v158, %v299
  %s301 = scalar_lea.vmem %s0, 16
  %v302 = vld [vmem:[%s301] sm:$0xff]
  %v303 = vld [vmem:[%s1] sm:$0xf]
  %v304 = vld [vmem:[%s1 + $0x4] sm:$0xf]
  %v305 = vld [vmem:[%s1 + $0x8] sm:$0xf]
  %v306 = vld [vmem:[%s1 + $0xc] sm:$0xf]
  %v307 = vld [vmem:[%s1 + $0x10] sm:$0xf]
  %v308 = vld [vmem:[%s1 + $0x14] sm:$0xf]
  %v309 = vld [vmem:[%s1 + $0x18] sm:$0xf]
  %v310 = vld [vmem:[%s1 + $0x1c] sm:$0xf]
  %v311 = vld [vmem:[%s1 + $0x20] sm:$0xf]
  %v312 = vld [vmem:[%s1 + $0x24] sm:$0xf]
  %v313 = vld [vmem:[%s1 + $0x28] sm:$0xf]
  %v314 = vld [vmem:[%s1 + $0x2c] sm:$0xf]
  %v315 = vld [vmem:[%s1 + $0x30] sm:$0xf]
  %v316 = vld [vmem:[%s1 + $0x34] sm:$0xf]
  %v317 = vld [vmem:[%s1 + $0x38] sm:$0xf]
  %v318 = vld [vmem:[%s1 + $0x3c] sm:$0xf]
  %v319 = vld [vmem:[%s1 + $0x40] sm:$0xf]
  %v320 = vld [vmem:[%s1 + $0x44] sm:$0xf]
  %v322 = vunpack.c.l.b16 %v302
  %v323 = vunpack.c.h.b16 %v302
  %v324 = vpack.c.b16 %v322, %v322
  %v325 = vpack.c.b16 %v323, %v323
  %v345 = vunpack.c.l.b16 %v303
  %v346 = vunpack.c.l.b16 %v304
  %v347 = vunpack.c.l.b16 %v305
  %v348 = vunpack.c.l.b16 %v306
  %v349 = vunpack.c.l.b16 %v307
  %v350 = vunpack.c.l.b16 %v308
  %v351 = vunpack.c.l.b16 %v309
  %v352 = vunpack.c.l.b16 %v310
  %v353 = vunpack.c.l.b16 %v311
  %v354 = vunpack.c.l.b16 %v312
  %v355 = vunpack.c.l.b16 %v313
  %v356 = vunpack.c.l.b16 %v314
  %v357 = vunpack.c.l.b16 %v315
  %v358 = vunpack.c.l.b16 %v316
  %v359 = vunpack.c.l.b16 %v317
  %v360 = vunpack.c.l.b16 %v318
  %v361 = vunpack.c.l.b16 %v319
  %v362 = vunpack.c.l.b16 %v320
  %v363 = vpack.c.b16 %v346, %v345
  %v364 = vpack.c.b16 %v348, %v347
  %v365 = vpack.c.b16 %v350, %v349
  %v366 = vpack.c.b16 %v352, %v351
  %v367 = vpack.c.b16 %v354, %v353
  %v368 = vpack.c.b16 %v356, %v355
  %v369 = vpack.c.b16 %v358, %v357
  %v370 = vpack.c.b16 %v360, %v359
  %v371 = vpack.c.b16 %v362, %v361
  %v382 = vsel %vm97, %v325, 0
  %384 = vmatprep.subr.bf16.mxu0 0
  %385 = vmatpush1.bf16.msra.mxu0 %v370
  %386 = vmatprep.subr.bf16.mxu0 0
  %387 = vmatpush1.bf16.msra.mxu0 %v369
  %388 = vmatprep.subr.bf16.mxu0 0
  %389 = vmatpush1.bf16.msra.mxu0 %v368
  %390 = vmatprep.subr.bf16.mxu0 0
  %391 = vmatpush1.bf16.msra.mxu0 %v367
  %392 = vmatprep.subr.bf16.mxu0 0
  %393 = vmatpush1.bf16.msra.mxu0 %v366
  %394 = vmatprep.subr.bf16.mxu0 0
  %395 = vmatpush1.bf16.msra.mxu0 %v365
  %396 = vmatprep.subr.bf16.mxu0 0
  %397 = vmatpush1.bf16.msra.mxu0 %v364
  %398 = vmatprep.subr.bf16.mxu0 0
  %399 = vmatpush1.bf16.msra.mxu0 %v363
  %400 = vmatprep.subr.bf16.mxu0 0
  %401 = vmatpush2.bf16.msra.mxu0 0
  %402 = vmatprep.subr.bf16.mxu0 0
  %403 = vmatpush2.bf16.msra.mxu0 0
  %404 = vmatprep.subr.bf16.mxu0 0
  %405 = vmatpush2.bf16.msra.mxu0 0
  %406 = vmatprep.subr.bf16.mxu0 0
  %407 = vmatpush2.bf16.msra.mxu0 0
  %408 = vmatprep.subr.bf16.mxu0 0
  %409 = vmatpush2.bf16.msra.mxu0 0
  %410 = vmatprep.subr.bf16.mxu0 0
  %411 = vmatpush2.bf16.msra.mxu0 0
  %412 = vmatprep.subr.bf16.mxu0 0
  %413 = vmatpush2.bf16.msra.mxu0 0
  %414 = vmatprep.subr.bf16.mxu0 0
  %415 = vmatpush2.bf16.msra.mxu0 %v371
  %416 = vmatprep.mubr.bf16.mxu0 %v382
  %417 = vmatmul.mubr.bf16.gmra.mxu0 %v324
  %v418 = vpop.f32.mrf.mxu0
  %v419 = vadd.f32 0.0, %v418
  %v420 = vpop.f32.mrf.mxu0
  %v421 = vpop.f32.mrf.mxu0
  %v422 = vpop.f32.mrf.mxu0
  %423 = vdwg.mxu0
  %s424 = scalar_lea.vmem [#allocation2], 16
  %425 = vst.msk [vmem:[%s424] sm:$0xff] %vm97, %v419
  %v426 = vsel %vm97, %v419, 0.0
  %v427 = vrot.slane %v426, 4
  %v428 = vadd.f32 %v426, %v427
  %v429 = vrot.slane %v428, 2
  %v430 = vadd.f32 %v428, %v429
  %v431 = vrot.slane %v430, 1
  %v432 = vadd.f32 %v430, %v431
  %v433 = vadd.f32 %v291, %v432
  %v434 = vmul.f32 %v419, %v419
  %v435 = vsel %vm97, %v434, 0.0
  %v436 = vrot.slane %v435, 4
  %v437 = vadd.f32 %v435, %v436
  %v438 = vrot.slane %v437, 2
  %v439 = vadd.f32 %v437, %v438
  %v440 = vrot.slane %v439, 1
  %v441 = vadd.f32 %v439, %v440
  %v442 = vadd.f32 %v300, %v441
  %s443 = scalar_lea.vmem %s0, 24
  %v444 = vld [vmem:[%s443] sm:$0xff]
  %v445 = vld [vmem:[%s1] sm:$0xf]
  %v446 = vld [vmem:[%s1 + $0x4] sm:$0xf]
  %v447 = vld [vmem:[%s1 + $0x8] sm:$0xf]
  %v448 = vld [vmem:[%s1 + $0xc] sm:$0xf]
  %v449 = vld [vmem:[%s1 + $0x10] sm:$0xf]
  %v450 = vld [vmem:[%s1 + $0x14] sm:$0xf]
  %v451 = vld [vmem:[%s1 + $0x18] sm:$0xf]
  %v452 = vld [vmem:[%s1 + $0x1c] sm:$0xf]
  %v453 = vld [vmem:[%s1 + $0x20] sm:$0xf]
  %v454 = vld [vmem:[%s1 + $0x24] sm:$0xf]
  %v455 = vld [vmem:[%s1 + $0x28] sm:$0xf]
  %v456 = vld [vmem:[%s1 + $0x2c] sm:$0xf]
  %v457 = vld [vmem:[%s1 + $0x30] sm:$0xf]
  %v458 = vld [vmem:[%s1 + $0x34] sm:$0xf]
  %v459 = vld [vmem:[%s1 + $0x38] sm:$0xf]
  %v460 = vld [vmem:[%s1 + $0x3c] sm:$0xf]
  %v461 = vld [vmem:[%s1 + $0x40] sm:$0xf]
  %v462 = vld [vmem:[%s1 + $0x44] sm:$0xf]
  %v464 = vunpack.c.l.b16 %v444
  %v465 = vunpack.c.h.b16 %v444
  %v466 = vpack.c.b16 %v464, %v464
  %v467 = vpack.c.b16 %v465, %v465
  %v487 = vunpack.c.l.b16 %v445
  %v488 = vunpack.c.l.b16 %v446
  %v489 = vunpack.c.l.b16 %v447
  %v490 = vunpack.c.l.b16 %v448
  %v491 = vunpack.c.l.b16 %v449
  %v492 = vunpack.c.l.b16 %v450
  %v493 = vunpack.c.l.b16 %v451
  %v494 = vunpack.c.l.b16 %v452
  %v495 = vunpack.c.l.b16 %v453
  %v496 = vunpack.c.l.b16 %v454
  %v497 = vunpack.c.l.b16 %v455
  %v498 = vunpack.c.l.b16 %v456
  %v499 = vunpack.c.l.b16 %v457
  %v500 = vunpack.c.l.b16 %v458
  %v501 = vunpack.c.l.b16 %v459
  %v502 = vunpack.c.l.b16 %v460
  %v503 = vunpack.c.l.b16 %v461
  %v504 = vunpack.c.l.b16 %v462
  %v505 = vpack.c.b16 %v488, %v487
  %v506 = vpack.c.b16 %v490, %v489
  %v507 = vpack.c.b16 %v492, %v491
  %v508 = vpack.c.b16 %v494, %v493
  %v509 = vpack.c.b16 %v496, %v495
  %v510 = vpack.c.b16 %v498, %v497
  %v511 = vpack.c.b16 %v500, %v499
  %v512 = vpack.c.b16 %v502, %v501
  %v513 = vpack.c.b16 %v504, %v503
  %v524 = vsel %vm97, %v467, 0
  %526 = vmatprep.subr.bf16.mxu0 0
  %527 = vmatpush1.bf16.msra.mxu0 %v512
  %528 = vmatprep.subr.bf16.mxu0 0
  %529 = vmatpush1.bf16.msra.mxu0 %v511
  %530 = vmatprep.subr.bf16.mxu0 0
  %531 = vmatpush1.bf16.msra.mxu0 %v510
  %532 = vmatprep.subr.bf16.mxu0 0
  %533 = vmatpush1.bf16.msra.mxu0 %v509
  %534 = vmatprep.subr.bf16.mxu0 0
  %535 = vmatpush1.bf16.msra.mxu0 %v508
  %536 = vmatprep.subr.bf16.mxu0 0
  %537 = vmatpush1.bf16.msra.mxu0 %v507
  %538 = vmatprep.subr.bf16.mxu0 0
  %539 = vmatpush1.bf16.msra.mxu0 %v506
  %540 = vmatprep.subr.bf16.mxu0 0
  %541 = vmatpush1.bf16.msra.mxu0 %v505
  %542 = vmatprep.subr.bf16.mxu0 0
  %543 = vmatpush2.bf16.msra.mxu0 0
  %544 = vmatprep.subr.bf16.mxu0 0
  %545 = vmatpush2.bf16.msra.mxu0 0
  %546 = vmatprep.subr.bf16.mxu0 0
  %547 = vmatpush2.bf16.msra.mxu0 0
  %548 = vmatprep.subr.bf16.mxu0 0
  %549 = vmatpush2.bf16.msra.mxu0 0
  %550 = vmatprep.subr.bf16.mxu0 0
  %551 = vmatpush2.bf16.msra.mxu0 0
  %552 = vmatprep.subr.bf16.mxu0 0
  %553 = vmatpush2.bf16.msra.mxu0 0
  %554 = vmatprep.subr.bf16.mxu0 0
  %555 = vmatpush2.bf16.msra.mxu0 0
  %556 = vmatprep.subr.bf16.mxu0 0
  %557 = vmatpush2.bf16.msra.mxu0 %v513
  %558 = vmatprep.mubr.bf16.mxu0 %v524
  %559 = vmatmul.mubr.bf16.gmra.mxu0 %v466
  %v560 = vpop.f32.mrf.mxu0
  %v561 = vadd.f32 0.0, %v560
  %v562 = vpop.f32.mrf.mxu0
  %v563 = vpop.f32.mrf.mxu0
  %v564 = vpop.f32.mrf.mxu0
  %565 = vdwg.mxu0
  %s566 = scalar_lea.vmem [#allocation2], 24
  %567 = vst.msk [vmem:[%s566] sm:$0xff] %vm97, %v561
  %v568 = vsel %vm97, %v561, 0.0
  %v569 = vrot.slane %v568, 4
  %v570 = vadd.f32 %v568, %v569
  %v571 = vrot.slane %v570, 2
  %v572 = vadd.f32 %v570, %v571
  %v573 = vrot.slane %v572, 1
  %v574 = vadd.f32 %v572, %v573
  %v575 = vadd.f32 %v433, %v574
  %v576 = vmul.f32 %v561, %v561
  %v577 = vsel %vm97, %v576, 0.0
  %v578 = vrot.slane %v577, 4
  %v579 = vadd.f32 %v577, %v578
  %v580 = vrot.slane %v579, 2
  %v581 = vadd.f32 %v579, %v580
  %v582 = vrot.slane %v581, 1
  %v583 = vadd.f32 %v581, %v582
  %v584 = vadd.f32 %v442, %v583
  %v585 = vmul.f32 %v575, 0.03125
  %v586 = vmul.f32 %v584, 0.03125
  %v587 = vmul.f32 %v585, %v585
  %v588 = vsub.f32 %v586, %v587
  %v589 = vld [vmem:[%s2] sm:$0x1]
  %v590 = vadd.f32 %v588, 1e-05
  %v591 = vrsqrt.pop %v590
  %v592 = vmul.f32 %v589, %v591
  %v593 = vld [vmem:[%s3] sm:$0x1]
  %v594 = vmul.f32 %v585, %v592
  %v595 = vsub.f32 %v593, %v594
  %v596 = vld [vmem:[#allocation2] sm:$0xff]
  %v598 = vlaneseq
  %v599 = vshrl.u32 %v598, 7
  %v600 = vsub.s32 0, %v599
  %v601 = vrot.slane %v592, %v600
  %v603 = vmul.f32 %v596, %v601
  %v605 = vlaneseq
  %v606 = vshrl.u32 %v605, 7
  %v607 = vsub.s32 0, %v606
  %v608 = vrot.slane %v595, %v607
  %v610 = vadd.f32 %v603, %v608
  %v611 = vmax.f32 %v610, 0.0
  %v612 = vld [vmem:[%s282] sm:$0xff]
  %v613 = vmul.f32 %v612, %v601
  %v614 = vadd.f32 %v613, %v608
  %v615 = vmax.f32 %v614, 0.0
  %v616 = vmax.f32 %v611, %v615
  %v617 = vld [vmem:[%s424] sm:$0xff]
  %v618 = vmul.f32 %v617, %v601
  %v619 = vadd.f32 %v618, %v608
  %v620 = vmax.f32 %v619, 0.0
  %v621 = vmax.f32 %v616, %v620
  %v622 = vld [vmem:[%s566] sm:$0xff]
  %v623 = vmul.f32 %v622, %v601
  %v624 = vadd.f32 %v623, %v608
  %v625 = vmax.f32 %v624, 0.0
  %v626 = vmax.f32 %v621, %v625
  %627 = vst.msk [vmem:[%s4] sm:$0xff] %vm97, %v626
  // Predicated region
  $region18: #{classifier_forward.7} parent=0 // pred_check
    _
  $region19: #{classifier_forward.7} parent=0 // pred_check_branch
    %629 = sbr.rel (0) target = $region21
  $region20: #{classifier_forward.7} parent=0 // pred_region
    _
  $region21: #{classifier_forward.7} parent=0 // pred_fallthru
    _
  // Predicated region
  $region22: #{classifier_forward.7} parent=0 // pred_check
    _
  $region23: #{classifier_forward.7} parent=0 // pred_check_branch
    %631 = sbr.rel (0) target = $region25
  $region24: #{classifier_forward.7} parent=0 // pred_region
    _
  $region25: #{classifier_forward.7} parent=0 // pred_fallthru
    _

</llo_original>
